<compile_context>
chip_gen: v5e
topology: v5e:2x2
jax: 0.10.0
libtpu: 0.0.40
codegen_flags: <defaults>
</compile_context>

<pallas_src>
import math
import functools

import jax
import jax.numpy as jnp
from jax import lax
from jax.experimental import pallas as pl
from jax.experimental.pallas import tpu as pltpu


def _bert_attention_kernel(
    x_ref,                      # (1, S, H)   full sequence of this batch element
    wq_ref, bq_ref,             # (H, H) [in, out], (1, H)
    wk_ref, bk_ref,             # (H, H), (1, H)
    wv_ref, bv_ref,             # (H, H), (1, H)
    wo_ref, bo_ref,             # (nh, d, H) head-major Wo^T, (1, H)
    gamma_ref, beta_ref,        # (1, H), (1, H)
    out_ref,                    # (1, tq, H)
    k_scr, v_scr, q_scr,        # VMEM: (nh, S, d), (nh, S, d), (nh, tq, d)
    *, num_heads, head_size, tq, ln_eps, compute_dtype, approx_recip):

  qi = pl.program_id(1)
  nh, d = num_heads, head_size

  # ---- K / V: projected once per batch element as flat (S, H) matmuls
  #      (K = H-deep contraction, lane-dense N = H output -> full MXU feed),
  #      then split ONCE into head-major scratch reused by every query tile. ----
  @pl.when(qi == 0)
  def _():
    xf = x_ref[0].astype(compute_dtype)                                     # (S, H)
    k = (jnp.dot(xf, wk_ref[...], preferred_element_type=jnp.float32)
         + bk_ref[...]).astype(compute_dtype)
    v = (jnp.dot(xf, wv_ref[...], preferred_element_type=jnp.float32)
         + bv_ref[...]).astype(compute_dtype)
    # One-time layout conversion per batch element (outside the hot per-tile path).
    for h in range(nh):
      k_scr[h] = k[:, h * d:(h + 1) * d]
      v_scr[h] = v[:, h * d:(h + 1) * d]

  # ---- current query tile (sliced from the resident full-sequence block) ----
  q_start = pl.multiple_of(qi * tq, tq)
  x_q = x_ref[0, pl.ds(q_start, tq), :]                                     # (tq, H)
  q = jnp.dot(x_q.astype(compute_dtype), wq_ref[...],
              preferred_element_type=jnp.float32) + bq_ref[...]
  q = (q * (1.0 / math.sqrt(d))).astype(compute_dtype)                      # scale folded into q once
  for h in range(nh):                                                       # head-major layout
    q_scr[h] = q[:, h * d:(h + 1) * d]

  q3 = q_scr[...]                                                           # (nh, tq, d)
  k3 = k_scr[...]                                                           # (nh, S,  d)
  v3 = v_scr[...]                                                           # (nh, S,  d)

  # ---- head-batched scaled dot-product attention (single batched matmuls) ----
  scores = lax.dot_general(q3, k3, (((2,), (2,)), ((0,), (0,))),
                           preferred_element_type=jnp.float32)              # (nh, tq, S)
  # clamp_inf is a no-op for f32/bf16 inputs (fp16-only in the reference module).
  m = jnp.max(scores, axis=-1, keepdims=True)
  e = jnp.exp(scores - m)
  denom = jnp.sum(e, axis=-1, keepdims=True)                                # (nh, tq, 1)

  # Deferred softmax normalization: PV matmul on the unnormalized exponentials,
  # then a single (nh, tq, d)-wide multiply by 1/denom.
  ctx3 = lax.dot_general(e.astype(compute_dtype), v3, (((2,), (1,)), ((0,), (0,))),
                         preferred_element_type=jnp.float32)                # (nh, tq, d)
  inv = pl.reciprocal(denom, approx=approx_recip)                           # EUP slot (approx for bf16)
  ctx3 = (ctx3 * inv).astype(compute_dtype)

  # ---- BertSelfOutput: dense -> (dropout = id) -> residual -> LayerNorm (f32) ----
  # Output projection batched over heads (lane-dense (tq, H) partials) then summed:
  # mathematically identical to contracting (head, d) against Wo; avoids any
  # non-128-aligned ctx column writes.
  # TODO(synk): if Mosaic gains multi-contracting-dim dot_general, fuse the head
  # sum into a single K=H-deep matmul.
  y3 = lax.dot_general(ctx3, wo_ref[...], (((2,), (1,)), ((0,), (0,))),
                       preferred_element_type=jnp.float32)                  # (nh, tq, H)
  y = jnp.sum(y3, axis=0) + bo_ref[...] + x_q.astype(jnp.float32)           # (tq, H)

  mean = jnp.mean(y, axis=-1, keepdims=True)
  var = jnp.mean(jnp.square(y - mean), axis=-1, keepdims=True)
  y = (y - mean) * lax.rsqrt(var + ln_eps)
  y = y * gamma_ref[...] + beta_ref[...]

  out_ref[0] = y.astype(out_ref.dtype)


def bert_attention(x, params, *, num_heads, ln_eps=1e-12, compute_dtype=None,
                   q_tile=None, single_buffer_weights=True):
  """Fused BertAttention forward (self-attention branch, eval mode)."""
  B, S, H = x.shape
  d = H // num_heads
  assert d * num_heads == H

  if compute_dtype is None:
    # MXU-native bf16 operands by default; f32 accumulation / softmax / LN stay f32.
    compute_dtype = jnp.bfloat16 if x.dtype == jnp.float32 else x.dtype

  # Query tile: full sequence when it fits, otherwise the largest 128-multiple
  # divisor up to 512 (amortizes the ~0.35 us per-grid-step overhead).
  if q_tile is not None:
    tq = q_tile
  elif S <= 512:
    tq = S
  else:
    tq = next((t for t in (512, 384, 256, 128) if S % t == 0), S)
    # TODO(synk): pad S to a multiple of 128 instead of falling back to tq = S
    # for large non-divisible sequence lengths (avoids an S x S scores tile).
  assert S % tq == 0
  n_qt = S // tq

  f32 = jnp.float32
  # Pre-transpose weights to [in, out]; Wo additionally reshaped head-major to
  # (nh, d, H) so the kernel's output projection needs no in-kernel relayout.
  wq = params["wq"].T.astype(compute_dtype)
  wk = params["wk"].T.astype(compute_dtype)
  wv = params["wv"].T.astype(compute_dtype)
  wo = params["wo"].T.reshape(num_heads, d, H).astype(compute_dtype)
  bq = params["bq"].reshape(1, H).astype(f32)
  bk = params["bk"].reshape(1, H).astype(f32)
  bv = params["bv"].reshape(1, H).astype(f32)
  bo = params["bo"].reshape(1, H).astype(f32)
  gamma = params["gamma"].reshape(1, H).astype(f32)
  beta = params["beta"].reshape(1, H).astype(f32)

  approx_recip = jnp.dtype(compute_dtype).itemsize < 4   # exact 1/x for strict f32 parity
  kernel = functools.partial(
      _bert_attention_kernel,
      num_heads=num_heads, head_size=d, tq=tq, ln_eps=ln_eps,
      compute_dtype=compute_dtype, approx_recip=approx_recip)

  # ---- VMEM budget: actual footprint + headroom (instead of a blanket 48 MiB,
  #      which is too large a fraction of v7x's 64 MiB per-TC VMEM). ----
  rup = lambda v, m: ((v + m - 1) // m) * m
  cb, xb = jnp.dtype(compute_dtype).itemsize, x.dtype.itemsize
  Hp, Sp, dp, tqp = rup(H, 128), rup(S, 8), rup(d, 128), rup(tq, 8)
  footprint = (
      2 * S * Hp * xb                                  # x block (double buffered)
      + 2 * tq * Hp * xb                               # out block
      + 2 * (3 * H * Hp + num_heads * d * Hp) * cb     # weights (worst case: 2 buffers)
      + 2 * num_heads * Sp * dp * cb                   # head-major K / V scratch
      + num_heads * tqp * dp * cb                      # head-major q scratch
      + 2 * num_heads * tqp * rup(S, 128) * 4          # f32 scores / exp intermediates
      + num_heads * tqp * Hp * 4)                      # per-head out-proj partials
  vmem_limit = int(min(100 * 2**20, max(32 * 2**20, footprint * 3 // 2 + 4 * 2**20)))
  # TODO(synk): for long S on v7x (64 MiB VMEM), stream K/V flash-style over a kv
  # grid axis instead of full-S scratch; also split heads across the two
  # TensorCores when B == 1.

  def _call(single_buffer):
    if single_buffer:
      # Constant-index weights are DMA'd once; single-buffering them saves the
      # second copy's VMEM (critical headroom on v7x, free elsewhere).
      def const_spec(shape):
        return pl.BlockSpec(shape, lambda b, qi: (0,) * len(shape),
                            pipeline_mode=pl.Buffered(1))
    else:
      def const_spec(shape):
        return pl.BlockSpec(shape, lambda b, qi: (0,) * len(shape))

    grid_spec = pltpu.PrefetchScalarGridSpec(
        num_scalar_prefetch=0,
        grid=(B, n_qt),
        in_specs=[
            pl.BlockSpec((1, S, H), lambda b, qi: (b, 0, 0)),   # x (full seq per batch elem)
            const_spec((H, H)), const_spec((1, H)),             # Wq^T, bq
            const_spec((H, H)), const_spec((1, H)),             # Wk^T, bk
            const_spec((H, H)), const_spec((1, H)),             # Wv^T, bv
            const_spec((num_heads, d, H)), const_spec((1, H)),  # Wo^T (head-major), bo
            const_spec((1, H)), const_spec((1, H)),             # gamma, beta
        ],
        out_specs=pl.BlockSpec((1, tq, H), lambda b, qi: (b, qi, 0)),
        scratch_shapes=[
            pltpu.VMEM((num_heads, S, d), compute_dtype),   # K (persists across query tiles)
            pltpu.VMEM((num_heads, S, d), compute_dtype),   # V
            pltpu.VMEM((num_heads, tq, d), compute_dtype),  # head-major q tile
        ])

    return pl.pallas_call(
        kernel,
        out_shape=jax.ShapeDtypeStruct((B, S, H), x.dtype),
        grid_spec=grid_spec,
        compiler_params=pltpu.CompilerParams(
            dimension_semantics=("parallel", "arbitrary"),
            vmem_limit_bytes=vmem_limit),
    )(x, wq, bq, wk, bk, wv, bv, wo, bo, gamma, beta)

  if single_buffer_weights:
    try:
      return _call(True)
    except Exception:
      # pl.Buffered(1) (single-buffered constant-index blocks) not supported by
      # this jax / Mosaic version -> fall back to default double buffering.
      pass
  return _call(False)


def reference_bert_attention(x, params, *, num_heads, ln_eps=1e-12):
  """Plain-JAX reference mirroring the PyTorch forward (eval mode)."""
  B, S, H = x.shape
  d = H // num_heads

  def lin(inp, w, b):
    return jnp.einsum('bsh,oh->bso', inp, w) + b.reshape(1, 1, -1)

  q = lin(x, params["wq"], params["bq"]).reshape(B, S, num_heads, d).transpose(0, 2, 1, 3)
  k = lin(x, params["wk"], params["bk"]).reshape(B, S, num_heads, d).transpose(0, 2, 1, 3)
  v = lin(x, params["wv"], params["bv"]).reshape(B, S, num_heads, d).transpose(0, 2, 1, 3)

  scores = jnp.einsum('bhld,bhrd->bhlr', q, k) / math.sqrt(d)
  probs = jax.nn.softmax(scores, axis=-1)
  ctx = jnp.einsum('bhlr,bhrd->bhld', probs, v)
  ctx = ctx.transpose(0, 2, 1, 3).reshape(B, S, H)

  y = lin(ctx, params["wo"], params["bo"]) + x
  mean = jnp.mean(y, axis=-1, keepdims=True)
  var = jnp.mean((y - mean) ** 2, axis=-1, keepdims=True)
  y = (y - mean) / jnp.sqrt(var + ln_eps)
  return y * params["gamma"].reshape(1, 1, -1) + params["beta"].reshape(1, 1, -1)


if __name__ == "__main__":
  B, S, H, NUM_HEADS = 2, 8, 32, 4

  key = jax.random.PRNGKey(0)
  keys = jax.random.split(key, 10)

  def init_w(k, shape):
    return jax.random.normal(k, shape, dtype=jnp.float32) * 0.02

  params = {
      "wq": init_w(keys[0], (H, H)), "bq": init_w(keys[1], (H,)),
      "wk": init_w(keys[2], (H, H)), "bk": init_w(keys[3], (H,)),
      "wv": init_w(keys[4], (H, H)), "bv": init_w(keys[5], (H,)),
      "wo": init_w(keys[6], (H, H)), "bo": init_w(keys[7], (H,)),
      "gamma": jnp.ones((H,), dtype=jnp.float32),
      "beta": jnp.zeros((H,), dtype=jnp.float32),
  }

  x = jax.random.normal(keys[8], (B, S, H), dtype=jnp.float32)

  ref = reference_bert_attention(x, params, num_heads=NUM_HEADS)

  # Strict f32-operand path (exact reciprocal -> tight tolerance).
  out_f32 = jax.block_until_ready(
      bert_attention(x, params, num_heads=NUM_HEADS, compute_dtype=jnp.float32))
  assert out_f32.shape == (B, S, H)
  assert jnp.allclose(out_f32, ref, atol=1e-3, rtol=1e-3), "f32 mismatch vs reference"

  # Default path: bf16 MXU operands / f32 accumulation, softmax, LayerNorm.
  out_bf16 = jax.block_until_ready(bert_attention(x, params, num_heads=NUM_HEADS))
  assert out_bf16.shape == (B, S, H)
  assert jnp.allclose(out_bf16.astype(jnp.float32), ref, atol=1e-1, rtol=1e-1), \
      "bf16 mismatch vs reference"

  print("KERNEL_OK")
</pallas_src>

<mosaic_0001>
module attributes {stable_mosaic.version = 11 : i64} {
  func.func @_bert_attention_kernel(%arg0: i32, %arg1: i32, %arg2: memref<1x8x32xf32, #tpu.memory_space<vmem>>, %arg3: memref<32x32xf32, #tpu.memory_space<vmem>>, %arg4: memref<1x32xf32, #tpu.memory_space<vmem>>, %arg5: memref<32x32xf32, #tpu.memory_space<vmem>>, %arg6: memref<1x32xf32, #tpu.memory_space<vmem>>, %arg7: memref<32x32xf32, #tpu.memory_space<vmem>>, %arg8: memref<1x32xf32, #tpu.memory_space<vmem>>, %arg9: memref<4x8x32xf32, #tpu.memory_space<vmem>>, %arg10: memref<1x32xf32, #tpu.memory_space<vmem>>, %arg11: memref<1x32xf32, #tpu.memory_space<vmem>>, %arg12: memref<1x32xf32, #tpu.memory_space<vmem>>, %arg13: memref<1x8x32xf32, #tpu.memory_space<vmem>>, %arg14: memref<4x8x8xf32, #tpu.memory_space<vmem>>, %arg15: memref<4x8x8xf32, #tpu.memory_space<vmem>>, %arg16: memref<4x8x8xf32, #tpu.memory_space<vmem>>) attributes {dimension_semantics = [#tpu.dimension_semantics<parallel>, #tpu.dimension_semantics<arbitrary>], iteration_bounds = array<i64: 2, 1>, scalar_prefetch = 0 : i64, scratch_operands = 3 : i64, tpu.core_type = #tpu.core_type<tc>, window_params = [{transform_indices = @transform_0, window_bounds = array<i64: 1, 8, 32>}, {pipeline_mode = #tpu.pipeline_mode<synchronous>, transform_indices = @transform_1, window_bounds = array<i64: 32, 32>}, {pipeline_mode = #tpu.pipeline_mode<synchronous>, transform_indices = @transform_2, window_bounds = array<i64: 1, 32>}, {pipeline_mode = #tpu.pipeline_mode<synchronous>, transform_indices = @transform_3, window_bounds = array<i64: 32, 32>}, {pipeline_mode = #tpu.pipeline_mode<synchronous>, transform_indices = @transform_4, window_bounds = array<i64: 1, 32>}, {pipeline_mode = #tpu.pipeline_mode<synchronous>, transform_indices = @transform_5, window_bounds = array<i64: 32, 32>}, {pipeline_mode = #tpu.pipeline_mode<synchronous>, transform_indices = @transform_6, window_bounds = array<i64: 1, 32>}, {pipeline_mode = #tpu.pipeline_mode<synchronous>, transform_indices = @transform_7, window_bounds = array<i64: 4, 8, 32>}, {pipeline_mode = #tpu.pipeline_mode<synchronous>, transform_indices = @transform_8, window_bounds = array<i64: 1, 32>}, {pipeline_mode = #tpu.pipeline_mode<synchronous>, transform_indices = @transform_9, window_bounds = array<i64: 1, 32>}, {pipeline_mode = #tpu.pipeline_mode<synchronous>, transform_indices = @transform_10, window_bounds = array<i64: 1, 32>}, {transform_indices = @transform_11, window_bounds = array<i64: 1, 8, 32>}]} {
    %c0_i32 = arith.constant 0 : i32
    %0 = arith.cmpi eq, %arg1, %c0_i32 : i32
    %1 = arith.extui %0 : i1 to i32
    %c0_i32_0 = arith.constant 0 : i32
    %2 = arith.cmpi ne, %1, %c0_i32_0 : i32
    scf.if %2 {
      %c0_48 = arith.constant 0 : index
      %c0_49 = arith.constant 0 : index
      %c0_50 = arith.constant 0 : index
      %80 = vector.load %arg2[%c0_48, %c0_49, %c0_50] : memref<1x8x32xf32, #tpu.memory_space<vmem>>, vector<1x8x32xf32>
      %81 = vector.shape_cast %80 : vector<1x8x32xf32> to vector<8x32xf32>
      %c0_51 = arith.constant 0 : index
      %c0_52 = arith.constant 0 : index
      %82 = vector.load %arg5[%c0_51, %c0_52] : memref<32x32xf32, #tpu.memory_space<vmem>>, vector<32x32xf32>
      %cst_53 = arith.constant dense<0.000000e+00> : vector<8x32xf32>
      %83 = tpu.matmul %81, %82, %cst_53 {dimension_numbers = #tpu.dot_dimension_numbers<[1], [0], [0], [1], [0, 0, 1, 1], [], []>} : vector<8x32xf32>, vector<32x32xf32>, vector<8x32xf32> -> vector<8x32xf32>
      %c0_54 = arith.constant 0 : index
      %c0_55 = arith.constant 0 : index
      %84 = vector.load %arg6[%c0_54, %c0_55] : memref<1x32xf32, #tpu.memory_space<vmem>>, vector<1x32xf32>
      %85 = vector.broadcast %84 : vector<1x32xf32> to vector<8x32xf32>
      %86 = arith.addf %83, %85 : vector<8x32xf32>
      %c0_56 = arith.constant 0 : index
      %c0_57 = arith.constant 0 : index
      %87 = vector.load %arg7[%c0_56, %c0_57] : memref<32x32xf32, #tpu.memory_space<vmem>>, vector<32x32xf32>
      %cst_58 = arith.constant dense<0.000000e+00> : vector<8x32xf32>
      %88 = tpu.matmul %81, %87, %cst_58 {dimension_numbers = #tpu.dot_dimension_numbers<[1], [0], [0], [1], [0, 0, 1, 1], [], []>} : vector<8x32xf32>, vector<32x32xf32>, vector<8x32xf32> -> vector<8x32xf32>
      %c0_59 = arith.constant 0 : index
      %c0_60 = arith.constant 0 : index
      %89 = vector.load %arg8[%c0_59, %c0_60] : memref<1x32xf32, #tpu.memory_space<vmem>>, vector<1x32xf32>
      %90 = vector.broadcast %89 : vector<1x32xf32> to vector<8x32xf32>
      %91 = arith.addf %88, %90 : vector<8x32xf32>
      %92 = vector.extract_strided_slice %86 {offsets = [0, 0], sizes = [8, 8], strides = [1, 1]} : vector<8x32xf32> to vector<8x8xf32>
      %c0_61 = arith.constant 0 : index
      %c0_62 = arith.constant 0 : index
      %c0_63 = arith.constant 0 : index
      %93 = vector.load %arg14[%c0_61, %c0_62, %c0_63] : memref<4x8x8xf32, #tpu.memory_space<vmem>>, vector<1x8x8xf32>
      %94 = vector.shape_cast %93 : vector<1x8x8xf32> to vector<8x8xf32>
      %95 = vector.shape_cast %92 : vector<8x8xf32> to vector<1x8x8xf32>
      tpu.vector_store %arg14[%c0_61, %c0_62, %c0_63], %95 {strides = array<i32>} : memref<4x8x8xf32, #tpu.memory_space<vmem>>, vector<1x8x8xf32>,
      %96 = vector.extract_strided_slice %91 {offsets = [0, 0], sizes = [8, 8], strides = [1, 1]} : vector<8x32xf32> to vector<8x8xf32>
      %c0_64 = arith.constant 0 : index
      %c0_65 = arith.constant 0 : index
      %c0_66 = arith.constant 0 : index
      %97 = vector.load %arg15[%c0_64, %c0_65, %c0_66] : memref<4x8x8xf32, #tpu.memory_space<vmem>>, vector<1x8x8xf32>
      %98 = vector.shape_cast %97 : vector<1x8x8xf32> to vector<8x8xf32>
      %99 = vector.shape_cast %96 : vector<8x8xf32> to vector<1x8x8xf32>
      tpu.vector_store %arg15[%c0_64, %c0_65, %c0_66], %99 {strides = array<i32>} : memref<4x8x8xf32, #tpu.memory_space<vmem>>, vector<1x8x8xf32>,
      %100 = vector.extract_strided_slice %86 {offsets = [0, 8], sizes = [8, 8], strides = [1, 1]} : vector<8x32xf32> to vector<8x8xf32>
      %c1_67 = arith.constant 1 : index
      %c0_68 = arith.constant 0 : index
      %c0_69 = arith.constant 0 : index
      %101 = vector.load %arg14[%c1_67, %c0_68, %c0_69] : memref<4x8x8xf32, #tpu.memory_space<vmem>>, vector<1x8x8xf32>
      %102 = vector.shape_cast %101 : vector<1x8x8xf32> to vector<8x8xf32>
      %103 = vector.shape_cast %100 : vector<8x8xf32> to vector<1x8x8xf32>
      tpu.vector_store %arg14[%c1_67, %c0_68, %c0_69], %103 {strides = array<i32>} : memref<4x8x8xf32, #tpu.memory_space<vmem>>, vector<1x8x8xf32>,
      %104 = vector.extract_strided_slice %91 {offsets = [0, 8], sizes = [8, 8], strides = [1, 1]} : vector<8x32xf32> to vector<8x8xf32>
      %c1_70 = arith.constant 1 : index
      %c0_71 = arith.constant 0 : index
      %c0_72 = arith.constant 0 : index
      %105 = vector.load %arg15[%c1_70, %c0_71, %c0_72] : memref<4x8x8xf32, #tpu.memory_space<vmem>>, vector<1x8x8xf32>
      %106 = vector.shape_cast %105 : vector<1x8x8xf32> to vector<8x8xf32>
      %107 = vector.shape_cast %104 : vector<8x8xf32> to vector<1x8x8xf32>
      tpu.vector_store %arg15[%c1_70, %c0_71, %c0_72], %107 {strides = array<i32>} : memref<4x8x8xf32, #tpu.memory_space<vmem>>, vector<1x8x8xf32>,
      %108 = vector.extract_strided_slice %86 {offsets = [0, 16], sizes = [8, 8], strides = [1, 1]} : vector<8x32xf32> to vector<8x8xf32>
      %c2_73 = arith.constant 2 : index
      %c0_74 = arith.constant 0 : index
      %c0_75 = arith.constant 0 : index
      %109 = vector.load %arg14[%c2_73, %c0_74, %c0_75] : memref<4x8x8xf32, #tpu.memory_space<vmem>>, vector<1x8x8xf32>
      %110 = vector.shape_cast %109 : vector<1x8x8xf32> to vector<8x8xf32>
      %111 = vector.shape_cast %108 : vector<8x8xf32> to vector<1x8x8xf32>
      tpu.vector_store %arg14[%c2_73, %c0_74, %c0_75], %111 {strides = array<i32>} : memref<4x8x8xf32, #tpu.memory_space<vmem>>, vector<1x8x8xf32>,
      %112 = vector.extract_strided_slice %91 {offsets = [0, 16], sizes = [8, 8], strides = [1, 1]} : vector<8x32xf32> to vector<8x8xf32>
      %c2_76 = arith.constant 2 : index
      %c0_77 = arith.constant 0 : index
      %c0_78 = arith.constant 0 : index
      %113 = vector.load %arg15[%c2_76, %c0_77, %c0_78] : memref<4x8x8xf32, #tpu.memory_space<vmem>>, vector<1x8x8xf32>
      %114 = vector.shape_cast %113 : vector<1x8x8xf32> to vector<8x8xf32>
      %115 = vector.shape_cast %112 : vector<8x8xf32> to vector<1x8x8xf32>
      tpu.vector_store %arg15[%c2_76, %c0_77, %c0_78], %115 {strides = array<i32>} : memref<4x8x8xf32, #tpu.memory_space<vmem>>, vector<1x8x8xf32>,
      %116 = vector.extract_strided_slice %86 {offsets = [0, 24], sizes = [8, 8], strides = [1, 1]} : vector<8x32xf32> to vector<8x8xf32>
      %c3_79 = arith.constant 3 : index
      %c0_80 = arith.constant 0 : index
      %c0_81 = arith.constant 0 : index
      %117 = vector.load %arg14[%c3_79, %c0_80, %c0_81] : memref<4x8x8xf32, #tpu.memory_space<vmem>>, vector<1x8x8xf32>
      %118 = vector.shape_cast %117 : vector<1x8x8xf32> to vector<8x8xf32>
      %119 = vector.shape_cast %116 : vector<8x8xf32> to vector<1x8x8xf32>
      tpu.vector_store %arg14[%c3_79, %c0_80, %c0_81], %119 {strides = array<i32>} : memref<4x8x8xf32, #tpu.memory_space<vmem>>, vector<1x8x8xf32>,
      %120 = vector.extract_strided_slice %91 {offsets = [0, 24], sizes = [8, 8], strides = [1, 1]} : vector<8x32xf32> to vector<8x8xf32>
      %c3_82 = arith.constant 3 : index
      %c0_83 = arith.constant 0 : index
      %c0_84 = arith.constant 0 : index
      %121 = vector.load %arg15[%c3_82, %c0_83, %c0_84] : memref<4x8x8xf32, #tpu.memory_space<vmem>>, vector<1x8x8xf32>
      %122 = vector.shape_cast %121 : vector<1x8x8xf32> to vector<8x8xf32>
      %123 = vector.shape_cast %120 : vector<8x8xf32> to vector<1x8x8xf32>
      tpu.vector_store %arg15[%c3_82, %c0_83, %c0_84], %123 {strides = array<i32>} : memref<4x8x8xf32, #tpu.memory_space<vmem>>, vector<1x8x8xf32>,
    } else {
    }
    %c8_i32 = arith.constant 8 : i32
    %3 = arith.muli %arg1, %c8_i32 : i32
    %4 = tpu.assume_multiple %3, 8 : i32
    %c0 = arith.constant 0 : index
    %5 = arith.index_cast %4 : i32 to index
    %c0_1 = arith.constant 0 : index
    %6 = vector.load %arg2[%c0, %5, %c0_1] : memref<1x8x32xf32, #tpu.memory_space<vmem>>, vector<1x8x32xf32>
    %7 = vector.shape_cast %6 : vector<1x8x32xf32> to vector<8x32xf32>
    %c0_2 = arith.constant 0 : index
    %c0_3 = arith.constant 0 : index
    %8 = vector.load %arg3[%c0_2, %c0_3] : memref<32x32xf32, #tpu.memory_space<vmem>>, vector<32x32xf32>
    %cst = arith.constant dense<0.000000e+00> : vector<8x32xf32>
    %9 = tpu.matmul %7, %8, %cst {dimension_numbers = #tpu.dot_dimension_numbers<[1], [0], [0], [1], [0, 0, 1, 1], [], []>} : vector<8x32xf32>, vector<32x32xf32>, vector<8x32xf32> -> vector<8x32xf32>
    %c0_4 = arith.constant 0 : index
    %c0_5 = arith.constant 0 : index
    %10 = vector.load %arg4[%c0_4, %c0_5] : memref<1x32xf32, #tpu.memory_space<vmem>>, vector<1x32xf32>
    %11 = vector.broadcast %10 : vector<1x32xf32> to vector<8x32xf32>
    %12 = arith.addf %9, %11 : vector<8x32xf32>
    %cst_6 = arith.constant 0.353553385 : f32
    %13 = vector.broadcast %cst_6 : f32 to vector<8x32xf32>
    %14 = arith.mulf %12, %13 : vector<8x32xf32>
    %15 = vector.extract_strided_slice %14 {offsets = [0, 0], sizes = [8, 8], strides = [1, 1]} : vector<8x32xf32> to vector<8x8xf32>
    %c0_7 = arith.constant 0 : index
    %c0_8 = arith.constant 0 : index
    %c0_9 = arith.constant 0 : index
    %16 = vector.load %arg16[%c0_7, %c0_8, %c0_9] : memref<4x8x8xf32, #tpu.memory_space<vmem>>, vector<1x8x8xf32>
    %17 = vector.shape_cast %16 : vector<1x8x8xf32> to vector<8x8xf32>
    %18 = vector.shape_cast %15 : vector<8x8xf32> to vector<1x8x8xf32>
    tpu.vector_store %arg16[%c0_7, %c0_8, %c0_9], %18 {strides = array<i32>} : memref<4x8x8xf32, #tpu.memory_space<vmem>>, vector<1x8x8xf32>,
    %19 = vector.extract_strided_slice %14 {offsets = [0, 8], sizes = [8, 8], strides = [1, 1]} : vector<8x32xf32> to vector<8x8xf32>
    %c1 = arith.constant 1 : index
    %c0_10 = arith.constant 0 : index
    %c0_11 = arith.constant 0 : index
    %20 = vector.load %arg16[%c1, %c0_10, %c0_11] : memref<4x8x8xf32, #tpu.memory_space<vmem>>, vector<1x8x8xf32>
    %21 = vector.shape_cast %20 : vector<1x8x8xf32> to vector<8x8xf32>
    %22 = vector.shape_cast %19 : vector<8x8xf32> to vector<1x8x8xf32>
    tpu.vector_store %arg16[%c1, %c0_10, %c0_11], %22 {strides = array<i32>} : memref<4x8x8xf32, #tpu.memory_space<vmem>>, vector<1x8x8xf32>,
    %23 = vector.extract_strided_slice %14 {offsets = [0, 16], sizes = [8, 8], strides = [1, 1]} : vector<8x32xf32> to vector<8x8xf32>
    %c2 = arith.constant 2 : index
    %c0_12 = arith.constant 0 : index
    %c0_13 = arith.constant 0 : index
    %24 = vector.load %arg16[%c2, %c0_12, %c0_13] : memref<4x8x8xf32, #tpu.memory_space<vmem>>, vector<1x8x8xf32>
    %25 = vector.shape_cast %24 : vector<1x8x8xf32> to vector<8x8xf32>
    %26 = vector.shape_cast %23 : vector<8x8xf32> to vector<1x8x8xf32>
    tpu.vector_store %arg16[%c2, %c0_12, %c0_13], %26 {strides = array<i32>} : memref<4x8x8xf32, #tpu.memory_space<vmem>>, vector<1x8x8xf32>,
    %27 = vector.extract_strided_slice %14 {offsets = [0, 24], sizes = [8, 8], strides = [1, 1]} : vector<8x32xf32> to vector<8x8xf32>
    %c3 = arith.constant 3 : index
    %c0_14 = arith.constant 0 : index
    %c0_15 = arith.constant 0 : index
    %28 = vector.load %arg16[%c3, %c0_14, %c0_15] : memref<4x8x8xf32, #tpu.memory_space<vmem>>, vector<1x8x8xf32>
    %29 = vector.shape_cast %28 : vector<1x8x8xf32> to vector<8x8xf32>
    %30 = vector.shape_cast %27 : vector<8x8xf32> to vector<1x8x8xf32>
    tpu.vector_store %arg16[%c3, %c0_14, %c0_15], %30 {strides = array<i32>} : memref<4x8x8xf32, #tpu.memory_space<vmem>>, vector<1x8x8xf32>,
    %c0_16 = arith.constant 0 : index
    %c0_17 = arith.constant 0 : index
    %c0_18 = arith.constant 0 : index
    %31 = vector.load %arg16[%c0_16, %c0_17, %c0_18] : memref<4x8x8xf32, #tpu.memory_space<vmem>>, vector<4x8x8xf32>
    %c0_19 = arith.constant 0 : index
    %c0_20 = arith.constant 0 : index
    %c0_21 = arith.constant 0 : index
    %32 = vector.load %arg14[%c0_19, %c0_20, %c0_21] : memref<4x8x8xf32, #tpu.memory_space<vmem>>, vector<4x8x8xf32>
    %c0_22 = arith.constant 0 : index
    %c0_23 = arith.constant 0 : index
    %c0_24 = arith.constant 0 : index
    %33 = vector.load %arg15[%c0_22, %c0_23, %c0_24] : memref<4x8x8xf32, #tpu.memory_space<vmem>>, vector<4x8x8xf32>
    %cst_25 = arith.constant dense<0.000000e+00> : vector<4x8x8xf32>
    %34 = tpu.matmul %31, %32, %cst_25 {dimension_numbers = #tpu.dot_dimension_numbers<[2], [2], [1], [1], [0, 0, 0, 1, 1, 1], [0], [0]>} : vector<4x8x8xf32>, vector<4x8x8xf32>, vector<4x8x8xf32> -> vector<4x8x8xf32>
    %cst_26 = arith.constant dense<0xFF800000> : vector<4x8xf32>
    %35 = vector.multi_reduction <maximumf>, %34, %cst_26 [2] : vector<4x8x8xf32> to vector<4x8xf32>
    %36 = vector.shape_cast %35 : vector<4x8xf32> to vector<4x8x1xf32>
    %37 = vector.broadcast %36 : vector<4x8x1xf32> to vector<4x8x8xf32>
    %38 = arith.subf %34, %37 : vector<4x8x8xf32>
    %39 = math.exp %38 : vector<4x8x8xf32>
    %cst_27 = arith.constant dense<0.000000e+00> : vector<4x8xf32>
    %40 = vector.multi_reduction <add>, %39, %cst_27 [2] : vector<4x8x8xf32> to vector<4x8xf32>
    %41 = vector.shape_cast %40 : vector<4x8xf32> to vector<4x8x1xf32>
    %cst_28 = arith.constant dense<0.000000e+00> : vector<4x8x8xf32>
    %42 = tpu.matmul %39, %33, %cst_28 {dimension_numbers = #tpu.dot_dimension_numbers<[2], [1], [1], [2], [0, 0, 0, 1, 1, 2], [0], [0]>} : vector<4x8x8xf32>, vector<4x8x8xf32>, vector<4x8x8xf32> -> vector<4x8x8xf32>
    %43 = tpu.reciprocal %41 : vector<4x8x1xf32> -> vector<4x8x1xf32>
    %44 = vector.broadcast %43 : vector<4x8x1xf32> to vector<4x8x8xf32>
    %45 = arith.mulf %42, %44 : vector<4x8x8xf32>
    %c0_29 = arith.constant 0 : index
    %c0_30 = arith.constant 0 : index
    %c0_31 = arith.constant 0 : index
    %46 = vector.load %arg9[%c0_29, %c0_30, %c0_31] : memref<4x8x32xf32, #tpu.memory_space<vmem>>, vector<4x8x32xf32>
    %cst_32 = arith.constant dense<0.000000e+00> : vector<4x8x32xf32>
    %47 = tpu.matmul %45, %46, %cst_32 {dimension_numbers = #tpu.dot_dimension_numbers<[2], [1], [1], [2], [0, 0, 0, 1, 1, 2], [0], [0]>} : vector<4x8x8xf32>, vector<4x8x32xf32>, vector<4x8x32xf32> -> vector<4x8x32xf32>
    %cst_33 = arith.constant dense<0.000000e+00> : vector<8x32xf32>
    %48 = vector.multi_reduction <add>, %47, %cst_33 [0] : vector<4x8x32xf32> to vector<8x32xf32>
    %c0_34 = arith.constant 0 : index
    %c0_35 = arith.constant 0 : index
    %49 = vector.load %arg10[%c0_34, %c0_35] : memref<1x32xf32, #tpu.memory_space<vmem>>, vector<1x32xf32>
    %50 = vector.broadcast %49 : vector<1x32xf32> to vector<8x32xf32>
    %51 = arith.addf %48, %50 : vector<8x32xf32>
    %52 = arith.addf %51, %7 : vector<8x32xf32>
    %cst_36 = arith.constant dense<0.000000e+00> : vector<8xf32>
    %53 = vector.multi_reduction <add>, %52, %cst_36 [1] : vector<8x32xf32> to vector<8xf32>
    %54 = vector.shape_cast %53 : vector<8xf32> to vector<8x1xf32>
    %cst_37 = arith.constant 3.200000e+01 : f32
    %55 = vector.broadcast %cst_37 : f32 to vector<8x1xf32>
    %56 = arith.divf %54, %55 : vector<8x1xf32>
    %57 = vector.broadcast %56 : vector<8x1xf32> to vector<8x32xf32>
    %58 = arith.subf %52, %57 : vector<8x32xf32>
    %59 = arith.mulf %58, %58 : vector<8x32xf32>
    %cst_38 = arith.constant dense<0.000000e+00> : vector<8xf32>
    %60 = vector.multi_reduction <add>, %59, %cst_38 [1] : vector<8x32xf32> to vector<8xf32>
    %61 = vector.shape_cast %60 : vector<8xf32> to vector<8x1xf32>
    %cst_39 = arith.constant 3.200000e+01 : f32
    %62 = vector.broadcast %cst_39 : f32 to vector<8x1xf32>
    %63 = arith.divf %61, %62 : vector<8x1xf32>
    %64 = vector.broadcast %56 : vector<8x1xf32> to vector<8x32xf32>
    %65 = arith.subf %52, %64 : vector<8x32xf32>
    %cst_40 = arith.constant 9.99999996E-13 : f32
    %66 = vector.broadcast %cst_40 : f32 to vector<8x1xf32>
    %67 = arith.addf %63, %66 : vector<8x1xf32>
    %68 = math.rsqrt %67 : vector<8x1xf32>
    %69 = vector.broadcast %68 : vector<8x1xf32> to vector<8x32xf32>
    %70 = arith.mulf %65, %69 : vector<8x32xf32>
    %c0_41 = arith.constant 0 : index
    %c0_42 = arith.constant 0 : index
    %71 = vector.load %arg11[%c0_41, %c0_42] : memref<1x32xf32, #tpu.memory_space<vmem>>, vector<1x32xf32>
    %72 = vector.broadcast %71 : vector<1x32xf32> to vector<8x32xf32>
    %73 = arith.mulf %70, %72 : vector<8x32xf32>
    %c0_43 = arith.constant 0 : index
    %c0_44 = arith.constant 0 : index
    %74 = vector.load %arg12[%c0_43, %c0_44] : memref<1x32xf32, #tpu.memory_space<vmem>>, vector<1x32xf32>
    %75 = vector.broadcast %74 : vector<1x32xf32> to vector<8x32xf32>
    %76 = arith.addf %73, %75 : vector<8x32xf32>
    %c0_45 = arith.constant 0 : index
    %c0_46 = arith.constant 0 : index
    %c0_47 = arith.constant 0 : index
    %77 = vector.load %arg13[%c0_45, %c0_46, %c0_47] : memref<1x8x32xf32, #tpu.memory_space<vmem>>, vector<1x8x32xf32>
    %78 = vector.shape_cast %77 : vector<1x8x32xf32> to vector<8x32xf32>
    %79 = vector.shape_cast %76 : vector<8x32xf32> to vector<1x8x32xf32>
    tpu.vector_store %arg13[%c0_45, %c0_46, %c0_47], %79 {strides = array<i32>} : memref<1x8x32xf32, #tpu.memory_space<vmem>>, vector<1x8x32xf32>,
    return
  }
  func.func @transform_0(%arg0: i32, %arg1: i32) -> (i32, i32, i32) {
    %c0_i32 = arith.constant 0 : i32
    %c0_i32_0 = arith.constant 0 : i32
    %c0_i32_1 = arith.constant 0 : i32
    return %arg0, %c0_i32, %c0_i32_0 : i32, i32, i32
  }
  func.func @transform_1(%arg0: i32, %arg1: i32) -> (i32, i32) {
    %c0_i32 = arith.constant 0 : i32
    %c0_i32_0 = arith.constant 0 : i32
    %c0_i32_1 = arith.constant 0 : i32
    return %c0_i32, %c0_i32_0 : i32, i32
  }
  func.func @transform_2(%arg0: i32, %arg1: i32) -> (i32, i32) {
    %c0_i32 = arith.constant 0 : i32
    %c0_i32_0 = arith.constant 0 : i32
    %c0_i32_1 = arith.constant 0 : i32
    return %c0_i32, %c0_i32_0 : i32, i32
  }
  func.func @transform_3(%arg0: i32, %arg1: i32) -> (i32, i32) {
    %c0_i32 = arith.constant 0 : i32
    %c0_i32_0 = arith.constant 0 : i32
    %c0_i32_1 = arith.constant 0 : i32
    return %c0_i32, %c0_i32_0 : i32, i32
  }
  func.func @transform_4(%arg0: i32, %arg1: i32) -> (i32, i32) {
    %c0_i32 = arith.constant 0 : i32
    %c0_i32_0 = arith.constant 0 : i32
    %c0_i32_1 = arith.constant 0 : i32
    return %c0_i32, %c0_i32_0 : i32, i32
  }
  func.func @transform_5(%arg0: i32, %arg1: i32) -> (i32, i32) {
    %c0_i32 = arith.constant 0 : i32
    %c0_i32_0 = arith.constant 0 : i32
    %c0_i32_1 = arith.constant 0 : i32
    return %c0_i32, %c0_i32_0 : i32, i32
  }
  func.func @transform_6(%arg0: i32, %arg1: i32) -> (i32, i32) {
    %c0_i32 = arith.constant 0 : i32
    %c0_i32_0 = arith.constant 0 : i32
    %c0_i32_1 = arith.constant 0 : i32
    return %c0_i32, %c0_i32_0 : i32, i32
  }
  func.func @transform_7(%arg0: i32, %arg1: i32) -> (i32, i32, i32) {
    %c0_i32 = arith.constant 0 : i32
    %c0_i32_0 = arith.constant 0 : i32
    %c0_i32_1 = arith.constant 0 : i32
    %c0_i32_2 = arith.constant 0 : i32
    return %c0_i32, %c0_i32_0, %c0_i32_1 : i32, i32, i32
  }
  func.func @transform_8(%arg0: i32, %arg1: i32) -> (i32, i32) {
    %c0_i32 = arith.constant 0 : i32
    %c0_i32_0 = arith.constant 0 : i32
    %c0_i32_1 = arith.constant 0 : i32
    return %c0_i32, %c0_i32_0 : i32, i32
  }
  func.func @transform_9(%arg0: i32, %arg1: i32) -> (i32, i32) {
    %c0_i32 = arith.constant 0 : i32
    %c0_i32_0 = arith.constant 0 : i32
    %c0_i32_1 = arith.constant 0 : i32
    return %c0_i32, %c0_i32_0 : i32, i32
  }
  func.func @transform_10(%arg0: i32, %arg1: i32) -> (i32, i32) {
    %c0_i32 = arith.constant 0 : i32
    %c0_i32_0 = arith.constant 0 : i32
    %c0_i32_1 = arith.constant 0 : i32
    return %c0_i32, %c0_i32_0 : i32, i32
  }
  func.func @transform_11(%arg0: i32, %arg1: i32) -> (i32, i32, i32) {
    %c0_i32 = arith.constant 0 : i32
    %c0_i32_0 = arith.constant 0 : i32
    return %arg0, %arg1, %c0_i32 : i32, i32, i32
  }
}

module attributes {stable_mosaic.version = 11 : i64} {
  func.func @_bert_attention_kernel(%arg0: i32, %arg1: i32, %arg2: memref<1x8x32xf32, #tpu.memory_space<vmem>>, %arg3: memref<32x32xf32, #tpu.memory_space<vmem>>, %arg4: memref<1x32xf32, #tpu.memory_space<vmem>>, %arg5: memref<32x32xf32, #tpu.memory_space<vmem>>, %arg6: memref<1x32xf32, #tpu.memory_space<vmem>>, %arg7: memref<32x32xf32, #tpu.memory_space<vmem>>, %arg8: memref<1x32xf32, #tpu.memory_space<vmem>>, %arg9: memref<4x8x32xf32, #tpu.memory_space<vmem>>, %arg10: memref<1x32xf32, #tpu.memory_space<vmem>>, %arg11: memref<1x32xf32, #tpu.memory_space<vmem>>, %arg12: memref<1x32xf32, #tpu.memory_space<vmem>>, %arg13: memref<1x8x32xf32, #tpu.memory_space<vmem>>, %arg14: memref<4x8x8xf32, #tpu.memory_space<vmem>>, %arg15: memref<4x8x8xf32, #tpu.memory_space<vmem>>, %arg16: memref<4x8x8xf32, #tpu.memory_space<vmem>>) attributes {dimension_semantics = [#tpu.dimension_semantics<parallel>, #tpu.dimension_semantics<arbitrary>], iteration_bounds = array<i64: 2, 1>, scalar_prefetch = 0 : i64, scratch_operands = 3 : i64, tpu.core_type = #tpu.core_type<tc>, window_params = [{transform_indices = @transform_0, window_bounds = array<i64: 1, 8, 32>}, {pipeline_mode = #tpu.pipeline_mode<synchronous>, transform_indices = @transform_1, window_bounds = array<i64: 32, 32>}, {pipeline_mode = #tpu.pipeline_mode<synchronous>, transform_indices = @transform_2, window_bounds = array<i64: 1, 32>}, {pipeline_mode = #tpu.pipeline_mode<synchronous>, transform_indices = @transform_3, window_bounds = array<i64: 32, 32>}, {pipeline_mode = #tpu.pipeline_mode<synchronous>, transform_indices = @transform_4, window_bounds = array<i64: 1, 32>}, {pipeline_mode = #tpu.pipeline_mode<synchronous>, transform_indices = @transform_5, window_bounds = array<i64: 32, 32>}, {pipeline_mode = #tpu.pipeline_mode<synchronous>, transform_indices = @transform_6, window_bounds = array<i64: 1, 32>}, {pipeline_mode = #tpu.pipeline_mode<synchronous>, transform_indices = @transform_7, window_bounds = array<i64: 4, 8, 32>}, {pipeline_mode = #tpu.pipeline_mode<synchronous>, transform_indices = @transform_8, window_bounds = array<i64: 1, 32>}, {pipeline_mode = #tpu.pipeline_mode<synchronous>, transform_indices = @transform_9, window_bounds = array<i64: 1, 32>}, {pipeline_mode = #tpu.pipeline_mode<synchronous>, transform_indices = @transform_10, window_bounds = array<i64: 1, 32>}, {transform_indices = @transform_11, window_bounds = array<i64: 1, 8, 32>}]} {
    %c0_i32 = arith.constant 0 : i32
    %0 = arith.cmpi eq, %arg1, %c0_i32 : i32
    %1 = arith.extui %0 : i1 to i32
    %c0_i32_0 = arith.constant 0 : i32
    %2 = arith.cmpi ne, %1, %c0_i32_0 : i32
    scf.if %2 {
      %c0_48 = arith.constant 0 : index
      %c0_49 = arith.constant 0 : index
      %c0_50 = arith.constant 0 : index
      %80 = vector.load %arg2[%c0_48, %c0_49, %c0_50] : memref<1x8x32xf32, #tpu.memory_space<vmem>>, vector<1x8x32xf32>
      %81 = vector.shape_cast %80 : vector<1x8x32xf32> to vector<8x32xf32>
      %c0_51 = arith.constant 0 : index
      %c0_52 = arith.constant 0 : index
      %82 = vector.load %arg5[%c0_51, %c0_52] : memref<32x32xf32, #tpu.memory_space<vmem>>, vector<32x32xf32>
      %cst_53 = arith.constant dense<0.000000e+00> : vector<8x32xf32>
      %83 = tpu.matmul %81, %82, %cst_53 {dimension_numbers = #tpu.dot_dimension_numbers<[1], [0], [0], [1], [0, 0, 1, 1], [], []>} : vector<8x32xf32>, vector<32x32xf32>, vector<8x32xf32> -> vector<8x32xf32>
      %c0_54 = arith.constant 0 : index
      %c0_55 = arith.constant 0 : index
      %84 = vector.load %arg6[%c0_54, %c0_55] : memref<1x32xf32, #tpu.memory_space<vmem>>, vector<1x32xf32>
      %85 = vector.broadcast %84 : vector<1x32xf32> to vector<8x32xf32>
      %86 = arith.addf %83, %85 : vector<8x32xf32>
      %c0_56 = arith.constant 0 : index
      %c0_57 = arith.constant 0 : index
      %87 = vector.load %arg7[%c0_56, %c0_57] : memref<32x32xf32, #tpu.memory_space<vmem>>, vector<32x32xf32>
      %cst_58 = arith.constant dense<0.000000e+00> : vector<8x32xf32>
      %88 = tpu.matmul %81, %87, %cst_58 {dimension_numbers = #tpu.dot_dimension_numbers<[1], [0], [0], [1], [0, 0, 1, 1], [], []>} : vector<8x32xf32>, vector<32x32xf32>, vector<8x32xf32> -> vector<8x32xf32>
      %c0_59 = arith.constant 0 : index
      %c0_60 = arith.constant 0 : index
      %89 = vector.load %arg8[%c0_59, %c0_60] : memref<1x32xf32, #tpu.memory_space<vmem>>, vector<1x32xf32>
      %90 = vector.broadcast %89 : vector<1x32xf32> to vector<8x32xf32>
      %91 = arith.addf %88, %90 : vector<8x32xf32>
      %92 = vector.extract_strided_slice %86 {offsets = [0, 0], sizes = [8, 8], strides = [1, 1]} : vector<8x32xf32> to vector<8x8xf32>
      %c0_61 = arith.constant 0 : index
      %c0_62 = arith.constant 0 : index
      %c0_63 = arith.constant 0 : index
      %93 = vector.load %arg14[%c0_61, %c0_62, %c0_63] : memref<4x8x8xf32, #tpu.memory_space<vmem>>, vector<1x8x8xf32>
      %94 = vector.shape_cast %93 : vector<1x8x8xf32> to vector<8x8xf32>
      %95 = vector.shape_cast %92 : vector<8x8xf32> to vector<1x8x8xf32>
      tpu.vector_store %arg14[%c0_61, %c0_62, %c0_63], %95 {strides = array<i32>} : memref<4x8x8xf32, #tpu.memory_space<vmem>>, vector<1x8x8xf32>,
      %96 = vector.extract_strided_slice %91 {offsets = [0, 0], sizes = [8, 8], strides = [1, 1]} : vector<8x32xf32> to vector<8x8xf32>
      %c0_64 = arith.constant 0 : index
      %c0_65 = arith.constant 0 : index
      %c0_66 = arith.constant 0 : index
      %97 = vector.load %arg15[%c0_64, %c0_65, %c0_66] : memref<4x8x8xf32, #tpu.memory_space<vmem>>, vector<1x8x8xf32>
      %98 = vector.shape_cast %97 : vector<1x8x8xf32> to vector<8x8xf32>
      %99 = vector.shape_cast %96 : vector<8x8xf32> to vector<1x8x8xf32>
      tpu.vector_store %arg15[%c0_64, %c0_65, %c0_66], %99 {strides = array<i32>} : memref<4x8x8xf32, #tpu.memory_space<vmem>>, vector<1x8x8xf32>,
      %100 = vector.extract_strided_slice %86 {offsets = [0, 8], sizes = [8, 8], strides = [1, 1]} : vector<8x32xf32> to vector<8x8xf32>
      %c1_67 = arith.constant 1 : index
      %c0_68 = arith.constant 0 : index
      %c0_69 = arith.constant 0 : index
      %101 = vector.load %arg14[%c1_67, %c0_68, %c0_69] : memref<4x8x8xf32, #tpu.memory_space<vmem>>, vector<1x8x8xf32>
      %102 = vector.shape_cast %101 : vector<1x8x8xf32> to vector<8x8xf32>
      %103 = vector.shape_cast %100 : vector<8x8xf32> to vector<1x8x8xf32>
      tpu.vector_store %arg14[%c1_67, %c0_68, %c0_69], %103 {strides = array<i32>} : memref<4x8x8xf32, #tpu.memory_space<vmem>>, vector<1x8x8xf32>,
      %104 = vector.extract_strided_slice %91 {offsets = [0, 8], sizes = [8, 8], strides = [1, 1]} : vector<8x32xf32> to vector<8x8xf32>
      %c1_70 = arith.constant 1 : index
      %c0_71 = arith.constant 0 : index
      %c0_72 = arith.constant 0 : index
      %105 = vector.load %arg15[%c1_70, %c0_71, %c0_72] : memref<4x8x8xf32, #tpu.memory_space<vmem>>, vector<1x8x8xf32>
      %106 = vector.shape_cast %105 : vector<1x8x8xf32> to vector<8x8xf32>
      %107 = vector.shape_cast %104 : vector<8x8xf32> to vector<1x8x8xf32>
      tpu.vector_store %arg15[%c1_70, %c0_71, %c0_72], %107 {strides = array<i32>} : memref<4x8x8xf32, #tpu.memory_space<vmem>>, vector<1x8x8xf32>,
      %108 = vector.extract_strided_slice %86 {offsets = [0, 16], sizes = [8, 8], strides = [1, 1]} : vector<8x32xf32> to vector<8x8xf32>
      %c2_73 = arith.constant 2 : index
      %c0_74 = arith.constant 0 : index
      %c0_75 = arith.constant 0 : index
      %109 = vector.load %arg14[%c2_73, %c0_74, %c0_75] : memref<4x8x8xf32, #tpu.memory_space<vmem>>, vector<1x8x8xf32>
      %110 = vector.shape_cast %109 : vector<1x8x8xf32> to vector<8x8xf32>
      %111 = vector.shape_cast %108 : vector<8x8xf32> to vector<1x8x8xf32>
      tpu.vector_store %arg14[%c2_73, %c0_74, %c0_75], %111 {strides = array<i32>} : memref<4x8x8xf32, #tpu.memory_space<vmem>>, vector<1x8x8xf32>,
      %112 = vector.extract_strided_slice %91 {offsets = [0, 16], sizes = [8, 8], strides = [1, 1]} : vector<8x32xf32> to vector<8x8xf32>
      %c2_76 = arith.constant 2 : index
      %c0_77 = arith.constant 0 : index
      %c0_78 = arith.constant 0 : index
      %113 = vector.load %arg15[%c2_76, %c0_77, %c0_78] : memref<4x8x8xf32, #tpu.memory_space<vmem>>, vector<1x8x8xf32>
      %114 = vector.shape_cast %113 : vector<1x8x8xf32> to vector<8x8xf32>
      %115 = vector.shape_cast %112 : vector<8x8xf32> to vector<1x8x8xf32>
      tpu.vector_store %arg15[%c2_76, %c0_77, %c0_78], %115 {strides = array<i32>} : memref<4x8x8xf32, #tpu.memory_space<vmem>>, vector<1x8x8xf32>,
      %116 = vector.extract_strided_slice %86 {offsets = [0, 24], sizes = [8, 8], strides = [1, 1]} : vector<8x32xf32> to vector<8x8xf32>
      %c3_79 = arith.constant 3 : index
      %c0_80 = arith.constant 0 : index
      %c0_81 = arith.constant 0 : index
      %117 = vector.load %arg14[%c3_79, %c0_80, %c0_81] : memref<4x8x8xf32, #tpu.memory_space<vmem>>, vector<1x8x8xf32>
      %118 = vector.shape_cast %117 : vector<1x8x8xf32> to vector<8x8xf32>
      %119 = vector.shape_cast %116 : vector<8x8xf32> to vector<1x8x8xf32>
      tpu.vector_store %arg14[%c3_79, %c0_80, %c0_81], %119 {strides = array<i32>} : memref<4x8x8xf32, #tpu.memory_space<vmem>>, vector<1x8x8xf32>,
      %120 = vector.extract_strided_slice %91 {offsets = [0, 24], sizes = [8, 8], strides = [1, 1]} : vector<8x32xf32> to vector<8x8xf32>
      %c3_82 = arith.constant 3 : index
      %c0_83 = arith.constant 0 : index
      %c0_84 = arith.constant 0 : index
      %121 = vector.load %arg15[%c3_82, %c0_83, %c0_84] : memref<4x8x8xf32, #tpu.memory_space<vmem>>, vector<1x8x8xf32>
      %122 = vector.shape_cast %121 : vector<1x8x8xf32> to vector<8x8xf32>
      %123 = vector.shape_cast %120 : vector<8x8xf32> to vector<1x8x8xf32>
      tpu.vector_store %arg15[%c3_82, %c0_83, %c0_84], %123 {strides = array<i32>} : memref<4x8x8xf32, #tpu.memory_space<vmem>>, vector<1x8x8xf32>,
    } else {
    }
    %c8_i32 = arith.constant 8 : i32
    %3 = arith.muli %arg1, %c8_i32 : i32
    %4 = tpu.assume_multiple %3, 8 : i32
    %c0 = arith.constant 0 : index
    %5 = arith.index_cast %4 : i32 to index
    %c0_1 = arith.constant 0 : index
    %6 = vector.load %arg2[%c0, %5, %c0_1] : memref<1x8x32xf32, #tpu.memory_space<vmem>>, vector<1x8x32xf32>
    %7 = vector.shape_cast %6 : vector<1x8x32xf32> to vector<8x32xf32>
    %c0_2 = arith.constant 0 : index
    %c0_3 = arith.constant 0 : index
    %8 = vector.load %arg3[%c0_2, %c0_3] : memref<32x32xf32, #tpu.memory_space<vmem>>, vector<32x32xf32>
    %cst = arith.constant dense<0.000000e+00> : vector<8x32xf32>
    %9 = tpu.matmul %7, %8, %cst {dimension_numbers = #tpu.dot_dimension_numbers<[1], [0], [0], [1], [0, 0, 1, 1], [], []>} : vector<8x32xf32>, vector<32x32xf32>, vector<8x32xf32> -> vector<8x32xf32>
    %c0_4 = arith.constant 0 : index
    %c0_5 = arith.constant 0 : index
    %10 = vector.load %arg4[%c0_4, %c0_5] : memref<1x32xf32, #tpu.memory_space<vmem>>, vector<1x32xf32>
    %11 = vector.broadcast %10 : vector<1x32xf32> to vector<8x32xf32>
    %12 = arith.addf %9, %11 : vector<8x32xf32>
    %cst_6 = arith.constant 0.353553385 : f32
    %13 = vector.broadcast %cst_6 : f32 to vector<8x32xf32>
    %14 = arith.mulf %12, %13 : vector<8x32xf32>
    %15 = vector.extract_strided_slice %14 {offsets = [0, 0], sizes = [8, 8], strides = [1, 1]} : vector<8x32xf32> to vector<8x8xf32>
    %c0_7 = arith.constant 0 : index
    %c0_8 = arith.constant 0 : index
    %c0_9 = arith.constant 0 : index
    %16 = vector.load %arg16[%c0_7, %c0_8, %c0_9] : memref<4x8x8xf32, #tpu.memory_space<vmem>>, vector<1x8x8xf32>
    %17 = vector.shape_cast %16 : vector<1x8x8xf32> to vector<8x8xf32>
    %18 = vector.shape_cast %15 : vector<8x8xf32> to vector<1x8x8xf32>
    tpu.vector_store %arg16[%c0_7, %c0_8, %c0_9], %18 {strides = array<i32>} : memref<4x8x8xf32, #tpu.memory_space<vmem>>, vector<1x8x8xf32>,
    %19 = vector.extract_strided_slice %14 {offsets = [0, 8], sizes = [8, 8], strides = [1, 1]} : vector<8x32xf32> to vector<8x8xf32>
    %c1 = arith.constant 1 : index
    %c0_10 = arith.constant 0 : index
    %c0_11 = arith.constant 0 : index
    %20 = vector.load %arg16[%c1, %c0_10, %c0_11] : memref<4x8x8xf32, #tpu.memory_space<vmem>>, vector<1x8x8xf32>
    %21 = vector.shape_cast %20 : vector<1x8x8xf32> to vector<8x8xf32>
    %22 = vector.shape_cast %19 : vector<8x8xf32> to vector<1x8x8xf32>
    tpu.vector_store %arg16[%c1, %c0_10, %c0_11], %22 {strides = array<i32>} : memref<4x8x8xf32, #tpu.memory_space<vmem>>, vector<1x8x8xf32>,
    %23 = vector.extract_strided_slice %14 {offsets = [0, 16], sizes = [8, 8], strides = [1, 1]} : vector<8x32xf32> to vector<8x8xf32>
    %c2 = arith.constant 2 : index
    %c0_12 = arith.constant 0 : index
    %c0_13 = arith.constant 0 : index
    %24 = vector.load %arg16[%c2, %c0_12, %c0_13] : memref<4x8x8xf32, #tpu.memory_space<vmem>>, vector<1x8x8xf32>
    %25 = vector.shape_cast %24 : vector<1x8x8xf32> to vector<8x8xf32>
    %26 = vector.shape_cast %23 : vector<8x8xf32> to vector<1x8x8xf32>
    tpu.vector_store %arg16[%c2, %c0_12, %c0_13], %26 {strides = array<i32>} : memref<4x8x8xf32, #tpu.memory_space<vmem>>, vector<1x8x8xf32>,
    %27 = vector.extract_strided_slice %14 {offsets = [0, 24], sizes = [8, 8], strides = [1, 1]} : vector<8x32xf32> to vector<8x8xf32>
    %c3 = arith.constant 3 : index
    %c0_14 = arith.constant 0 : index
    %c0_15 = arith.constant 0 : index
    %28 = vector.load %arg16[%c3, %c0_14, %c0_15] : memref<4x8x8xf32, #tpu.memory_space<vmem>>, vector<1x8x8xf32>
    %29 = vector.shape_cast %28 : vector<1x8x8xf32> to vector<8x8xf32>
    %30 = vector.shape_cast %27 : vector<8x8xf32> to vector<1x8x8xf32>
    tpu.vector_store %arg16[%c3, %c0_14, %c0_15], %30 {strides = array<i32>} : memref<4x8x8xf32, #tpu.memory_space<vmem>>, vector<1x8x8xf32>,
    %c0_16 = arith.constant 0 : index
    %c0_17 = arith.constant 0 : index
    %c0_18 = arith.constant 0 : index
    %31 = vector.load %arg16[%c0_16, %c0_17, %c0_18] : memref<4x8x8xf32, #tpu.memory_space<vmem>>, vector<4x8x8xf32>
    %c0_19 = arith.constant 0 : index
    %c0_20 = arith.constant 0 : index
    %c0_21 = arith.constant 0 : index
    %32 = vector.load %arg14[%c0_19, %c0_20, %c0_21] : memref<4x8x8xf32, #tpu.memory_space<vmem>>, vector<4x8x8xf32>
    %c0_22 = arith.constant 0 : index
    %c0_23 = arith.constant 0 : index
    %c0_24 = arith.constant 0 : index
    %33 = vector.load %arg15[%c0_22, %c0_23, %c0_24] : memref<4x8x8xf32, #tpu.memory_space<vmem>>, vector<4x8x8xf32>
    %cst_25 = arith.constant dense<0.000000e+00> : vector<4x8x8xf32>
    %34 = tpu.matmul %31, %32, %cst_25 {dimension_numbers = #tpu.dot_dimension_numbers<[2], [2], [1], [1], [0, 0, 0, 1, 1, 1], [0], [0]>} : vector<4x8x8xf32>, vector<4x8x8xf32>, vector<4x8x8xf32> -> vector<4x8x8xf32>
    %cst_26 = arith.constant dense<0xFF800000> : vector<4x8xf32>
    %35 = vector.multi_reduction <maximumf>, %34, %cst_26 [2] : vector<4x8x8xf32> to vector<4x8xf32>
    %36 = vector.shape_cast %35 : vector<4x8xf32> to vector<4x8x1xf32>
    %37 = vector.broadcast %36 : vector<4x8x1xf32> to vector<4x8x8xf32>
    %38 = arith.subf %34, %37 : vector<4x8x8xf32>
    %39 = math.exp %38 : vector<4x8x8xf32>
    %cst_27 = arith.constant dense<0.000000e+00> : vector<4x8xf32>
    %40 = vector.multi_reduction <add>, %39, %cst_27 [2] : vector<4x8x8xf32> to vector<4x8xf32>
    %41 = vector.shape_cast %40 : vector<4x8xf32> to vector<4x8x1xf32>
    %cst_28 = arith.constant dense<0.000000e+00> : vector<4x8x8xf32>
    %42 = tpu.matmul %39, %33, %cst_28 {dimension_numbers = #tpu.dot_dimension_numbers<[2], [1], [1], [2], [0, 0, 0, 1, 1, 2], [0], [0]>} : vector<4x8x8xf32>, vector<4x8x8xf32>, vector<4x8x8xf32> -> vector<4x8x8xf32>
    %43 = tpu.reciprocal %41 : vector<4x8x1xf32> -> vector<4x8x1xf32>
    %44 = vector.broadcast %43 : vector<4x8x1xf32> to vector<4x8x8xf32>
    %45 = arith.mulf %42, %44 : vector<4x8x8xf32>
    %c0_29 = arith.constant 0 : index
    %c0_30 = arith.constant 0 : index
    %c0_31 = arith.constant 0 : index
    %46 = vector.load %arg9[%c0_29, %c0_30, %c0_31] : memref<4x8x32xf32, #tpu.memory_space<vmem>>, vector<4x8x32xf32>
    %cst_32 = arith.constant dense<0.000000e+00> : vector<4x8x32xf32>
    %47 = tpu.matmul %45, %46, %cst_32 {dimension_numbers = #tpu.dot_dimension_numbers<[2], [1], [1], [2], [0, 0, 0, 1, 1, 2], [0], [0]>} : vector<4x8x8xf32>, vector<4x8x32xf32>, vector<4x8x32xf32> -> vector<4x8x32xf32>
    %cst_33 = arith.constant dense<0.000000e+00> : vector<8x32xf32>
    %48 = vector.multi_reduction <add>, %47, %cst_33 [0] : vector<4x8x32xf32> to vector<8x32xf32>
    %c0_34 = arith.constant 0 : index
    %c0_35 = arith.constant 0 : index
    %49 = vector.load %arg10[%c0_34, %c0_35] : memref<1x32xf32, #tpu.memory_space<vmem>>, vector<1x32xf32>
    %50 = vector.broadcast %49 : vector<1x32xf32> to vector<8x32xf32>
    %51 = arith.addf %48, %50 : vector<8x32xf32>
    %52 = arith.addf %51, %7 : vector<8x32xf32>
    %cst_36 = arith.constant dense<0.000000e+00> : vector<8xf32>
    %53 = vector.multi_reduction <add>, %52, %cst_36 [1] : vector<8x32xf32> to vector<8xf32>
    %54 = vector.shape_cast %53 : vector<8xf32> to vector<8x1xf32>
    %cst_37 = arith.constant 3.200000e+01 : f32
    %55 = vector.broadcast %cst_37 : f32 to vector<8x1xf32>
    %56 = arith.divf %54, %55 : vector<8x1xf32>
    %57 = vector.broadcast %56 : vector<8x1xf32> to vector<8x32xf32>
    %58 = arith.subf %52, %57 : vector<8x32xf32>
    %59 = arith.mulf %58, %58 : vector<8x32xf32>
    %cst_38 = arith.constant dense<0.000000e+00> : vector<8xf32>
    %60 = vector.multi_reduction <add>, %59, %cst_38 [1] : vector<8x32xf32> to vector<8xf32>
    %61 = vector.shape_cast %60 : vector<8xf32> to vector<8x1xf32>
    %cst_39 = arith.constant 3.200000e+01 : f32
    %62 = vector.broadcast %cst_39 : f32 to vector<8x1xf32>
    %63 = arith.divf %61, %62 : vector<8x1xf32>
    %64 = vector.broadcast %56 : vector<8x1xf32> to vector<8x32xf32>
    %65 = arith.subf %52, %64 : vector<8x32xf32>
    %cst_40 = arith.constant 9.99999996E-13 : f32
    %66 = vector.broadcast %cst_40 : f32 to vector<8x1xf32>
    %67 = arith.addf %63, %66 : vector<8x1xf32>
    %68 = math.rsqrt %67 : vector<8x1xf32>
    %69 = vector.broadcast %68 : vector<8x1xf32> to vector<8x32xf32>
    %70 = arith.mulf %65, %69 : vector<8x32xf32>
    %c0_41 = arith.constant 0 : index
    %c0_42 = arith.constant 0 : index
    %71 = vector.load %arg11[%c0_41, %c0_42] : memref<1x32xf32, #tpu.memory_space<vmem>>, vector<1x32xf32>
    %72 = vector.broadcast %71 : vector<1x32xf32> to vector<8x32xf32>
    %73 = arith.mulf %70, %72 : vector<8x32xf32>
    %c0_43 = arith.constant 0 : index
    %c0_44 = arith.constant 0 : index
    %74 = vector.load %arg12[%c0_43, %c0_44] : memref<1x32xf32, #tpu.memory_space<vmem>>, vector<1x32xf32>
    %75 = vector.broadcast %74 : vector<1x32xf32> to vector<8x32xf32>
    %76 = arith.addf %73, %75 : vector<8x32xf32>
    %c0_45 = arith.constant 0 : index
    %c0_46 = arith.constant 0 : index
    %c0_47 = arith.constant 0 : index
    %77 = vector.load %arg13[%c0_45, %c0_46, %c0_47] : memref<1x8x32xf32, #tpu.memory_space<vmem>>, vector<1x8x32xf32>
    %78 = vector.shape_cast %77 : vector<1x8x32xf32> to vector<8x32xf32>
    %79 = vector.shape_cast %76 : vector<8x32xf32> to vector<1x8x32xf32>
    tpu.vector_store %arg13[%c0_45, %c0_46, %c0_47], %79 {strides = array<i32>} : memref<1x8x32xf32, #tpu.memory_space<vmem>>, vector<1x8x32xf32>,
    return
  }
  func.func @transform_0(%arg0: i32, %arg1: i32) -> (i32, i32, i32) {
    %c0_i32 = arith.constant 0 : i32
    %c0_i32_0 = arith.constant 0 : i32
    %c0_i32_1 = arith.constant 0 : i32
    return %arg0, %c0_i32, %c0_i32_0 : i32, i32, i32
  }
  func.func @transform_1(%arg0: i32, %arg1: i32) -> (i32, i32) {
    %c0_i32 = arith.constant 0 : i32
    %c0_i32_0 = arith.constant 0 : i32
    %c0_i32_1 = arith.constant 0 : i32
    return %c0_i32, %c0_i32_0 : i32, i32
  }
  func.func @transform_2(%arg0: i32, %arg1: i32) -> (i32, i32) {
    %c0_i32 = arith.constant 0 : i32
    %c0_i32_0 = arith.constant 0 : i32
    %c0_i32_1 = arith.constant 0 : i32
    return %c0_i32, %c0_i32_0 : i32, i32
  }
  func.func @transform_3(%arg0: i32, %arg1: i32) -> (i32, i32) {
    %c0_i32 = arith.constant 0 : i32
    %c0_i32_0 = arith.constant 0 : i32
    %c0_i32_1 = arith.constant 0 : i32
    return %c0_i32, %c0_i32_0 : i32, i32
  }
  func.func @transform_4(%arg0: i32, %arg1: i32) -> (i32, i32) {
    %c0_i32 = arith.constant 0 : i32
    %c0_i32_0 = arith.constant 0 : i32
    %c0_i32_1 = arith.constant 0 : i32
    return %c0_i32, %c0_i32_0 : i32, i32
  }
  func.func @transform_5(%arg0: i32, %arg1: i32) -> (i32, i32) {
    %c0_i32 = arith.constant 0 : i32
    %c0_i32_0 = arith.constant 0 : i32
    %c0_i32_1 = arith.constant 0 : i32
    return %c0_i32, %c0_i32_0 : i32, i32
  }
  func.func @transform_6(%arg0: i32, %arg1: i32) -> (i32, i32) {
    %c0_i32 = arith.constant 0 : i32
    %c0_i32_0 = arith.constant 0 : i32
    %c0_i32_1 = arith.constant 0 : i32
    return %c0_i32, %c0_i32_0 : i32, i32
  }
  func.func @transform_7(%arg0: i32, %arg1: i32) -> (i32, i32, i32) {
    %c0_i32 = arith.constant 0 : i32
    %c0_i32_0 = arith.constant 0 : i32
    %c0_i32_1 = arith.constant 0 : i32
    %c0_i32_2 = arith.constant 0 : i32
    return %c0_i32, %c0_i32_0, %c0_i32_1 : i32, i32, i32
  }
  func.func @transform_8(%arg0: i32, %arg1: i32) -> (i32, i32) {
    %c0_i32 = arith.constant 0 : i32
    %c0_i32_0 = arith.constant 0 : i32
    %c0_i32_1 = arith.constant 0 : i32
    return %c0_i32, %c0_i32_0 : i32, i32
  }
  func.func @transform_9(%arg0: i32, %arg1: i32) -> (i32, i32) {
    %c0_i32 = arith.constant 0 : i32
    %c0_i32_0 = arith.constant 0 : i32
    %c0_i32_1 = arith.constant 0 : i32
    return %c0_i32, %c0_i32_0 : i32, i32
  }
  func.func @transform_10(%arg0: i32, %arg1: i32) -> (i32, i32) {
    %c0_i32 = arith.constant 0 : i32
    %c0_i32_0 = arith.constant 0 : i32
    %c0_i32_1 = arith.constant 0 : i32
    return %c0_i32, %c0_i32_0 : i32, i32
  }
  func.func @transform_11(%arg0: i32, %arg1: i32) -> (i32, i32, i32) {
    %c0_i32 = arith.constant 0 : i32
    %c0_i32_0 = arith.constant 0 : i32
    return %arg0, %arg1, %c0_i32 : i32, i32, i32
  }
}

</mosaic_0001>

<llo_original>
// kernel: tpu_custom_call.1
$region0: #{tpu_custom_call.1}
  #allocation0 [shape = 'u32[]', space=smem, size = 0x4, offset = 0x4, fixed_abs, tag = 'smem constant byte address 0x4 - core index']
  #allocation1 [shape = 'u32[72,128]{1,0:T(1,128)}', space=vmem, size = 0x9000, scoped, tag = 'internal scratch']
  #allocation2 [shape = 'f32[4,8,8]{2,1,0:T(8,128)}', space=vmem, size = 0x4000, scoped, tag = 'scratch operand']
  #allocation3 [shape = 'f32[4,8,8]{2,1,0:T(8,128)}', space=vmem, size = 0x4000, scoped, tag = 'scratch operand']
  #allocation4 [shape = 'f32[4,8,8]{2,1,0:T(8,128)}', space=vmem, size = 0x4000, scoped, tag = 'scratch operand']
  %s0 = inlined_call_operand.hbm [shape: f32[2,8,32], index: 0, kind: input, shape index: {}]
  %s1 = inlined_call_operand.hbm [shape: f32[32,32], index: 1, kind: input, shape index: {}]
  %s2 = inlined_call_operand.vmem [shape: f32[1,32], index: 2, kind: input, shape index: {}]
  %s3 = inlined_call_operand.hbm [shape: f32[32,32], index: 3, kind: input, shape index: {}]
  %s4 = inlined_call_operand.vmem [shape: f32[1,32], index: 4, kind: input, shape index: {}]
  %s5 = inlined_call_operand.hbm [shape: f32[32,32], index: 5, kind: input, shape index: {}]
  %s6 = inlined_call_operand.vmem [shape: f32[1,32], index: 6, kind: input, shape index: {}]
  %s7 = inlined_call_operand.hbm [shape: f32[4,8,32], index: 7, kind: input, shape index: {}]
  %s8 = inlined_call_operand.vmem [shape: f32[1,32], index: 8, kind: input, shape index: {}]
  %s9 = inlined_call_operand.vmem [shape: f32[1,32], index: 9, kind: input, shape index: {}]
  %s10 = inlined_call_operand.vmem [shape: f32[1,32], index: 10, kind: input, shape index: {}]
  %s11 = inlined_call_operand.hbm [shape: f32[2,8,32], index: 11, kind: output, shape index: {}]
  %s12 = sld [smem:[#allocation0]]
  $region101: #{tpu_custom_call.1} parent=0
    _
  %s14 = ssub.s32 1, %s12
  %s15 = scalar_select 0, %s14, %s12
  $region1: #{tpu_custom_call.1} parent=0
    #allocation5 [shape = 'u8[8192]{0}', space=vmem, size = 0x2000, scoped, tag = 'input window, operand 0']
    #allocation6 [shape = 's32[2]{0}', space=sflag, size = 0x8, scoped, tag = 'scoped memory for tpu_custom_call.1']
    #allocation7 [shape = 's32[2]{0}', space=sflag, size = 0x8, scoped, tag = 'scoped memory for tpu_custom_call.1']
    #allocation8 [shape = 'u8[16384]{0}', space=vmem, size = 0x4000, scoped, tag = 'input window, operand 1, single buffered']
    #allocation9 [shape = 's32[1]{0}', space=sflag, size = 0x4, scoped, tag = 'scoped memory for tpu_custom_call.1']
    #allocation10 [shape = 'u8[16384]{0}', space=vmem, size = 0x4000, scoped, tag = 'input window, operand 3, single buffered']
    #allocation11 [shape = 'u8[16384]{0}', space=vmem, size = 0x4000, scoped, tag = 'input window, operand 5, single buffered']
    #allocation12 [shape = 's32[1]{0}', space=sflag, size = 0x4, scoped, tag = 'scoped memory for tpu_custom_call.1']
    #allocation13 [shape = 'u8[16384]{0}', space=vmem, size = 0x4000, scoped, tag = 'input window, operand 7, single buffered']
    #allocation14 [shape = 'u8[8192]{0}', space=vmem, size = 0x2000, scoped, tag = 'output window, operand 0']
    %16 = vsyncpa [#allocation6], 0
    %s17 = scalar_lea.sflag [#allocation6], 1
    %18 = vsyncpa %s17, 0
    %19 = vsyncpa [#allocation9], 0
    %20 = vsyncpa [#allocation12], 0
    %21 = vsyncpa [#allocation7], 0
    %s22 = scalar_lea.sflag [#allocation7], 1
    %23 = vsyncpa %s22, 0
    loop: start=0, step=1, limit=4
    $region2: #{tpu_custom_call.1} parent=1 // loop_pre_header
      _
    $region3: #{tpu_custom_call.1} parent=1 // loop_header
      %s25 = sphi 0, %s29
      %p26 = scmp.ge.s32.totalorder %s25, 4
      %s32 = sphi 0, %s44
      %s33 = sphi 0, %s40
      %s34 = sphi 0, %s32
      %s35 = sphi 0, %s33
      %s36 = sphi 0, %s34
      %s37 = sphi 0, %s35
      %s47 = sphi 0, %s49
      %s50 = sphi 0, %s47
      %s51 = sphi 0, %s50
      %s67 = sphi 0, %s51
      %s71 = sphi 0, %s71
      %s73 = sphi 0, %s71
      %s74 = sphi 0, %s73
      %s88 = sphi 0, %s74
      %s92 = sphi 0, %s92
      %s94 = sphi 0, %s92
      %s95 = sphi 0, %s94
      %s109 = sphi 0, %s95
      %s113 = sphi 0, %s113
      %s115 = sphi 0, %s113
      %s116 = sphi 0, %s115
      %s130 = sphi 0, %s116
      %s134 = sphi 0, %s134
      %s136 = sphi 0, %s134
      %s137 = sphi 0, %s136
      %s151 = sphi 0, %s137
      %s155 = sphi 0, %s155
      %s157 = sphi 0, %s155
      %s158 = sphi 0, %s157
      %s172 = sphi 0, %s158
      %s176 = sphi 0, %s176
      %s178 = sphi 0, %s176
      %s179 = sphi 0, %s178
      %s193 = sphi 0, %s179
      %s197 = sphi 0, %s197
      %s199 = sphi 0, %s197
      %s200 = sphi 0, %s199
      %s214 = sphi 0, %s200
      %s218 = sphi 0, %s218
      %s220 = sphi 0, %s218
      %s221 = sphi 0, %s220
      %s235 = sphi 0, %s221
      %s239 = sphi 0, %s239
      %s241 = sphi 0, %s239
      %s242 = sphi 0, %s241
      %s256 = sphi 0, %s242
      %s260 = sphi 0, %s260
      %s262 = sphi 0, %s260
      %s263 = sphi 0, %s262
      %s277 = sphi 0, %s263
      %s285 = sphi 0, %s287
      %s288 = sphi 0, %s285
      %s289 = sphi 0, %s288
      %s305 = sphi 0, %s289
    $region4: #{tpu_custom_call.1} parent=1 // loop_header_branch
      %28 = sbr.rel (%p26) target = $region8
    $region5: #{tpu_custom_call.1} parent=1 // loop_body
      %s30 = ssub.s32 %s25, 1
      %s31 = ssub.s32 %s25, 2
      %s38 = sadd.s32 1, %s33
      %p39 = scmp.ge.s32.totalorder %s38, 1
      %s40 = scalar_select %p39, 0, %s38
      %s41 = sadd.s32 1, %s32
      %s42 = scalar_select %p39, %s41, %s32
      %p43 = scmp.ge.s32.totalorder %s42, 2
      %s44 = scalar_select %p43, 0, %s42
      %s45 = ssub.s32 %s32, %s44
      %p46 = scmp.eq.s32.totalorder %s45, 0
      %s48 = sadd.s32 %s47, 1
      %s49 = scalar_select %p46, %s47, %s48
      %p52 = pneg %p46
      %p53 = scmp.eq.s32.totalorder %s25, 1
      %p54 = por %p52, %p53
      %p55 = scmp.ne.s32.totalorder %s47, %s50
      %p56 = scmp.eq.s32.totalorder %s25, 0
      %p57 = por %p55, %p56
      %p58 = scmp.ne.s32.totalorder %s47, %s50
      %p59 = scmp.eq.s32.totalorder %s30, 1
      %p60 = por %p58, %p59
      %p61 = scmp.ne.s32.totalorder %s50, %s51
      %p62 = scmp.eq.s32.totalorder %s30, 0
      %p63 = por %p61, %p62
      %p64 = scmp.ne.s32.totalorder %s50, %s51
      %p65 = scmp.eq.s32.totalorder %s31, 1
      %p66 = por %p64, %p65
      %p68 = scmp.ne.s32.totalorder %s51, %s67
      %p69 = scmp.eq.s32.totalorder %s31, 0
      %p70 = por %p68, %p69
      %s72 = sadd.s32 %s71, 1
      %p75 = scmp.eq.s32.totalorder %s25, 1
      %p76 = scmp.ne.s32.totalorder %s71, %s73
      %p77 = scmp.eq.s32.totalorder %s25, 0
      %p78 = por %p76, %p77
      %p79 = scmp.ne.s32.totalorder %s71, %s73
      %p80 = scmp.eq.s32.totalorder %s30, 1
      %p81 = por %p79, %p80
      %p82 = scmp.ne.s32.totalorder %s73, %s74
      %p83 = scmp.eq.s32.totalorder %s30, 0
      %p84 = por %p82, %p83
      %p85 = scmp.ne.s32.totalorder %s73, %s74
      %p86 = scmp.eq.s32.totalorder %s31, 1
      %p87 = por %p85, %p86
      %p89 = scmp.ne.s32.totalorder %s74, %s88
      %p90 = scmp.eq.s32.totalorder %s31, 0
      %p91 = por %p89, %p90
      %s93 = sadd.s32 %s92, 1
      %p96 = scmp.eq.s32.totalorder %s25, 1
      %p97 = scmp.ne.s32.totalorder %s92, %s94
      %p98 = scmp.eq.s32.totalorder %s25, 0
      %p99 = por %p97, %p98
      %p100 = scmp.ne.s32.totalorder %s92, %s94
      %p101 = scmp.eq.s32.totalorder %s30, 1
      %p102 = por %p100, %p101
      %p103 = scmp.ne.s32.totalorder %s94, %s95
      %p104 = scmp.eq.s32.totalorder %s30, 0
      %p105 = por %p103, %p104
      %p106 = scmp.ne.s32.totalorder %s94, %s95
      %p107 = scmp.eq.s32.totalorder %s31, 1
      %p108 = por %p106, %p107
      %p110 = scmp.ne.s32.totalorder %s95, %s109
      %p111 = scmp.eq.s32.totalorder %s31, 0
      %p112 = por %p110, %p111
      %s114 = sadd.s32 %s113, 1
      %p117 = scmp.eq.s32.totalorder %s25, 1
      %p118 = scmp.ne.s32.totalorder %s113, %s115
      %p119 = scmp.eq.s32.totalorder %s25, 0
      %p120 = por %p118, %p119
      %p121 = scmp.ne.s32.totalorder %s113, %s115
      %p122 = scmp.eq.s32.totalorder %s30, 1
      %p123 = por %p121, %p122
      %p124 = scmp.ne.s32.totalorder %s115, %s116
      %p125 = scmp.eq.s32.totalorder %s30, 0
      %p126 = por %p124, %p125
      %p127 = scmp.ne.s32.totalorder %s115, %s116
      %p128 = scmp.eq.s32.totalorder %s31, 1
      %p129 = por %p127, %p128
      %p131 = scmp.ne.s32.totalorder %s116, %s130
      %p132 = scmp.eq.s32.totalorder %s31, 0
      %p133 = por %p131, %p132
      %s135 = sadd.s32 %s134, 1
      %p138 = scmp.eq.s32.totalorder %s25, 1
      %p139 = scmp.ne.s32.totalorder %s134, %s136
      %p140 = scmp.eq.s32.totalorder %s25, 0
      %p141 = por %p139, %p140
      %p142 = scmp.ne.s32.totalorder %s134, %s136
      %p143 = scmp.eq.s32.totalorder %s30, 1
      %p144 = por %p142, %p143
      %p145 = scmp.ne.s32.totalorder %s136, %s137
      %p146 = scmp.eq.s32.totalorder %s30, 0
      %p147 = por %p145, %p146
      %p148 = scmp.ne.s32.totalorder %s136, %s137
      %p149 = scmp.eq.s32.totalorder %s31, 1
      %p150 = por %p148, %p149
      %p152 = scmp.ne.s32.totalorder %s137, %s151
      %p153 = scmp.eq.s32.totalorder %s31, 0
      %p154 = por %p152, %p153
      %s156 = sadd.s32 %s155, 1
      %p159 = scmp.eq.s32.totalorder %s25, 1
      %p160 = scmp.ne.s32.totalorder %s155, %s157
      %p161 = scmp.eq.s32.totalorder %s25, 0
      %p162 = por %p160, %p161
      %p163 = scmp.ne.s32.totalorder %s155, %s157
      %p164 = scmp.eq.s32.totalorder %s30, 1
      %p165 = por %p163, %p164
      %p166 = scmp.ne.s32.totalorder %s157, %s158
      %p167 = scmp.eq.s32.totalorder %s30, 0
      %p168 = por %p166, %p167
      %p169 = scmp.ne.s32.totalorder %s157, %s158
      %p170 = scmp.eq.s32.totalorder %s31, 1
      %p171 = por %p169, %p170
      %p173 = scmp.ne.s32.totalorder %s158, %s172
      %p174 = scmp.eq.s32.totalorder %s31, 0
      %p175 = por %p173, %p174
      %s177 = sadd.s32 %s176, 1
      %p180 = scmp.eq.s32.totalorder %s25, 1
      %p181 = scmp.ne.s32.totalorder %s176, %s178
      %p182 = scmp.eq.s32.totalorder %s25, 0
      %p183 = por %p181, %p182
      %p184 = scmp.ne.s32.totalorder %s176, %s178
      %p185 = scmp.eq.s32.totalorder %s30, 1
      %p186 = por %p184, %p185
      %p187 = scmp.ne.s32.totalorder %s178, %s179
      %p188 = scmp.eq.s32.totalorder %s30, 0
      %p189 = por %p187, %p188
      %p190 = scmp.ne.s32.totalorder %s178, %s179
      %p191 = scmp.eq.s32.totalorder %s31, 1
      %p192 = por %p190, %p191
      %p194 = scmp.ne.s32.totalorder %s179, %s193
      %p195 = scmp.eq.s32.totalorder %s31, 0
      %p196 = por %p194, %p195
      %s198 = sadd.s32 %s197, 1
      %p201 = scmp.eq.s32.totalorder %s25, 1
      %p202 = scmp.ne.s32.totalorder %s197, %s199
      %p203 = scmp.eq.s32.totalorder %s25, 0
      %p204 = por %p202, %p203
      %p205 = scmp.ne.s32.totalorder %s197, %s199
      %p206 = scmp.eq.s32.totalorder %s30, 1
      %p207 = por %p205, %p206
      %p208 = scmp.ne.s32.totalorder %s199, %s200
      %p209 = scmp.eq.s32.totalorder %s30, 0
      %p210 = por %p208, %p209
      %p211 = scmp.ne.s32.totalorder %s199, %s200
      %p212 = scmp.eq.s32.totalorder %s31, 1
      %p213 = por %p211, %p212
      %p215 = scmp.ne.s32.totalorder %s200, %s214
      %p216 = scmp.eq.s32.totalorder %s31, 0
      %p217 = por %p215, %p216
      %s219 = sadd.s32 %s218, 1
      %p222 = scmp.eq.s32.totalorder %s25, 1
      %p223 = scmp.ne.s32.totalorder %s218, %s220
      %p224 = scmp.eq.s32.totalorder %s25, 0
      %p225 = por %p223, %p224
      %p226 = scmp.ne.s32.totalorder %s218, %s220
      %p227 = scmp.eq.s32.totalorder %s30, 1
      %p228 = por %p226, %p227
      %p229 = scmp.ne.s32.totalorder %s220, %s221
      %p230 = scmp.eq.s32.totalorder %s30, 0
      %p231 = por %p229, %p230
      %p232 = scmp.ne.s32.totalorder %s220, %s221
      %p233 = scmp.eq.s32.totalorder %s31, 1
      %p234 = por %p232, %p233
      %p236 = scmp.ne.s32.totalorder %s221, %s235
      %p237 = scmp.eq.s32.totalorder %s31, 0
      %p238 = por %p236, %p237
      %s240 = sadd.s32 %s239, 1
      %p243 = scmp.eq.s32.totalorder %s25, 1
      %p244 = scmp.ne.s32.totalorder %s239, %s241
      %p245 = scmp.eq.s32.totalorder %s25, 0
      %p246 = por %p244, %p245
      %p247 = scmp.ne.s32.totalorder %s239, %s241
      %p248 = scmp.eq.s32.totalorder %s30, 1
      %p249 = por %p247, %p248
      %p250 = scmp.ne.s32.totalorder %s241, %s242
      %p251 = scmp.eq.s32.totalorder %s30, 0
      %p252 = por %p250, %p251
      %p253 = scmp.ne.s32.totalorder %s241, %s242
      %p254 = scmp.eq.s32.totalorder %s31, 1
      %p255 = por %p253, %p254
      %p257 = scmp.ne.s32.totalorder %s242, %s256
      %p258 = scmp.eq.s32.totalorder %s31, 0
      %p259 = por %p257, %p258
      %s261 = sadd.s32 %s260, 1
      %p264 = scmp.eq.s32.totalorder %s25, 1
      %p265 = scmp.ne.s32.totalorder %s260, %s262
      %p266 = scmp.eq.s32.totalorder %s25, 0
      %p267 = por %p265, %p266
      %p268 = scmp.ne.s32.totalorder %s260, %s262
      %p269 = scmp.eq.s32.totalorder %s30, 1
      %p270 = por %p268, %p269
      %p271 = scmp.ne.s32.totalorder %s262, %s263
      %p272 = scmp.eq.s32.totalorder %s30, 0
      %p273 = por %p271, %p272
      %p274 = scmp.ne.s32.totalorder %s262, %s263
      %p275 = scmp.eq.s32.totalorder %s31, 1
      %p276 = por %p274, %p275
      %p278 = scmp.ne.s32.totalorder %s263, %s277
      %p279 = scmp.eq.s32.totalorder %s31, 0
      %p280 = por %p278, %p279
      %s281 = ssub.s32 %s32, %s44
      %s282 = ssub.s32 %s33, %s40
      %s283 = sor.u32 %s281, %s282
      %p284 = scmp.eq.s32.totalorder %s283, 0
      %s286 = sadd.s32 %s285, 1
      %s287 = scalar_select %p284, %s285, %s286
      %p290 = pneg %p284
      %p291 = scmp.eq.s32.totalorder %s25, 1
      %p292 = por %p290, %p291
      %p293 = scmp.ne.s32.totalorder %s285, %s288
      %p294 = scmp.eq.s32.totalorder %s25, 0
      %p295 = por %p293, %p294
      %p296 = scmp.ne.s32.totalorder %s285, %s288
      %p297 = scmp.eq.s32.totalorder %s30, 1
      %p298 = por %p296, %p297
      %p299 = scmp.ne.s32.totalorder %s288, %s289
      %p300 = scmp.eq.s32.totalorder %s30, 0
      %p301 = por %p299, %p300
      %p302 = scmp.ne.s32.totalorder %s288, %s289
      %p303 = scmp.eq.s32.totalorder %s31, 1
      %p304 = por %p302, %p303
      %p306 = scmp.ne.s32.totalorder %s289, %s305
      %p307 = scmp.eq.s32.totalorder %s31, 0
      %p308 = por %p306, %p307
      %p309 = scmp.le.s32.totalorder 1, %s25
      %p310 = scmp.lt.s32.totalorder %s25, 3
      %p311 = pnand %p309, %p310
      %p312 = pneg %p311
      // Predicated region
      $region9: #{tpu_custom_call.1} parent=5 // pred_check
        _
      $region10: #{tpu_custom_call.1} parent=5 // pred_check_branch
        %314 = sbr.rel (%p311) target = $region12
      $region11: #{tpu_custom_call.1} parent=5 // pred_region
        %s315 = ssub.s32 %s25, 1
        // Predicated region
        $region13: #{tpu_custom_call.1} parent=11 // pred_check
          %p316 = pneg %p84
        $region14: #{tpu_custom_call.1} parent=11 // pred_check_branch
          %318 = sbr.rel (%p316) target = $region16
        $region15: #{tpu_custom_call.1} parent=11 // pred_region
          %320 = vsyncadd [#allocation9], 0
          %s321 = sshll.u32 %s1, 4
          %s322 = int_to_ptr.hbm [resolvable:$true] %s321
          %s323 = sshll.u32 [#allocation8], 4
          %s324 = int_to_ptr.vmem [resolvable:$true] %s323
          %329 = dma.hbm_to_vmem [thread:$0]  %s322, 512, %s324, [#allocation9], 128, 128, 8
        $region16: #{tpu_custom_call.1} parent=11 // pred_fallthru
          _
        // Predicated region
        $region17: #{tpu_custom_call.1} parent=11 // pred_check
          %p330 = pneg %p105
        $region18: #{tpu_custom_call.1} parent=11 // pred_check_branch
          %332 = sbr.rel (%p330) target = $region20
        $region19: #{tpu_custom_call.1} parent=11 // pred_region
          _
        $region20: #{tpu_custom_call.1} parent=11 // pred_fallthru
          _
        // Predicated region
        $region21: #{tpu_custom_call.1} parent=11 // pred_check
          %p333 = pneg %p126
        $region22: #{tpu_custom_call.1} parent=11 // pred_check_branch
          %335 = sbr.rel (%p333) target = $region24
        $region23: #{tpu_custom_call.1} parent=11 // pred_region
          %337 = vsyncadd [#allocation9], 0
          %s338 = sshll.u32 %s3, 4
          %s339 = int_to_ptr.hbm [resolvable:$true] %s338
          %s340 = sshll.u32 [#allocation10], 4
          %s341 = int_to_ptr.vmem [resolvable:$true] %s340
          %346 = dma.hbm_to_vmem [thread:$0]  %s339, 512, %s341, [#allocation9], 128, 128, 8
        $region24: #{tpu_custom_call.1} parent=11 // pred_fallthru
          _
        // Predicated region
        $region25: #{tpu_custom_call.1} parent=11 // pred_check
          %p347 = pneg %p147
        $region26: #{tpu_custom_call.1} parent=11 // pred_check_branch
          %349 = sbr.rel (%p347) target = $region28
        $region27: #{tpu_custom_call.1} parent=11 // pred_region
          _
        $region28: #{tpu_custom_call.1} parent=11 // pred_fallthru
          _
        // Predicated region
        $region29: #{tpu_custom_call.1} parent=11 // pred_check
          %p350 = pneg %p168
        $region30: #{tpu_custom_call.1} parent=11 // pred_check_branch
          %352 = sbr.rel (%p350) target = $region32
        $region31: #{tpu_custom_call.1} parent=11 // pred_region
          %354 = vsyncadd [#allocation12], 0
          %s355 = sshll.u32 %s5, 4
          %s356 = int_to_ptr.hbm [resolvable:$true] %s355
          %s357 = sshll.u32 [#allocation11], 4
          %s358 = int_to_ptr.vmem [resolvable:$true] %s357
          %363 = dma.hbm_to_vmem [thread:$0]  %s356, 512, %s358, [#allocation12], 128, 128, 8
        $region32: #{tpu_custom_call.1} parent=11 // pred_fallthru
          _
        // Predicated region
        $region33: #{tpu_custom_call.1} parent=11 // pred_check
          %p364 = pneg %p189
        $region34: #{tpu_custom_call.1} parent=11 // pred_check_branch
          %366 = sbr.rel (%p364) target = $region36
        $region35: #{tpu_custom_call.1} parent=11 // pred_region
          _
        $region36: #{tpu_custom_call.1} parent=11 // pred_fallthru
          _
        // Predicated region
        $region37: #{tpu_custom_call.1} parent=11 // pred_check
          %p367 = pneg %p210
        $region38: #{tpu_custom_call.1} parent=11 // pred_check_branch
          %369 = sbr.rel (%p367) target = $region40
        $region39: #{tpu_custom_call.1} parent=11 // pred_region
          %371 = vsyncadd [#allocation12], 0
          %s372 = sshll.u32 %s7, 4
          %s373 = int_to_ptr.hbm [resolvable:$true] %s372
          %s374 = sshll.u32 [#allocation13], 4
          %s375 = int_to_ptr.vmem [resolvable:$true] %s374
          %380 = dma.hbm_to_vmem [thread:$0]  %s373, 512, %s375, [#allocation12], 128, 128, 8
        $region40: #{tpu_custom_call.1} parent=11 // pred_fallthru
          _
        // Predicated region
        $region41: #{tpu_custom_call.1} parent=11 // pred_check
          %p381 = pneg %p231
        $region42: #{tpu_custom_call.1} parent=11 // pred_check_branch
          %383 = sbr.rel (%p381) target = $region44
        $region43: #{tpu_custom_call.1} parent=11 // pred_region
          _
        $region44: #{tpu_custom_call.1} parent=11 // pred_fallthru
          _
        // Predicated region
        $region45: #{tpu_custom_call.1} parent=11 // pred_check
          %p384 = pneg %p252
        $region46: #{tpu_custom_call.1} parent=11 // pred_check_branch
          %386 = sbr.rel (%p384) target = $region48
        $region47: #{tpu_custom_call.1} parent=11 // pred_region
          _
        $region48: #{tpu_custom_call.1} parent=11 // pred_fallthru
          _
        // Predicated region
        $region49: #{tpu_custom_call.1} parent=11 // pred_check
          %p387 = pneg %p273
        $region50: #{tpu_custom_call.1} parent=11 // pred_check_branch
          %389 = sbr.rel (%p387) target = $region52
        $region51: #{tpu_custom_call.1} parent=11 // pred_region
          _
        $region52: #{tpu_custom_call.1} parent=11 // pred_fallthru
          _
      $region12: #{tpu_custom_call.1} parent=5 // pred_fallthru
        _
      %p390 = scmp.lt.s32.totalorder %s25, 2
      // Predicated region
      $region53: #{tpu_custom_call.1} parent=5 // pred_check
        %p391 = pneg %p390
      $region54: #{tpu_custom_call.1} parent=5 // pred_check_branch
        %393 = sbr.rel (%p391) target = $region56
      $region55: #{tpu_custom_call.1} parent=5 // pred_region
        // Predicated region
        $region57: #{tpu_custom_call.1} parent=55 // pred_check
          %p394 = pneg %p57
        $region58: #{tpu_custom_call.1} parent=55 // pred_check_branch
          %396 = sbr.rel (%p394) target = $region60
        $region59: #{tpu_custom_call.1} parent=55 // pred_region
          %s397 = sand.u32 %s47, 1
          %s398 = scalar_lea.sflag [#allocation6], %s397
          %s399 = sand.u32 %s47, 1
          %s400 = smul.addr %s399, 8
          %s401 = scalar_lea.vmem [#allocation5], %s400
          %403 = vsyncadd %s398, 0
          %s404 = smul.addr %s32, 8
          %s405 = scalar_lea.hbm %s0, %s404
          %s407 = sshll.u32 %s405, 4
          %s408 = int_to_ptr.hbm [resolvable:$true] %s407
          %s409 = sshll.u32 %s401, 4
          %s410 = int_to_ptr.vmem [resolvable:$true] %s409
          %412 = dma.hbm_to_vmem [thread:$0]  %s408, 128, %s410, %s398
        $region60: #{tpu_custom_call.1} parent=55 // pred_fallthru
          _
      $region56: #{tpu_custom_call.1} parent=5 // pred_fallthru
        _
      %p413 = scmp.le.s32.totalorder 1, %s25
      %p414 = scmp.lt.s32.totalorder %s25, 3
      %p415 = pnand %p413, %p414
      %p416 = pneg %p415
      // Predicated region
      $region61: #{tpu_custom_call.1} parent=5 // pred_check
        _
      $region62: #{tpu_custom_call.1} parent=5 // pred_check_branch
        %418 = sbr.rel (%p415) target = $region64
      $region63: #{tpu_custom_call.1} parent=5 // pred_region
        %s419 = ssub.s32 %s25, 1
        %s420 = sand.u32 %s50, 1
        %s421 = scalar_lea.sflag [#allocation6], %s420
        %s422 = sand.u32 %s50, 1
        %s423 = smul.addr %s422, 8
        %s424 = scalar_lea.vmem [#allocation5], %s423
        // Predicated region
        $region65: #{tpu_custom_call.1} parent=63 // pred_check
          %p425 = pneg %p63
        $region66: #{tpu_custom_call.1} parent=63 // pred_check_branch
          %427 = sbr.rel (%p425) target = $region68
        $region67: #{tpu_custom_call.1} parent=63 // pred_region
          %429 = dma.done %s421, 128
        $region68: #{tpu_custom_call.1} parent=63 // pred_fallthru
          _
        // Predicated region
        $region69: #{tpu_custom_call.1} parent=63 // pred_check
          %p430 = pneg %p84
        $region70: #{tpu_custom_call.1} parent=63 // pred_check_branch
          %432 = sbr.rel (%p430) target = $region72
        $region71: #{tpu_custom_call.1} parent=63 // pred_region
          %434 = dma.done [#allocation9], 512
        $region72: #{tpu_custom_call.1} parent=63 // pred_fallthru
          _
        // Predicated region
        $region73: #{tpu_custom_call.1} parent=63 // pred_check
          %p435 = pneg %p126
        $region74: #{tpu_custom_call.1} parent=63 // pred_check_branch
          %437 = sbr.rel (%p435) target = $region76
        $region75: #{tpu_custom_call.1} parent=63 // pred_region
          %439 = dma.done [#allocation9], 512
        $region76: #{tpu_custom_call.1} parent=63 // pred_fallthru
          _
        // Predicated region
        $region77: #{tpu_custom_call.1} parent=63 // pred_check
          %p440 = pneg %p168
        $region78: #{tpu_custom_call.1} parent=63 // pred_check_branch
          %442 = sbr.rel (%p440) target = $region80
        $region79: #{tpu_custom_call.1} parent=63 // pred_region
          %444 = dma.done [#allocation12], 512
        $region80: #{tpu_custom_call.1} parent=63 // pred_fallthru
          _
        // Predicated region
        $region81: #{tpu_custom_call.1} parent=63 // pred_check
          %p445 = pneg %p210
        $region82: #{tpu_custom_call.1} parent=63 // pred_check_branch
          %447 = sbr.rel (%p445) target = $region84
        $region83: #{tpu_custom_call.1} parent=63 // pred_region
          %449 = dma.done [#allocation12], 512
        $region84: #{tpu_custom_call.1} parent=63 // pred_fallthru
          _
        %s450 = sand.u32 %s50, 1
        %s451 = scalar_lea.sflag [#allocation6], %s450
        %s452 = sand.u32 %s50, 1
        %s453 = smul.addr %s452, 8
        %s454 = scalar_lea.vmem [#allocation5], %s453
        %p455 = pneg %p63
        %p456 = pneg %p60
        %p457 = pneg %p84
        %p458 = pneg %p81
        %p459 = pneg %p105
        %p460 = pneg %p102
        %p461 = pneg %p126
        %p462 = pneg %p123
        %p463 = pneg %p147
        %p464 = pneg %p144
        %p465 = pneg %p168
        %p466 = pneg %p165
        %p467 = pneg %p189
        %p468 = pneg %p186
        %p469 = pneg %p210
        %p470 = pneg %p207
        %p471 = pneg %p231
        %p472 = pneg %p228
        %p473 = pneg %p252
        %p474 = pneg %p249
        %p475 = pneg %p273
        %p476 = pneg %p270
        %p477 = pneg %p301
        %p478 = pneg %p298
        %s479 = sand.u32 %s288, 1
        %s480 = scalar_lea.sflag [#allocation7], %s479
        %s481 = sand.u32 %s288, 1
        %s482 = smul.addr %s481, 8
        %s483 = scalar_lea.vmem [#allocation14], %s482
        %p484 = scmp.eq.s32.totalorder %s35, 0
        // Predicated region
        $region85: #{tpu_custom_call.1} parent=63 // pred_check
          %p485 = pneg %p484
        $region86: #{tpu_custom_call.1} parent=63 // pred_check_branch
          %487 = sbr.rel (%p485) target = $region88
        $region87: #{tpu_custom_call.1} parent=63 // pred_region
          %v488 = vld [vmem:[%s424] sm:$0xff]
          %v489 = vld [vmem:[#allocation10] sm:$0xff]
          %v490 = vld [vmem:[#allocation10 + $0x8] sm:$0xff]
          %v491 = vld [vmem:[#allocation10 + $0x10] sm:$0xff]
          %v492 = vld [vmem:[#allocation10 + $0x18] sm:$0xff]
          %v493 = vld [vmem:[%s4] sm:$0x1]
          %v495 = vperm.slane %v493, 0
          %vm497 = vcmask 261120
          %v499 = vsel %vm497, %v488, 0
          %501 = vmatpush.msra.mxu0 0.0
          %502 = vmatpush.msra.mxu0 0.0
          %503 = vmatpush.msra.mxu0 0.0
          %504 = vmatpush.msra.mxu0 0.0
          %505 = vmatpush.msra.mxu0 0.0
          %506 = vmatpush.msra.mxu0 0.0
          %507 = vmatpush.msra.mxu0 0.0
          %508 = vmatpush.msra.mxu0 0.0
          %509 = vmatpush.msra.mxu0 0.0
          %510 = vmatpush.msra.mxu0 0.0
          %511 = vmatpush.msra.mxu0 0.0
          %512 = vmatpush.msra.mxu0 0.0
          %513 = vmatpush.msra.mxu0 %v492
          %514 = vmatpush.msra.mxu0 %v491
          %515 = vmatpush.msra.mxu0 %v490
          %516 = vmatpush.msra.mxu0 %v489
          %517 = vmatmul.f32.gmra.mxu0 %v499
          %v518 = vpop.f32.mrf.mxu0
          %v519 = vadd.f32 %v495, %v518
          %520 = vdwg.mxu0
          %v521 = vld [vmem:[#allocation11] sm:$0xff]
          %v522 = vld [vmem:[#allocation11 + $0x8] sm:$0xff]
          %v523 = vld [vmem:[#allocation11 + $0x10] sm:$0xff]
          %v524 = vld [vmem:[#allocation11 + $0x18] sm:$0xff]
          %v525 = vld [vmem:[%s6] sm:$0x1]
          %v527 = vperm.slane %v525, 0
          %529 = vmatpush.msra.mxu0 0.0
          %530 = vmatpush.msra.mxu0 0.0
          %531 = vmatpush.msra.mxu0 0.0
          %532 = vmatpush.msra.mxu0 0.0
          %533 = vmatpush.msra.mxu0 0.0
          %534 = vmatpush.msra.mxu0 0.0
          %535 = vmatpush.msra.mxu0 0.0
          %536 = vmatpush.msra.mxu0 0.0
          %537 = vmatpush.msra.mxu0 0.0
          %538 = vmatpush.msra.mxu0 0.0
          %539 = vmatpush.msra.mxu0 0.0
          %540 = vmatpush.msra.mxu0 0.0
          %541 = vmatpush.msra.mxu0 %v524
          %542 = vmatpush.msra.mxu0 %v523
          %543 = vmatpush.msra.mxu0 %v522
          %544 = vmatpush.msra.mxu0 %v521
          %545 = vmatmul.f32.gmra.mxu0 %v499
          %v546 = vpop.f32.mrf.mxu0
          %v547 = vadd.f32 %v527, %v546
          %548 = vdwg.mxu0
          %vm549 = vcmask 64512
          %550 = vst.msk [vmem:[#allocation2] sm:$0xff] %vm549, %v519
          %551 = vst.msk [vmem:[#allocation3] sm:$0xff] %vm549, %v547
          %553 = vrot.lane.b32.xlu0 %v519, 120
          %v554 = vpop.permute.xlu0 %553
          %s556 = scalar_lea.vmem [#allocation2], 8
          %557 = vst.msk [vmem:[%s556] sm:$0xff] %vm549, %v554
          %559 = vrot.lane.b32.xlu0 %v547, 120
          %v560 = vpop.permute.xlu0 %559
          %s562 = scalar_lea.vmem [#allocation3], 8
          %563 = vst.msk [vmem:[%s562] sm:$0xff] %vm549, %v560
          %564 = vrot.lane.b32.xlu0 %v519, 112
          %v565 = vpop.permute.xlu0 %564
          %s567 = scalar_lea.vmem [#allocation2], 16
          %568 = vst.msk [vmem:[%s567] sm:$0xff] %vm549, %v565
          %569 = vrot.lane.b32.xlu0 %v547, 112
          %v570 = vpop.permute.xlu0 %569
          %s572 = scalar_lea.vmem [#allocation3], 16
          %573 = vst.msk [vmem:[%s572] sm:$0xff] %vm549, %v570
          %574 = vrot.lane.b32.xlu0 %v519, 104
          %v575 = vpop.permute.xlu0 %574
          %s577 = scalar_lea.vmem [#allocation2], 24
          %578 = vst.msk [vmem:[%s577] sm:$0xff] %vm549, %v575
          %579 = vrot.lane.b32.xlu0 %v547, 104
          %v580 = vpop.permute.xlu0 %579
          %s582 = scalar_lea.vmem [#allocation3], 24
          %583 = vst.msk [vmem:[%s582] sm:$0xff] %vm549, %v580
        $region88: #{tpu_custom_call.1} parent=63 // pred_fallthru
          _
        %s584 = smul.u32 %s35, 8
        %s585 = scalar_lea.vmem %s424, %s584 [#allocation5]
        %v586 = vld [vmem:[%s585] sm:$0xff]
        %v587 = vld [vmem:[#allocation8] sm:$0xff]
        %v588 = vld [vmem:[#allocation8 + $0x8] sm:$0xff]
        %v589 = vld [vmem:[#allocation8 + $0x10] sm:$0xff]
        %v590 = vld [vmem:[#allocation8 + $0x18] sm:$0xff]
        %v591 = vld [vmem:[%s2] sm:$0x1]
        %v593 = vperm.slane %v591, 0
        %vm595 = vcmask 261120
        %v597 = vsel %vm595, %v586, 0
        %599 = vmatpush.msra.mxu0 0.0
        %600 = vmatpush.msra.mxu0 0.0
        %601 = vmatpush.msra.mxu0 0.0
        %602 = vmatpush.msra.mxu0 0.0
        %603 = vmatpush.msra.mxu0 0.0
        %604 = vmatpush.msra.mxu0 0.0
        %605 = vmatpush.msra.mxu0 0.0
        %606 = vmatpush.msra.mxu0 0.0
        %607 = vmatpush.msra.mxu0 0.0
        %608 = vmatpush.msra.mxu0 0.0
        %609 = vmatpush.msra.mxu0 0.0
        %610 = vmatpush.msra.mxu0 0.0
        %611 = vmatpush.msra.mxu0 %v590
        %612 = vmatpush.msra.mxu0 %v589
        %613 = vmatpush.msra.mxu0 %v588
        %614 = vmatpush.msra.mxu0 %v587
        %615 = vmatmul.f32.gmra.mxu0 %v597
        %v616 = vpop.f32.mrf.mxu0
        %v617 = vadd.f32 %v593, %v616
        %618 = vdwg.mxu0
        %v619 = vmul.f32 %v617, 0.35355338
        %vm620 = vcmask 64512
        %621 = vst.msk [vmem:[#allocation4] sm:$0xff] %vm620, %v619
        %623 = vrot.lane.b32.xlu0 %v619, 120
        %v624 = vpop.permute.xlu0 %623
        %s626 = scalar_lea.vmem [#allocation4], 8
        %627 = vst.msk [vmem:[%s626] sm:$0xff] %vm620, %v624
        %628 = vrot.lane.b32.xlu0 %v619, 112
        %v629 = vpop.permute.xlu0 %628
        %s631 = scalar_lea.vmem [#allocation4], 16
        %632 = vst.msk [vmem:[%s631] sm:$0xff] %vm620, %v629
        %633 = vrot.lane.b32.xlu0 %v619, 104
        %v634 = vpop.permute.xlu0 %633
        %s636 = scalar_lea.vmem [#allocation4], 24
        %637 = vst.msk [vmem:[%s636] sm:$0xff] %vm620, %v634
        %v638 = vld [vmem:[#allocation4] sm:$0xff]
        %v639 = vld [vmem:[#allocation4 + $0x8] sm:$0xff]
        %v640 = vld [vmem:[#allocation4 + $0x10] sm:$0xff]
        %v641 = vld [vmem:[#allocation4 + $0x18] sm:$0xff]
        %v642 = vld [vmem:[#allocation2] sm:$0xff]
        %v643 = vld [vmem:[#allocation2 + $0x8] sm:$0xff]
        %v644 = vld [vmem:[#allocation2 + $0x10] sm:$0xff]
        %v645 = vld [vmem:[#allocation2 + $0x18] sm:$0xff]
        %v646 = vld [vmem:[#allocation3] sm:$0xff]
        %v647 = vld [vmem:[#allocation3 + $0x8] sm:$0xff]
        %v648 = vld [vmem:[#allocation3 + $0x10] sm:$0xff]
        %v649 = vld [vmem:[#allocation3 + $0x18] sm:$0xff]
        %v651 = vsel %vm620, %v638, 0
        %v654 = vsel %vm620, %v642, 0
        %656 = vmatpush.xpose.msra.mxu0 0.0
        %657 = vmatpush.xpose.msra.mxu0 0.0
        %658 = vmatpush.xpose.msra.mxu0 0.0
        %659 = vmatpush.xpose.msra.mxu0 0.0
        %660 = vmatpush.xpose.msra.mxu0 0.0
        %661 = vmatpush.xpose.msra.mxu0 0.0
        %662 = vmatpush.xpose.msra.mxu0 0.0
        %663 = vmatpush.xpose.msra.mxu0 0.0
        %664 = vmatpush.xpose.msra.mxu0 0.0
        %665 = vmatpush.xpose.msra.mxu0 0.0
        %666 = vmatpush.xpose.msra.mxu0 0.0
        %667 = vmatpush.xpose.msra.mxu0 0.0
        %668 = vmatpush.xpose.msra.mxu0 0.0
        %669 = vmatpush.xpose.msra.mxu0 0.0
        %670 = vmatpush.xpose.msra.mxu0 0.0
        %671 = vmatpush.xpose.msra.mxu0 %v654
        %672 = vmatmul.f32.gmra.mxu0 %v651
        %v673 = vpop.f32.mrf.mxu0
        %v674 = vadd.f32 0.0, %v673
        %675 = vdwg.mxu0
        %v677 = vsel %vm620, %v639, 0
        %v680 = vsel %vm620, %v643, 0
        %682 = vmatpush.xpose.msra.mxu0 0.0
        %683 = vmatpush.xpose.msra.mxu0 0.0
        %684 = vmatpush.xpose.msra.mxu0 0.0
        %685 = vmatpush.xpose.msra.mxu0 0.0
        %686 = vmatpush.xpose.msra.mxu0 0.0
        %687 = vmatpush.xpose.msra.mxu0 0.0
        %688 = vmatpush.xpose.msra.mxu0 0.0
        %689 = vmatpush.xpose.msra.mxu0 0.0
        %690 = vmatpush.xpose.msra.mxu0 0.0
        %691 = vmatpush.xpose.msra.mxu0 0.0
        %692 = vmatpush.xpose.msra.mxu0 0.0
        %693 = vmatpush.xpose.msra.mxu0 0.0
        %694 = vmatpush.xpose.msra.mxu0 0.0
        %695 = vmatpush.xpose.msra.mxu0 0.0
        %696 = vmatpush.xpose.msra.mxu0 0.0
        %697 = vmatpush.xpose.msra.mxu0 %v680
        %698 = vmatmul.f32.gmra.mxu0 %v677
        %v699 = vpop.f32.mrf.mxu0
        %v700 = vadd.f32 0.0, %v699
        %701 = vdwg.mxu0
        %v703 = vsel %vm620, %v640, 0
        %v706 = vsel %vm620, %v644, 0
        %708 = vmatpush.xpose.msra.mxu0 0.0
        %709 = vmatpush.xpose.msra.mxu0 0.0
        %710 = vmatpush.xpose.msra.mxu0 0.0
        %711 = vmatpush.xpose.msra.mxu0 0.0
        %712 = vmatpush.xpose.msra.mxu0 0.0
        %713 = vmatpush.xpose.msra.mxu0 0.0
        %714 = vmatpush.xpose.msra.mxu0 0.0
        %715 = vmatpush.xpose.msra.mxu0 0.0
        %716 = vmatpush.xpose.msra.mxu0 0.0
        %717 = vmatpush.xpose.msra.mxu0 0.0
        %718 = vmatpush.xpose.msra.mxu0 0.0
        %719 = vmatpush.xpose.msra.mxu0 0.0
        %720 = vmatpush.xpose.msra.mxu0 0.0
        %721 = vmatpush.xpose.msra.mxu0 0.0
        %722 = vmatpush.xpose.msra.mxu0 0.0
        %723 = vmatpush.xpose.msra.mxu0 %v706
        %724 = vmatmul.f32.gmra.mxu0 %v703
        %v725 = vpop.f32.mrf.mxu0
        %v726 = vadd.f32 0.0, %v725
        %727 = vdwg.mxu0
        %v729 = vsel %vm620, %v641, 0
        %v732 = vsel %vm620, %v645, 0
        %734 = vmatpush.xpose.msra.mxu0 0.0
        %735 = vmatpush.xpose.msra.mxu0 0.0
        %736 = vmatpush.xpose.msra.mxu0 0.0
        %737 = vmatpush.xpose.msra.mxu0 0.0
        %738 = vmatpush.xpose.msra.mxu0 0.0
        %739 = vmatpush.xpose.msra.mxu0 0.0
        %740 = vmatpush.xpose.msra.mxu0 0.0
        %741 = vmatpush.xpose.msra.mxu0 0.0
        %742 = vmatpush.xpose.msra.mxu0 0.0
        %743 = vmatpush.xpose.msra.mxu0 0.0
        %744 = vmatpush.xpose.msra.mxu0 0.0
        %745 = vmatpush.xpose.msra.mxu0 0.0
        %746 = vmatpush.xpose.msra.mxu0 0.0
        %747 = vmatpush.xpose.msra.mxu0 0.0
        %748 = vmatpush.xpose.msra.mxu0 0.0
        %749 = vmatpush.xpose.msra.mxu0 %v732
        %750 = vmatmul.f32.gmra.mxu0 %v729
        %v751 = vpop.f32.mrf.mxu0
        %v752 = vadd.f32 0.0, %v751
        %753 = vdwg.mxu0
        %v754 = vsel %vm620, %v674, -inf
        %755 = vmax.xlane.f32.xlu0 %v754
        %v756 = vpop.xlane.xlu0 %755
        %v757 = vsel %vm620, %v700, -inf
        %758 = vmax.xlane.f32.xlu0 %v757
        %v759 = vpop.xlane.xlu0 %758
        %v760 = vsel %vm620, %v726, -inf
        %761 = vmax.xlane.f32.xlu0 %v760
        %v762 = vpop.xlane.xlu0 %761
        %v763 = vsel %vm620, %v752, -inf
        %764 = vmax.xlane.f32.xlu0 %v763
        %v765 = vpop.xlane.xlu0 %764
        %v766 = vsub.f32 %v674, %v756
        %v767 = vsub.f32 %v700, %v759
        %v768 = vsub.f32 %v726, %v762
        %v769 = vsub.f32 %v752, %v765
        %v770 = vmul.f32 %v766, 1.442695
        %v771 = vpow.pop %v770
        %v772 = vmul.f32 %v767, 1.442695
        %v773 = vpow.pop %v772
        %v774 = vmul.f32 %v768, 1.442695
        %v775 = vpow.pop %v774
        %v776 = vmul.f32 %v769, 1.442695
        %v777 = vpow.pop %v776
        %v778 = vsel %vm620, %v771, 0.0
        %779 = vadd.xlane.f32.xlu0 %v778
        %v780 = vpop.xlane.xlu0 %779
        %v781 = vsel %vm620, %v773, 0.0
        %782 = vadd.xlane.f32.xlu0 %v781
        %v783 = vpop.xlane.xlu0 %782
        %v784 = vsel %vm620, %v775, 0.0
        %785 = vadd.xlane.f32.xlu0 %v784
        %v786 = vpop.xlane.xlu0 %785
        %v787 = vsel %vm620, %v777, 0.0
        %788 = vadd.xlane.f32.xlu0 %v787
        %v789 = vpop.xlane.xlu0 %788
        %v791 = vsel %vm620, %v771, 0
        %793 = vmatpush.msra.mxu0 0.0
        %794 = vmatpush.msra.mxu0 0.0
        %795 = vmatpush.msra.mxu0 0.0
        %796 = vmatpush.msra.mxu0 0.0
        %797 = vmatpush.msra.mxu0 0.0
        %798 = vmatpush.msra.mxu0 0.0
        %799 = vmatpush.msra.mxu0 0.0
        %800 = vmatpush.msra.mxu0 0.0
        %801 = vmatpush.msra.mxu0 0.0
        %802 = vmatpush.msra.mxu0 0.0
        %803 = vmatpush.msra.mxu0 0.0
        %804 = vmatpush.msra.mxu0 0.0
        %805 = vmatpush.msra.mxu0 0.0
        %806 = vmatpush.msra.mxu0 0.0
        %807 = vmatpush.msra.mxu0 0.0
        %808 = vmatpush.msra.mxu0 %v646
        %809 = vmatmul.f32.gmra.mxu0 %v791
        %v810 = vpop.f32.mrf.mxu0
        %v811 = vadd.f32 0.0, %v810
        %812 = vdwg.mxu0
        %v814 = vsel %vm620, %v773, 0
        %816 = vmatpush.msra.mxu0 0.0
        %817 = vmatpush.msra.mxu0 0.0
        %818 = vmatpush.msra.mxu0 0.0
        %819 = vmatpush.msra.mxu0 0.0
        %820 = vmatpush.msra.mxu0 0.0
        %821 = vmatpush.msra.mxu0 0.0
        %822 = vmatpush.msra.mxu0 0.0
        %823 = vmatpush.msra.mxu0 0.0
        %824 = vmatpush.msra.mxu0 0.0
        %825 = vmatpush.msra.mxu0 0.0
        %826 = vmatpush.msra.mxu0 0.0
        %827 = vmatpush.msra.mxu0 0.0
        %828 = vmatpush.msra.mxu0 0.0
        %829 = vmatpush.msra.mxu0 0.0
        %830 = vmatpush.msra.mxu0 0.0
        %831 = vmatpush.msra.mxu0 %v647
        %832 = vmatmul.f32.gmra.mxu0 %v814
        %v833 = vpop.f32.mrf.mxu0
        %v834 = vadd.f32 0.0, %v833
        %835 = vdwg.mxu0
        %v837 = vsel %vm620, %v775, 0
        %839 = vmatpush.msra.mxu0 0.0
        %840 = vmatpush.msra.mxu0 0.0
        %841 = vmatpush.msra.mxu0 0.0
        %842 = vmatpush.msra.mxu0 0.0
        %843 = vmatpush.msra.mxu0 0.0
        %844 = vmatpush.msra.mxu0 0.0
        %845 = vmatpush.msra.mxu0 0.0
        %846 = vmatpush.msra.mxu0 0.0
        %847 = vmatpush.msra.mxu0 0.0
        %848 = vmatpush.msra.mxu0 0.0
        %849 = vmatpush.msra.mxu0 0.0
        %850 = vmatpush.msra.mxu0 0.0
        %851 = vmatpush.msra.mxu0 0.0
        %852 = vmatpush.msra.mxu0 0.0
        %853 = vmatpush.msra.mxu0 0.0
        %854 = vmatpush.msra.mxu0 %v648
        %855 = vmatmul.f32.gmra.mxu0 %v837
        %v856 = vpop.f32.mrf.mxu0
        %v857 = vadd.f32 0.0, %v856
        %858 = vdwg.mxu0
        %v860 = vsel %vm620, %v777, 0
        %862 = vmatpush.msra.mxu0 0.0
        %863 = vmatpush.msra.mxu0 0.0
        %864 = vmatpush.msra.mxu0 0.0
        %865 = vmatpush.msra.mxu0 0.0
        %866 = vmatpush.msra.mxu0 0.0
        %867 = vmatpush.msra.mxu0 0.0
        %868 = vmatpush.msra.mxu0 0.0
        %869 = vmatpush.msra.mxu0 0.0
        %870 = vmatpush.msra.mxu0 0.0
        %871 = vmatpush.msra.mxu0 0.0
        %872 = vmatpush.msra.mxu0 0.0
        %873 = vmatpush.msra.mxu0 0.0
        %874 = vmatpush.msra.mxu0 0.0
        %875 = vmatpush.msra.mxu0 0.0
        %876 = vmatpush.msra.mxu0 0.0
        %877 = vmatpush.msra.mxu0 %v649
        %878 = vmatmul.f32.gmra.mxu0 %v860
        %v879 = vpop.f32.mrf.mxu0
        %v880 = vadd.f32 0.0, %v879
        %881 = vdwg.mxu0
        %v882 = vrcp.pop %v780
        %v883 = vmul.f32 %v780, %v882
        %v884 = vsub.f32 1.0, %v883
        %v885 = vmul.f32 %v882, %v884
        %v886 = vadd.f32 %v882, %v885
        %vm887 = vweird.f32 %v780
        %vm888 = vweird.f32 %v882
        %vm889 = vmor %vm887, %vm888
        %v890 = vsel %vm889, %v882, %v886
        %v891 = vand.u32 2147483647, %v780
        %vm892 = vcmp.eq.f32.partialorder %v891, 8.507059e+37
        %v893 = vand.u32 %v780, 2147483648
        %v894 = vor.u32 1.1754944e-38, %v893
        %v895 = vsel %vm892, %v894, %v890
        %v896 = vrcp.pop %v783
        %v897 = vmul.f32 %v783, %v896
        %v898 = vsub.f32 1.0, %v897
        %v899 = vmul.f32 %v896, %v898
        %v900 = vadd.f32 %v896, %v899
        %vm901 = vweird.f32 %v783
        %vm902 = vweird.f32 %v896
        %vm903 = vmor %vm901, %vm902
        %v904 = vsel %vm903, %v896, %v900
        %v905 = vand.u32 2147483647, %v783
        %vm906 = vcmp.eq.f32.partialorder %v905, 8.507059e+37
        %v907 = vand.u32 %v783, 2147483648
        %v908 = vor.u32 1.1754944e-38, %v907
        %v909 = vsel %vm906, %v908, %v904
        %v910 = vrcp.pop %v786
        %v911 = vmul.f32 %v786, %v910
        %v912 = vsub.f32 1.0, %v911
        %v913 = vmul.f32 %v910, %v912
        %v914 = vadd.f32 %v910, %v913
        %vm915 = vweird.f32 %v786
        %vm916 = vweird.f32 %v910
        %vm917 = vmor %vm915, %vm916
        %v918 = vsel %vm917, %v910, %v914
        %v919 = vand.u32 2147483647, %v786
        %vm920 = vcmp.eq.f32.partialorder %v919, 8.507059e+37
        %v921 = vand.u32 %v786, 2147483648
        %v922 = vor.u32 1.1754944e-38, %v921
        %v923 = vsel %vm920, %v922, %v918
        %v924 = vrcp.pop %v789
        %v925 = vmul.f32 %v789, %v924
        %v926 = vsub.f32 1.0, %v925
        %v927 = vmul.f32 %v924, %v926
        %v928 = vadd.f32 %v924, %v927
        %vm929 = vweird.f32 %v789
        %vm930 = vweird.f32 %v924
        %vm931 = vmor %vm929, %vm930
        %v932 = vsel %vm931, %v924, %v928
        %v933 = vand.u32 2147483647, %v789
        %vm934 = vcmp.eq.f32.partialorder %v933, 8.507059e+37
        %v935 = vand.u32 %v789, 2147483648
        %v936 = vor.u32 1.1754944e-38, %v935
        %v937 = vsel %vm934, %v936, %v932
        %v938 = vmul.f32 %v811, %v895
        %v939 = vmul.f32 %v834, %v909
        %v940 = vmul.f32 %v857, %v923
        %v941 = vmul.f32 %v880, %v937
        %v942 = vld [vmem:[#allocation13] sm:$0xff]
        %v943 = vld [vmem:[#allocation13 + $0x8] sm:$0xff]
        %v944 = vld [vmem:[#allocation13 + $0x10] sm:$0xff]
        %v945 = vld [vmem:[#allocation13 + $0x18] sm:$0xff]
        %v947 = vsel %vm620, %v938, 0
        %949 = vmatpush.msra.mxu0 0.0
        %950 = vmatpush.msra.mxu0 0.0
        %951 = vmatpush.msra.mxu0 0.0
        %952 = vmatpush.msra.mxu0 0.0
        %953 = vmatpush.msra.mxu0 0.0
        %954 = vmatpush.msra.mxu0 0.0
        %955 = vmatpush.msra.mxu0 0.0
        %956 = vmatpush.msra.mxu0 0.0
        %957 = vmatpush.msra.mxu0 0.0
        %958 = vmatpush.msra.mxu0 0.0
        %959 = vmatpush.msra.mxu0 0.0
        %960 = vmatpush.msra.mxu0 0.0
        %961 = vmatpush.msra.mxu0 0.0
        %962 = vmatpush.msra.mxu0 0.0
        %963 = vmatpush.msra.mxu0 0.0
        %964 = vmatpush.msra.mxu0 %v942
        %965 = vmatmul.f32.gmra.mxu0 %v947
        %v966 = vpop.f32.mrf.mxu0
        %v967 = vadd.f32 0.0, %v966
        %968 = vdwg.mxu0
        %v970 = vsel %vm620, %v939, 0
        %972 = vmatpush.msra.mxu0 0.0
        %973 = vmatpush.msra.mxu0 0.0
        %974 = vmatpush.msra.mxu0 0.0
        %975 = vmatpush.msra.mxu0 0.0
        %976 = vmatpush.msra.mxu0 0.0
        %977 = vmatpush.msra.mxu0 0.0
        %978 = vmatpush.msra.mxu0 0.0
        %979 = vmatpush.msra.mxu0 0.0
        %980 = vmatpush.msra.mxu0 0.0
        %981 = vmatpush.msra.mxu0 0.0
        %982 = vmatpush.msra.mxu0 0.0
        %983 = vmatpush.msra.mxu0 0.0
        %984 = vmatpush.msra.mxu0 0.0
        %985 = vmatpush.msra.mxu0 0.0
        %986 = vmatpush.msra.mxu0 0.0
        %987 = vmatpush.msra.mxu0 %v943
        %988 = vmatmul.f32.gmra.mxu0 %v970
        %v989 = vpop.f32.mrf.mxu0
        %v990 = vadd.f32 0.0, %v989
        %991 = vdwg.mxu0
        %v993 = vsel %vm620, %v940, 0
        %995 = vmatpush.msra.mxu0 0.0
        %996 = vmatpush.msra.mxu0 0.0
        %997 = vmatpush.msra.mxu0 0.0
        %998 = vmatpush.msra.mxu0 0.0
        %999 = vmatpush.msra.mxu0 0.0
        %1000 = vmatpush.msra.mxu0 0.0
        %1001 = vmatpush.msra.mxu0 0.0
        %1002 = vmatpush.msra.mxu0 0.0
        %1003 = vmatpush.msra.mxu0 0.0
        %1004 = vmatpush.msra.mxu0 0.0
        %1005 = vmatpush.msra.mxu0 0.0
        %1006 = vmatpush.msra.mxu0 0.0
        %1007 = vmatpush.msra.mxu0 0.0
        %1008 = vmatpush.msra.mxu0 0.0
        %1009 = vmatpush.msra.mxu0 0.0
        %1010 = vmatpush.msra.mxu0 %v944
        %1011 = vmatmul.f32.gmra.mxu0 %v993
        %v1012 = vpop.f32.mrf.mxu0
        %v1013 = vadd.f32 0.0, %v1012
        %1014 = vdwg.mxu0
        %v1016 = vsel %vm620, %v941, 0
        %1018 = vmatpush.msra.mxu0 0.0
        %1019 = vmatpush.msra.mxu0 0.0
        %1020 = vmatpush.msra.mxu0 0.0
        %1021 = vmatpush.msra.mxu0 0.0
        %1022 = vmatpush.msra.mxu0 0.0
        %1023 = vmatpush.msra.mxu0 0.0
        %1024 = vmatpush.msra.mxu0 0.0
        %1025 = vmatpush.msra.mxu0 0.0
        %1026 = vmatpush.msra.mxu0 0.0
        %1027 = vmatpush.msra.mxu0 0.0
        %1028 = vmatpush.msra.mxu0 0.0
        %1029 = vmatpush.msra.mxu0 0.0
        %1030 = vmatpush.msra.mxu0 0.0
        %1031 = vmatpush.msra.mxu0 0.0
        %1032 = vmatpush.msra.mxu0 0.0
        %1033 = vmatpush.msra.mxu0 %v945
        %1034 = vmatmul.f32.gmra.mxu0 %v1016
        %v1035 = vpop.f32.mrf.mxu0
        %v1036 = vadd.f32 0.0, %v1035
        %1037 = vdwg.mxu0
        %v1038 = vsel %vm595, %v967, 0.0
        %v1039 = vsel %vm595, %v990, 0.0
        %v1040 = vadd.f32 %v1038, %v1039
        %v1041 = vsel %vm595, %v1013, 0.0
        %v1042 = vadd.f32 %v1040, %v1041
        %v1043 = vsel %vm595, %v1036, 0.0
        %v1044 = vadd.f32 %v1042, %v1043
        %v1045 = vld [vmem:[%s8] sm:$0x1]
        %v1047 = vperm.slane %v1045, 0
        %v1049 = vadd.f32 %v1044, %v1047
        %v1050 = vadd.f32 %v1049, %v586
        %v1051 = vsel %vm595, %v1050, 0.0
        %1052 = vadd.xlane.f32.xlu0 %v1051
        %v1053 = vpop.xlane.xlu0 %1052
        %v1054 = vrcp.pop 32.0
        %v1055 = vmul.f32 32.0, %v1054
        %v1056 = vsub.f32 1.0, %v1055
        %v1057 = vmul.f32 %v1054, %v1056
        %v1058 = vadd.f32 %v1054, %v1057
        %vm1059 = vweird.f32 %v1054
        %v1060 = vsel %vm1059, %v1054, %v1058
        %v1061 = vmul.f32 %v1053, %v1060
        %v1062 = vsub.f32 %v1050, %v1061
        %v1063 = vmul.f32 %v1062, %v1062
        %v1064 = vsel %vm595, %v1063, 0.0
        %1065 = vadd.xlane.f32.xlu0 %v1064
        %v1066 = vpop.xlane.xlu0 %1065
        %v1067 = vmul.f32 %v1066, %v1060
        %v1068 = vadd.f32 %v1067, 1e-12
        %v1069 = vrsqrt.pop %v1068
        %v1070 = vmul.f32 %v1069, %v1068
        %v1071 = vmul.f32 %v1070, %v1069
        %v1072 = vmul.f32 0.5, %v1071
        %v1073 = vsub.f32 1.5, %v1072
        %v1074 = vmul.f32 %v1069, %v1073
        %vm1075 = vweird.f32 %v1068
        %vm1076 = vweird.f32 %v1069
        %vm1077 = vmor %vm1075, %vm1076
        %v1078 = vsel %vm1077, %v1069, %v1074
        %v1079 = vmul.f32 %v1062, %v1078
        %v1080 = vld [vmem:[%s9] sm:$0x1]
        %v1082 = vperm.slane %v1080, 0
        %v1084 = vmul.f32 %v1079, %v1082
        %v1085 = vld [vmem:[%s10] sm:$0x1]
        %v1087 = vperm.slane %v1085, 0
        %v1089 = vadd.f32 %v1084, %v1087
        %1090 = vst.msk [vmem:[%s483] sm:$0xff] %vm595, %v1089
        %s1091 = sand.u32 %s288, 1
        %s1092 = scalar_lea.sflag [#allocation7], %s1091
        %s1093 = sand.u32 %s288, 1
        %s1094 = smul.addr %s1093, 8
        %s1095 = scalar_lea.vmem [#allocation14], %s1094
        // Predicated region
        $region89: #{tpu_custom_call.1} parent=63 // pred_check
          %p1096 = pneg %p298
        $region90: #{tpu_custom_call.1} parent=63 // pred_check_branch
          %1098 = sbr.rel (%p1096) target = $region92
        $region91: #{tpu_custom_call.1} parent=63 // pred_region
          %1100 = vsyncadd %s1092, 0
          %s1101 = sadd.s32 %s35, %s34
          %s1102 = smul.addr %s1101, 8
          %s1103 = scalar_lea.hbm %s11, %s1102
          %s1105 = sshll.u32 %s1095, 4
          %s1106 = int_to_ptr.vmem [resolvable:$true] %s1105
          %s1107 = sshll.u32 %s1103, 4
          %s1108 = int_to_ptr.hbm [resolvable:$true] %s1107
          %1110 = dma.vmem_to_hbm [thread:$0]  %s1106, 128, %s1108, %s1092
        $region92: #{tpu_custom_call.1} parent=63 // pred_fallthru
          _
      $region64: #{tpu_custom_call.1} parent=5 // pred_fallthru
        _
      %p1111 = scmp.le.s32.totalorder 2, %s25
      // Predicated region
      $region93: #{tpu_custom_call.1} parent=5 // pred_check
        %p1112 = pneg %p1111
      $region94: #{tpu_custom_call.1} parent=5 // pred_check_branch
        %1114 = sbr.rel (%p1112) target = $region96
      $region95: #{tpu_custom_call.1} parent=5 // pred_region
        %s1115 = ssub.s32 %s25, 2
        // Predicated region
        $region97: #{tpu_custom_call.1} parent=95 // pred_check
          %p1116 = pneg %p304
        $region98: #{tpu_custom_call.1} parent=95 // pred_check_branch
          %1118 = sbr.rel (%p1116) target = $region100
        $region99: #{tpu_custom_call.1} parent=95 // pred_region
          %s1119 = sand.u32 %s289, 1
          %s1120 = scalar_lea.sflag [#allocation7], %s1119
          %s1121 = sand.u32 %s289, 1
          %s1122 = smul.addr %s1121, 8
          %s1123 = scalar_lea.vmem [#allocation14], %s1122
          %1125 = dma.done %s1120, 128
        $region100: #{tpu_custom_call.1} parent=95 // pred_fallthru
          _
      $region96: #{tpu_custom_call.1} parent=5 // pred_fallthru
        _
    $region6: #{tpu_custom_call.1} parent=1 // loop_footer
      %s29 = sadd.s32 1, %s25
    $region7: #{tpu_custom_call.1} parent=1 // loop_footer_branch
      %24 = sbr.rel target = $region3
    $region8: #{tpu_custom_call.1} parent=1 // loop_exit
      _
    %1126 = vsyncpa [#allocation6], 1
    %s1127 = scalar_lea.sflag [#allocation6], 1
    %1128 = vsyncpa %s1127, 1
    %1129 = vsyncpa [#allocation9], 1
    %1130 = vsyncpa [#allocation12], 1
    %1131 = vsyncpa [#allocation7], 1
    %s1132 = scalar_lea.sflag [#allocation7], 1
    %1133 = vsyncpa %s1132, 1

// kernel: tpu_custom_call.1
$region0: #{tpu_custom_call.1}
  #allocation0 [shape = 'u32[]', space=smem, size = 0x4, offset = 0x4, fixed_abs, tag = 'smem constant byte address 0x4 - core index']
  #allocation1 [shape = 'u32[72,128]{1,0:T(1,128)}', space=vmem, size = 0x9000, scoped, tag = 'internal scratch']
  #allocation2 [shape = 'f32[4,8,8]{2,1,0:T(8,128)}', space=vmem, size = 0x4000, scoped, tag = 'scratch operand']
  #allocation3 [shape = 'f32[4,8,8]{2,1,0:T(8,128)}', space=vmem, size = 0x4000, scoped, tag = 'scratch operand']
  #allocation4 [shape = 'f32[4,8,8]{2,1,0:T(8,128)}', space=vmem, size = 0x4000, scoped, tag = 'scratch operand']
  %s0 = inlined_call_operand.hbm [shape: f32[2,8,32], index: 0, kind: input, shape index: {}]
  %s1 = inlined_call_operand.hbm [shape: f32[32,32], index: 1, kind: input, shape index: {}]
  %s2 = inlined_call_operand.vmem [shape: f32[1,32], index: 2, kind: input, shape index: {}]
  %s3 = inlined_call_operand.hbm [shape: f32[32,32], index: 3, kind: input, shape index: {}]
  %s4 = inlined_call_operand.vmem [shape: f32[1,32], index: 4, kind: input, shape index: {}]
  %s5 = inlined_call_operand.hbm [shape: f32[32,32], index: 5, kind: input, shape index: {}]
  %s6 = inlined_call_operand.vmem [shape: f32[1,32], index: 6, kind: input, shape index: {}]
  %s7 = inlined_call_operand.hbm [shape: f32[4,8,32], index: 7, kind: input, shape index: {}]
  %s8 = inlined_call_operand.vmem [shape: f32[1,32], index: 8, kind: input, shape index: {}]
  %s9 = inlined_call_operand.vmem [shape: f32[1,32], index: 9, kind: input, shape index: {}]
  %s10 = inlined_call_operand.vmem [shape: f32[1,32], index: 10, kind: input, shape index: {}]
  %s11 = inlined_call_operand.hbm [shape: f32[2,8,32], index: 11, kind: output, shape index: {}]
  %s12 = sld [smem:[#allocation0]]
  $region101: #{tpu_custom_call.1} parent=0
    _
  %s14 = ssub.s32 1, %s12
  %s15 = scalar_select 0, %s14, %s12
  $region1: #{tpu_custom_call.1} parent=0
    #allocation5 [shape = 'u8[8192]{0}', space=vmem, size = 0x2000, scoped, tag = 'input window, operand 0']
    #allocation6 [shape = 's32[2]{0}', space=sflag, size = 0x8, scoped, tag = 'scoped memory for tpu_custom_call.1']
    #allocation7 [shape = 's32[2]{0}', space=sflag, size = 0x8, scoped, tag = 'scoped memory for tpu_custom_call.1']
    #allocation8 [shape = 'u8[16384]{0}', space=vmem, size = 0x4000, scoped, tag = 'input window, operand 1, single buffered']
    #allocation9 [shape = 's32[1]{0}', space=sflag, size = 0x4, scoped, tag = 'scoped memory for tpu_custom_call.1']
    #allocation10 [shape = 'u8[16384]{0}', space=vmem, size = 0x4000, scoped, tag = 'input window, operand 3, single buffered']
    #allocation11 [shape = 'u8[16384]{0}', space=vmem, size = 0x4000, scoped, tag = 'input window, operand 5, single buffered']
    #allocation12 [shape = 's32[1]{0}', space=sflag, size = 0x4, scoped, tag = 'scoped memory for tpu_custom_call.1']
    #allocation13 [shape = 'u8[16384]{0}', space=vmem, size = 0x4000, scoped, tag = 'input window, operand 7, single buffered']
    #allocation14 [shape = 'u8[8192]{0}', space=vmem, size = 0x2000, scoped, tag = 'output window, operand 0']
    %16 = vsyncpa [#allocation6], 0
    %s17 = scalar_lea.sflag [#allocation6], 1
    %18 = vsyncpa %s17, 0
    %19 = vsyncpa [#allocation9], 0
    %20 = vsyncpa [#allocation12], 0
    %21 = vsyncpa [#allocation7], 0
    %s22 = scalar_lea.sflag [#allocation7], 1
    %23 = vsyncpa %s22, 0
    loop: start=0, step=1, limit=4
    $region2: #{tpu_custom_call.1} parent=1 // loop_pre_header
      _
    $region3: #{tpu_custom_call.1} parent=1 // loop_header
      %s25 = sphi 0, %s29
      %p26 = scmp.ge.s32.totalorder %s25, 4
      %s32 = sphi 0, %s44
      %s33 = sphi 0, %s40
      %s34 = sphi 0, %s32
      %s35 = sphi 0, %s33
      %s36 = sphi 0, %s34
      %s37 = sphi 0, %s35
      %s47 = sphi 0, %s49
      %s50 = sphi 0, %s47
      %s51 = sphi 0, %s50
      %s67 = sphi 0, %s51
      %s71 = sphi 0, %s71
      %s73 = sphi 0, %s71
      %s74 = sphi 0, %s73
      %s88 = sphi 0, %s74
      %s92 = sphi 0, %s92
      %s94 = sphi 0, %s92
      %s95 = sphi 0, %s94
      %s109 = sphi 0, %s95
      %s113 = sphi 0, %s113
      %s115 = sphi 0, %s113
      %s116 = sphi 0, %s115
      %s130 = sphi 0, %s116
      %s134 = sphi 0, %s134
      %s136 = sphi 0, %s134
      %s137 = sphi 0, %s136
      %s151 = sphi 0, %s137
      %s155 = sphi 0, %s155
      %s157 = sphi 0, %s155
      %s158 = sphi 0, %s157
      %s172 = sphi 0, %s158
      %s176 = sphi 0, %s176
      %s178 = sphi 0, %s176
      %s179 = sphi 0, %s178
      %s193 = sphi 0, %s179
      %s197 = sphi 0, %s197
      %s199 = sphi 0, %s197
      %s200 = sphi 0, %s199
      %s214 = sphi 0, %s200
      %s218 = sphi 0, %s218
      %s220 = sphi 0, %s218
      %s221 = sphi 0, %s220
      %s235 = sphi 0, %s221
      %s239 = sphi 0, %s239
      %s241 = sphi 0, %s239
      %s242 = sphi 0, %s241
      %s256 = sphi 0, %s242
      %s260 = sphi 0, %s260
      %s262 = sphi 0, %s260
      %s263 = sphi 0, %s262
      %s277 = sphi 0, %s263
      %s285 = sphi 0, %s287
      %s288 = sphi 0, %s285
      %s289 = sphi 0, %s288
      %s305 = sphi 0, %s289
    $region4: #{tpu_custom_call.1} parent=1 // loop_header_branch
      %28 = sbr.rel (%p26) target = $region8
    $region5: #{tpu_custom_call.1} parent=1 // loop_body
      %s30 = ssub.s32 %s25, 1
      %s31 = ssub.s32 %s25, 2
      %s38 = sadd.s32 1, %s33
      %p39 = scmp.ge.s32.totalorder %s38, 1
      %s40 = scalar_select %p39, 0, %s38
      %s41 = sadd.s32 1, %s32
      %s42 = scalar_select %p39, %s41, %s32
      %p43 = scmp.ge.s32.totalorder %s42, 2
      %s44 = scalar_select %p43, 0, %s42
      %s45 = ssub.s32 %s32, %s44
      %p46 = scmp.eq.s32.totalorder %s45, 0
      %s48 = sadd.s32 %s47, 1
      %s49 = scalar_select %p46, %s47, %s48
      %p52 = pneg %p46
      %p53 = scmp.eq.s32.totalorder %s25, 1
      %p54 = por %p52, %p53
      %p55 = scmp.ne.s32.totalorder %s47, %s50
      %p56 = scmp.eq.s32.totalorder %s25, 0
      %p57 = por %p55, %p56
      %p58 = scmp.ne.s32.totalorder %s47, %s50
      %p59 = scmp.eq.s32.totalorder %s30, 1
      %p60 = por %p58, %p59
      %p61 = scmp.ne.s32.totalorder %s50, %s51
      %p62 = scmp.eq.s32.totalorder %s30, 0
      %p63 = por %p61, %p62
      %p64 = scmp.ne.s32.totalorder %s50, %s51
      %p65 = scmp.eq.s32.totalorder %s31, 1
      %p66 = por %p64, %p65
      %p68 = scmp.ne.s32.totalorder %s51, %s67
      %p69 = scmp.eq.s32.totalorder %s31, 0
      %p70 = por %p68, %p69
      %s72 = sadd.s32 %s71, 1
      %p75 = scmp.eq.s32.totalorder %s25, 1
      %p76 = scmp.ne.s32.totalorder %s71, %s73
      %p77 = scmp.eq.s32.totalorder %s25, 0
      %p78 = por %p76, %p77
      %p79 = scmp.ne.s32.totalorder %s71, %s73
      %p80 = scmp.eq.s32.totalorder %s30, 1
      %p81 = por %p79, %p80
      %p82 = scmp.ne.s32.totalorder %s73, %s74
      %p83 = scmp.eq.s32.totalorder %s30, 0
      %p84 = por %p82, %p83
      %p85 = scmp.ne.s32.totalorder %s73, %s74
      %p86 = scmp.eq.s32.totalorder %s31, 1
      %p87 = por %p85, %p86
      %p89 = scmp.ne.s32.totalorder %s74, %s88
      %p90 = scmp.eq.s32.totalorder %s31, 0
      %p91 = por %p89, %p90
      %s93 = sadd.s32 %s92, 1
      %p96 = scmp.eq.s32.totalorder %s25, 1
      %p97 = scmp.ne.s32.totalorder %s92, %s94
      %p98 = scmp.eq.s32.totalorder %s25, 0
      %p99 = por %p97, %p98
      %p100 = scmp.ne.s32.totalorder %s92, %s94
      %p101 = scmp.eq.s32.totalorder %s30, 1
      %p102 = por %p100, %p101
      %p103 = scmp.ne.s32.totalorder %s94, %s95
      %p104 = scmp.eq.s32.totalorder %s30, 0
      %p105 = por %p103, %p104
      %p106 = scmp.ne.s32.totalorder %s94, %s95
      %p107 = scmp.eq.s32.totalorder %s31, 1
      %p108 = por %p106, %p107
      %p110 = scmp.ne.s32.totalorder %s95, %s109
      %p111 = scmp.eq.s32.totalorder %s31, 0
      %p112 = por %p110, %p111
      %s114 = sadd.s32 %s113, 1
      %p117 = scmp.eq.s32.totalorder %s25, 1
      %p118 = scmp.ne.s32.totalorder %s113, %s115
      %p119 = scmp.eq.s32.totalorder %s25, 0
      %p120 = por %p118, %p119
      %p121 = scmp.ne.s32.totalorder %s113, %s115
      %p122 = scmp.eq.s32.totalorder %s30, 1
      %p123 = por %p121, %p122
      %p124 = scmp.ne.s32.totalorder %s115, %s116
      %p125 = scmp.eq.s32.totalorder %s30, 0
      %p126 = por %p124, %p125
      %p127 = scmp.ne.s32.totalorder %s115, %s116
      %p128 = scmp.eq.s32.totalorder %s31, 1
      %p129 = por %p127, %p128
      %p131 = scmp.ne.s32.totalorder %s116, %s130
      %p132 = scmp.eq.s32.totalorder %s31, 0
      %p133 = por %p131, %p132
      %s135 = sadd.s32 %s134, 1
      %p138 = scmp.eq.s32.totalorder %s25, 1
      %p139 = scmp.ne.s32.totalorder %s134, %s136
      %p140 = scmp.eq.s32.totalorder %s25, 0
      %p141 = por %p139, %p140
      %p142 = scmp.ne.s32.totalorder %s134, %s136
      %p143 = scmp.eq.s32.totalorder %s30, 1
      %p144 = por %p142, %p143
      %p145 = scmp.ne.s32.totalorder %s136, %s137
      %p146 = scmp.eq.s32.totalorder %s30, 0
      %p147 = por %p145, %p146
      %p148 = scmp.ne.s32.totalorder %s136, %s137
      %p149 = scmp.eq.s32.totalorder %s31, 1
      %p150 = por %p148, %p149
      %p152 = scmp.ne.s32.totalorder %s137, %s151
      %p153 = scmp.eq.s32.totalorder %s31, 0
      %p154 = por %p152, %p153
      %s156 = sadd.s32 %s155, 1
      %p159 = scmp.eq.s32.totalorder %s25, 1
      %p160 = scmp.ne.s32.totalorder %s155, %s157
      %p161 = scmp.eq.s32.totalorder %s25, 0
      %p162 = por %p160, %p161
      %p163 = scmp.ne.s32.totalorder %s155, %s157
      %p164 = scmp.eq.s32.totalorder %s30, 1
      %p165 = por %p163, %p164
      %p166 = scmp.ne.s32.totalorder %s157, %s158
      %p167 = scmp.eq.s32.totalorder %s30, 0
      %p168 = por %p166, %p167
      %p169 = scmp.ne.s32.totalorder %s157, %s158
      %p170 = scmp.eq.s32.totalorder %s31, 1
      %p171 = por %p169, %p170
      %p173 = scmp.ne.s32.totalorder %s158, %s172
      %p174 = scmp.eq.s32.totalorder %s31, 0
      %p175 = por %p173, %p174
      %s177 = sadd.s32 %s176, 1
      %p180 = scmp.eq.s32.totalorder %s25, 1
      %p181 = scmp.ne.s32.totalorder %s176, %s178
      %p182 = scmp.eq.s32.totalorder %s25, 0
      %p183 = por %p181, %p182
      %p184 = scmp.ne.s32.totalorder %s176, %s178
      %p185 = scmp.eq.s32.totalorder %s30, 1
      %p186 = por %p184, %p185
      %p187 = scmp.ne.s32.totalorder %s178, %s179
      %p188 = scmp.eq.s32.totalorder %s30, 0
      %p189 = por %p187, %p188
      %p190 = scmp.ne.s32.totalorder %s178, %s179
      %p191 = scmp.eq.s32.totalorder %s31, 1
      %p192 = por %p190, %p191
      %p194 = scmp.ne.s32.totalorder %s179, %s193
      %p195 = scmp.eq.s32.totalorder %s31, 0
      %p196 = por %p194, %p195
      %s198 = sadd.s32 %s197, 1
      %p201 = scmp.eq.s32.totalorder %s25, 1
      %p202 = scmp.ne.s32.totalorder %s197, %s199
      %p203 = scmp.eq.s32.totalorder %s25, 0
      %p204 = por %p202, %p203
      %p205 = scmp.ne.s32.totalorder %s197, %s199
      %p206 = scmp.eq.s32.totalorder %s30, 1
      %p207 = por %p205, %p206
      %p208 = scmp.ne.s32.totalorder %s199, %s200
      %p209 = scmp.eq.s32.totalorder %s30, 0
      %p210 = por %p208, %p209
      %p211 = scmp.ne.s32.totalorder %s199, %s200
      %p212 = scmp.eq.s32.totalorder %s31, 1
      %p213 = por %p211, %p212
      %p215 = scmp.ne.s32.totalorder %s200, %s214
      %p216 = scmp.eq.s32.totalorder %s31, 0
      %p217 = por %p215, %p216
      %s219 = sadd.s32 %s218, 1
      %p222 = scmp.eq.s32.totalorder %s25, 1
      %p223 = scmp.ne.s32.totalorder %s218, %s220
      %p224 = scmp.eq.s32.totalorder %s25, 0
      %p225 = por %p223, %p224
      %p226 = scmp.ne.s32.totalorder %s218, %s220
      %p227 = scmp.eq.s32.totalorder %s30, 1
      %p228 = por %p226, %p227
      %p229 = scmp.ne.s32.totalorder %s220, %s221
      %p230 = scmp.eq.s32.totalorder %s30, 0
      %p231 = por %p229, %p230
      %p232 = scmp.ne.s32.totalorder %s220, %s221
      %p233 = scmp.eq.s32.totalorder %s31, 1
      %p234 = por %p232, %p233
      %p236 = scmp.ne.s32.totalorder %s221, %s235
      %p237 = scmp.eq.s32.totalorder %s31, 0
      %p238 = por %p236, %p237
      %s240 = sadd.s32 %s239, 1
      %p243 = scmp.eq.s32.totalorder %s25, 1
      %p244 = scmp.ne.s32.totalorder %s239, %s241
      %p245 = scmp.eq.s32.totalorder %s25, 0
      %p246 = por %p244, %p245
      %p247 = scmp.ne.s32.totalorder %s239, %s241
      %p248 = scmp.eq.s32.totalorder %s30, 1
      %p249 = por %p247, %p248
      %p250 = scmp.ne.s32.totalorder %s241, %s242
      %p251 = scmp.eq.s32.totalorder %s30, 0
      %p252 = por %p250, %p251
      %p253 = scmp.ne.s32.totalorder %s241, %s242
      %p254 = scmp.eq.s32.totalorder %s31, 1
      %p255 = por %p253, %p254
      %p257 = scmp.ne.s32.totalorder %s242, %s256
      %p258 = scmp.eq.s32.totalorder %s31, 0
      %p259 = por %p257, %p258
      %s261 = sadd.s32 %s260, 1
      %p264 = scmp.eq.s32.totalorder %s25, 1
      %p265 = scmp.ne.s32.totalorder %s260, %s262
      %p266 = scmp.eq.s32.totalorder %s25, 0
      %p267 = por %p265, %p266
      %p268 = scmp.ne.s32.totalorder %s260, %s262
      %p269 = scmp.eq.s32.totalorder %s30, 1
      %p270 = por %p268, %p269
      %p271 = scmp.ne.s32.totalorder %s262, %s263
      %p272 = scmp.eq.s32.totalorder %s30, 0
      %p273 = por %p271, %p272
      %p274 = scmp.ne.s32.totalorder %s262, %s263
      %p275 = scmp.eq.s32.totalorder %s31, 1
      %p276 = por %p274, %p275
      %p278 = scmp.ne.s32.totalorder %s263, %s277
      %p279 = scmp.eq.s32.totalorder %s31, 0
      %p280 = por %p278, %p279
      %s281 = ssub.s32 %s32, %s44
      %s282 = ssub.s32 %s33, %s40
      %s283 = sor.u32 %s281, %s282
      %p284 = scmp.eq.s32.totalorder %s283, 0
      %s286 = sadd.s32 %s285, 1
      %s287 = scalar_select %p284, %s285, %s286
      %p290 = pneg %p284
      %p291 = scmp.eq.s32.totalorder %s25, 1
      %p292 = por %p290, %p291
      %p293 = scmp.ne.s32.totalorder %s285, %s288
      %p294 = scmp.eq.s32.totalorder %s25, 0
      %p295 = por %p293, %p294
      %p296 = scmp.ne.s32.totalorder %s285, %s288
      %p297 = scmp.eq.s32.totalorder %s30, 1
      %p298 = por %p296, %p297
      %p299 = scmp.ne.s32.totalorder %s288, %s289
      %p300 = scmp.eq.s32.totalorder %s30, 0
      %p301 = por %p299, %p300
      %p302 = scmp.ne.s32.totalorder %s288, %s289
      %p303 = scmp.eq.s32.totalorder %s31, 1
      %p304 = por %p302, %p303
      %p306 = scmp.ne.s32.totalorder %s289, %s305
      %p307 = scmp.eq.s32.totalorder %s31, 0
      %p308 = por %p306, %p307
      %p309 = scmp.le.s32.totalorder 1, %s25
      %p310 = scmp.lt.s32.totalorder %s25, 3
      %p311 = pnand %p309, %p310
      %p312 = pneg %p311
      // Predicated region
      $region9: #{tpu_custom_call.1} parent=5 // pred_check
        _
      $region10: #{tpu_custom_call.1} parent=5 // pred_check_branch
        %314 = sbr.rel (%p311) target = $region12
      $region11: #{tpu_custom_call.1} parent=5 // pred_region
        %s315 = ssub.s32 %s25, 1
        // Predicated region
        $region13: #{tpu_custom_call.1} parent=11 // pred_check
          %p316 = pneg %p84
        $region14: #{tpu_custom_call.1} parent=11 // pred_check_branch
          %318 = sbr.rel (%p316) target = $region16
        $region15: #{tpu_custom_call.1} parent=11 // pred_region
          %320 = vsyncadd [#allocation9], 0
          %s321 = sshll.u32 %s1, 4
          %s322 = int_to_ptr.hbm [resolvable:$true] %s321
          %s323 = sshll.u32 [#allocation8], 4
          %s324 = int_to_ptr.vmem [resolvable:$true] %s323
          %329 = dma.hbm_to_vmem [thread:$0]  %s322, 512, %s324, [#allocation9], 128, 128, 8
        $region16: #{tpu_custom_call.1} parent=11 // pred_fallthru
          _
        // Predicated region
        $region17: #{tpu_custom_call.1} parent=11 // pred_check
          %p330 = pneg %p105
        $region18: #{tpu_custom_call.1} parent=11 // pred_check_branch
          %332 = sbr.rel (%p330) target = $region20
        $region19: #{tpu_custom_call.1} parent=11 // pred_region
          _
        $region20: #{tpu_custom_call.1} parent=11 // pred_fallthru
          _
        // Predicated region
        $region21: #{tpu_custom_call.1} parent=11 // pred_check
          %p333 = pneg %p126
        $region22: #{tpu_custom_call.1} parent=11 // pred_check_branch
          %335 = sbr.rel (%p333) target = $region24
        $region23: #{tpu_custom_call.1} parent=11 // pred_region
          %337 = vsyncadd [#allocation9], 0
          %s338 = sshll.u32 %s3, 4
          %s339 = int_to_ptr.hbm [resolvable:$true] %s338
          %s340 = sshll.u32 [#allocation10], 4
          %s341 = int_to_ptr.vmem [resolvable:$true] %s340
          %346 = dma.hbm_to_vmem [thread:$0]  %s339, 512, %s341, [#allocation9], 128, 128, 8
        $region24: #{tpu_custom_call.1} parent=11 // pred_fallthru
          _
        // Predicated region
        $region25: #{tpu_custom_call.1} parent=11 // pred_check
          %p347 = pneg %p147
        $region26: #{tpu_custom_call.1} parent=11 // pred_check_branch
          %349 = sbr.rel (%p347) target = $region28
        $region27: #{tpu_custom_call.1} parent=11 // pred_region
          _
        $region28: #{tpu_custom_call.1} parent=11 // pred_fallthru
          _
        // Predicated region
        $region29: #{tpu_custom_call.1} parent=11 // pred_check
          %p350 = pneg %p168
        $region30: #{tpu_custom_call.1} parent=11 // pred_check_branch
          %352 = sbr.rel (%p350) target = $region32
        $region31: #{tpu_custom_call.1} parent=11 // pred_region
          %354 = vsyncadd [#allocation12], 0
          %s355 = sshll.u32 %s5, 4
          %s356 = int_to_ptr.hbm [resolvable:$true] %s355
          %s357 = sshll.u32 [#allocation11], 4
          %s358 = int_to_ptr.vmem [resolvable:$true] %s357
          %363 = dma.hbm_to_vmem [thread:$0]  %s356, 512, %s358, [#allocation12], 128, 128, 8
        $region32: #{tpu_custom_call.1} parent=11 // pred_fallthru
          _
        // Predicated region
        $region33: #{tpu_custom_call.1} parent=11 // pred_check
          %p364 = pneg %p189
        $region34: #{tpu_custom_call.1} parent=11 // pred_check_branch
          %366 = sbr.rel (%p364) target = $region36
        $region35: #{tpu_custom_call.1} parent=11 // pred_region
          _
        $region36: #{tpu_custom_call.1} parent=11 // pred_fallthru
          _
        // Predicated region
        $region37: #{tpu_custom_call.1} parent=11 // pred_check
          %p367 = pneg %p210
        $region38: #{tpu_custom_call.1} parent=11 // pred_check_branch
          %369 = sbr.rel (%p367) target = $region40
        $region39: #{tpu_custom_call.1} parent=11 // pred_region
          %371 = vsyncadd [#allocation12], 0
          %s372 = sshll.u32 %s7, 4
          %s373 = int_to_ptr.hbm [resolvable:$true] %s372
          %s374 = sshll.u32 [#allocation13], 4
          %s375 = int_to_ptr.vmem [resolvable:$true] %s374
          %380 = dma.hbm_to_vmem [thread:$0]  %s373, 512, %s375, [#allocation12], 128, 128, 8
        $region40: #{tpu_custom_call.1} parent=11 // pred_fallthru
          _
        // Predicated region
        $region41: #{tpu_custom_call.1} parent=11 // pred_check
          %p381 = pneg %p231
        $region42: #{tpu_custom_call.1} parent=11 // pred_check_branch
          %383 = sbr.rel (%p381) target = $region44
        $region43: #{tpu_custom_call.1} parent=11 // pred_region
          _
        $region44: #{tpu_custom_call.1} parent=11 // pred_fallthru
          _
        // Predicated region
        $region45: #{tpu_custom_call.1} parent=11 // pred_check
          %p384 = pneg %p252
        $region46: #{tpu_custom_call.1} parent=11 // pred_check_branch
          %386 = sbr.rel (%p384) target = $region48
        $region47: #{tpu_custom_call.1} parent=11 // pred_region
          _
        $region48: #{tpu_custom_call.1} parent=11 // pred_fallthru
          _
        // Predicated region
        $region49: #{tpu_custom_call.1} parent=11 // pred_check
          %p387 = pneg %p273
        $region50: #{tpu_custom_call.1} parent=11 // pred_check_branch
          %389 = sbr.rel (%p387) target = $region52
        $region51: #{tpu_custom_call.1} parent=11 // pred_region
          _
        $region52: #{tpu_custom_call.1} parent=11 // pred_fallthru
          _
      $region12: #{tpu_custom_call.1} parent=5 // pred_fallthru
        _
      %p390 = scmp.lt.s32.totalorder %s25, 2
      // Predicated region
      $region53: #{tpu_custom_call.1} parent=5 // pred_check
        %p391 = pneg %p390
      $region54: #{tpu_custom_call.1} parent=5 // pred_check_branch
        %393 = sbr.rel (%p391) target = $region56
      $region55: #{tpu_custom_call.1} parent=5 // pred_region
        // Predicated region
        $region57: #{tpu_custom_call.1} parent=55 // pred_check
          %p394 = pneg %p57
        $region58: #{tpu_custom_call.1} parent=55 // pred_check_branch
          %396 = sbr.rel (%p394) target = $region60
        $region59: #{tpu_custom_call.1} parent=55 // pred_region
          %s397 = sand.u32 %s47, 1
          %s398 = scalar_lea.sflag [#allocation6], %s397
          %s399 = sand.u32 %s47, 1
          %s400 = smul.addr %s399, 8
          %s401 = scalar_lea.vmem [#allocation5], %s400
          %403 = vsyncadd %s398, 0
          %s404 = smul.addr %s32, 8
          %s405 = scalar_lea.hbm %s0, %s404
          %s407 = sshll.u32 %s405, 4
          %s408 = int_to_ptr.hbm [resolvable:$true] %s407
          %s409 = sshll.u32 %s401, 4
          %s410 = int_to_ptr.vmem [resolvable:$true] %s409
          %412 = dma.hbm_to_vmem [thread:$0]  %s408, 128, %s410, %s398
        $region60: #{tpu_custom_call.1} parent=55 // pred_fallthru
          _
      $region56: #{tpu_custom_call.1} parent=5 // pred_fallthru
        _
      %p413 = scmp.le.s32.totalorder 1, %s25
      %p414 = scmp.lt.s32.totalorder %s25, 3
      %p415 = pnand %p413, %p414
      %p416 = pneg %p415
      // Predicated region
      $region61: #{tpu_custom_call.1} parent=5 // pred_check
        _
      $region62: #{tpu_custom_call.1} parent=5 // pred_check_branch
        %418 = sbr.rel (%p415) target = $region64
      $region63: #{tpu_custom_call.1} parent=5 // pred_region
        %s419 = ssub.s32 %s25, 1
        %s420 = sand.u32 %s50, 1
        %s421 = scalar_lea.sflag [#allocation6], %s420
        %s422 = sand.u32 %s50, 1
        %s423 = smul.addr %s422, 8
        %s424 = scalar_lea.vmem [#allocation5], %s423
        // Predicated region
        $region65: #{tpu_custom_call.1} parent=63 // pred_check
          %p425 = pneg %p63
        $region66: #{tpu_custom_call.1} parent=63 // pred_check_branch
          %427 = sbr.rel (%p425) target = $region68
        $region67: #{tpu_custom_call.1} parent=63 // pred_region
          %429 = dma.done %s421, 128
        $region68: #{tpu_custom_call.1} parent=63 // pred_fallthru
          _
        // Predicated region
        $region69: #{tpu_custom_call.1} parent=63 // pred_check
          %p430 = pneg %p84
        $region70: #{tpu_custom_call.1} parent=63 // pred_check_branch
          %432 = sbr.rel (%p430) target = $region72
        $region71: #{tpu_custom_call.1} parent=63 // pred_region
          %434 = dma.done [#allocation9], 512
        $region72: #{tpu_custom_call.1} parent=63 // pred_fallthru
          _
        // Predicated region
        $region73: #{tpu_custom_call.1} parent=63 // pred_check
          %p435 = pneg %p126
        $region74: #{tpu_custom_call.1} parent=63 // pred_check_branch
          %437 = sbr.rel (%p435) target = $region76
        $region75: #{tpu_custom_call.1} parent=63 // pred_region
          %439 = dma.done [#allocation9], 512
        $region76: #{tpu_custom_call.1} parent=63 // pred_fallthru
          _
        // Predicated region
        $region77: #{tpu_custom_call.1} parent=63 // pred_check
          %p440 = pneg %p168
        $region78: #{tpu_custom_call.1} parent=63 // pred_check_branch
          %442 = sbr.rel (%p440) target = $region80
        $region79: #{tpu_custom_call.1} parent=63 // pred_region
          %444 = dma.done [#allocation12], 512
        $region80: #{tpu_custom_call.1} parent=63 // pred_fallthru
          _
        // Predicated region
        $region81: #{tpu_custom_call.1} parent=63 // pred_check
          %p445 = pneg %p210
        $region82: #{tpu_custom_call.1} parent=63 // pred_check_branch
          %447 = sbr.rel (%p445) target = $region84
        $region83: #{tpu_custom_call.1} parent=63 // pred_region
          %449 = dma.done [#allocation12], 512
        $region84: #{tpu_custom_call.1} parent=63 // pred_fallthru
          _
        %s450 = sand.u32 %s50, 1
        %s451 = scalar_lea.sflag [#allocation6], %s450
        %s452 = sand.u32 %s50, 1
        %s453 = smul.addr %s452, 8
        %s454 = scalar_lea.vmem [#allocation5], %s453
        %p455 = pneg %p63
        %p456 = pneg %p60
        %p457 = pneg %p84
        %p458 = pneg %p81
        %p459 = pneg %p105
        %p460 = pneg %p102
        %p461 = pneg %p126
        %p462 = pneg %p123
        %p463 = pneg %p147
        %p464 = pneg %p144
        %p465 = pneg %p168
        %p466 = pneg %p165
        %p467 = pneg %p189
        %p468 = pneg %p186
        %p469 = pneg %p210
        %p470 = pneg %p207
        %p471 = pneg %p231
        %p472 = pneg %p228
        %p473 = pneg %p252
        %p474 = pneg %p249
        %p475 = pneg %p273
        %p476 = pneg %p270
        %p477 = pneg %p301
        %p478 = pneg %p298
        %s479 = sand.u32 %s288, 1
        %s480 = scalar_lea.sflag [#allocation7], %s479
        %s481 = sand.u32 %s288, 1
        %s482 = smul.addr %s481, 8
        %s483 = scalar_lea.vmem [#allocation14], %s482
        %p484 = scmp.eq.s32.totalorder %s35, 0
        // Predicated region
        $region85: #{tpu_custom_call.1} parent=63 // pred_check
          %p485 = pneg %p484
        $region86: #{tpu_custom_call.1} parent=63 // pred_check_branch
          %487 = sbr.rel (%p485) target = $region88
        $region87: #{tpu_custom_call.1} parent=63 // pred_region
          %v488 = vld [vmem:[%s424] sm:$0xff]
          %v489 = vld [vmem:[#allocation10] sm:$0xff]
          %v490 = vld [vmem:[#allocation10 + $0x8] sm:$0xff]
          %v491 = vld [vmem:[#allocation10 + $0x10] sm:$0xff]
          %v492 = vld [vmem:[#allocation10 + $0x18] sm:$0xff]
          %v493 = vld [vmem:[%s4] sm:$0x1]
          %v495 = vperm.slane %v493, 0
          %vm497 = vcmask 261120
          %v499 = vsel %vm497, %v488, 0
          %501 = vmatpush.msra.mxu0 0.0
          %502 = vmatpush.msra.mxu0 0.0
          %503 = vmatpush.msra.mxu0 0.0
          %504 = vmatpush.msra.mxu0 0.0
          %505 = vmatpush.msra.mxu0 0.0
          %506 = vmatpush.msra.mxu0 0.0
          %507 = vmatpush.msra.mxu0 0.0
          %508 = vmatpush.msra.mxu0 0.0
          %509 = vmatpush.msra.mxu0 0.0
          %510 = vmatpush.msra.mxu0 0.0
          %511 = vmatpush.msra.mxu0 0.0
          %512 = vmatpush.msra.mxu0 0.0
          %513 = vmatpush.msra.mxu0 %v492
          %514 = vmatpush.msra.mxu0 %v491
          %515 = vmatpush.msra.mxu0 %v490
          %516 = vmatpush.msra.mxu0 %v489
          %517 = vmatmul.f32.gmra.mxu0 %v499
          %v518 = vpop.f32.mrf.mxu0
          %v519 = vadd.f32 %v495, %v518
          %520 = vdwg.mxu0
          %v521 = vld [vmem:[#allocation11] sm:$0xff]
          %v522 = vld [vmem:[#allocation11 + $0x8] sm:$0xff]
          %v523 = vld [vmem:[#allocation11 + $0x10] sm:$0xff]
          %v524 = vld [vmem:[#allocation11 + $0x18] sm:$0xff]
          %v525 = vld [vmem:[%s6] sm:$0x1]
          %v527 = vperm.slane %v525, 0
          %529 = vmatpush.msra.mxu0 0.0
          %530 = vmatpush.msra.mxu0 0.0
          %531 = vmatpush.msra.mxu0 0.0
          %532 = vmatpush.msra.mxu0 0.0
          %533 = vmatpush.msra.mxu0 0.0
          %534 = vmatpush.msra.mxu0 0.0
          %535 = vmatpush.msra.mxu0 0.0
          %536 = vmatpush.msra.mxu0 0.0
          %537 = vmatpush.msra.mxu0 0.0
          %538 = vmatpush.msra.mxu0 0.0
          %539 = vmatpush.msra.mxu0 0.0
          %540 = vmatpush.msra.mxu0 0.0
          %541 = vmatpush.msra.mxu0 %v524
          %542 = vmatpush.msra.mxu0 %v523
          %543 = vmatpush.msra.mxu0 %v522
          %544 = vmatpush.msra.mxu0 %v521
          %545 = vmatmul.f32.gmra.mxu0 %v499
          %v546 = vpop.f32.mrf.mxu0
          %v547 = vadd.f32 %v527, %v546
          %548 = vdwg.mxu0
          %vm549 = vcmask 64512
          %550 = vst.msk [vmem:[#allocation2] sm:$0xff] %vm549, %v519
          %551 = vst.msk [vmem:[#allocation3] sm:$0xff] %vm549, %v547
          %553 = vrot.lane.b32.xlu0 %v519, 120
          %v554 = vpop.permute.xlu0 %553
          %s556 = scalar_lea.vmem [#allocation2], 8
          %557 = vst.msk [vmem:[%s556] sm:$0xff] %vm549, %v554
          %559 = vrot.lane.b32.xlu0 %v547, 120
          %v560 = vpop.permute.xlu0 %559
          %s562 = scalar_lea.vmem [#allocation3], 8
          %563 = vst.msk [vmem:[%s562] sm:$0xff] %vm549, %v560
          %564 = vrot.lane.b32.xlu0 %v519, 112
          %v565 = vpop.permute.xlu0 %564
          %s567 = scalar_lea.vmem [#allocation2], 16
          %568 = vst.msk [vmem:[%s567] sm:$0xff] %vm549, %v565
          %569 = vrot.lane.b32.xlu0 %v547, 112
          %v570 = vpop.permute.xlu0 %569
          %s572 = scalar_lea.vmem [#allocation3], 16
          %573 = vst.msk [vmem:[%s572] sm:$0xff] %vm549, %v570
          %574 = vrot.lane.b32.xlu0 %v519, 104
          %v575 = vpop.permute.xlu0 %574
          %s577 = scalar_lea.vmem [#allocation2], 24
          %578 = vst.msk [vmem:[%s577] sm:$0xff] %vm549, %v575
          %579 = vrot.lane.b32.xlu0 %v547, 104
          %v580 = vpop.permute.xlu0 %579
          %s582 = scalar_lea.vmem [#allocation3], 24
          %583 = vst.msk [vmem:[%s582] sm:$0xff] %vm549, %v580
        $region88: #{tpu_custom_call.1} parent=63 // pred_fallthru
          _
        %s584 = smul.u32 %s35, 8
        %s585 = scalar_lea.vmem %s424, %s584 [#allocation5]
        %v586 = vld [vmem:[%s585] sm:$0xff]
        %v587 = vld [vmem:[#allocation8] sm:$0xff]
        %v588 = vld [vmem:[#allocation8 + $0x8] sm:$0xff]
        %v589 = vld [vmem:[#allocation8 + $0x10] sm:$0xff]
        %v590 = vld [vmem:[#allocation8 + $0x18] sm:$0xff]
        %v591 = vld [vmem:[%s2] sm:$0x1]
        %v593 = vperm.slane %v591, 0
        %vm595 = vcmask 261120
        %v597 = vsel %vm595, %v586, 0
        %599 = vmatpush.msra.mxu0 0.0
        %600 = vmatpush.msra.mxu0 0.0
        %601 = vmatpush.msra.mxu0 0.0
        %602 = vmatpush.msra.mxu0 0.0
        %603 = vmatpush.msra.mxu0 0.0
        %604 = vmatpush.msra.mxu0 0.0
        %605 = vmatpush.msra.mxu0 0.0
        %606 = vmatpush.msra.mxu0 0.0
        %607 = vmatpush.msra.mxu0 0.0
        %608 = vmatpush.msra.mxu0 0.0
        %609 = vmatpush.msra.mxu0 0.0
        %610 = vmatpush.msra.mxu0 0.0
        %611 = vmatpush.msra.mxu0 %v590
        %612 = vmatpush.msra.mxu0 %v589
        %613 = vmatpush.msra.mxu0 %v588
        %614 = vmatpush.msra.mxu0 %v587
        %615 = vmatmul.f32.gmra.mxu0 %v597
        %v616 = vpop.f32.mrf.mxu0
        %v617 = vadd.f32 %v593, %v616
        %618 = vdwg.mxu0
        %v619 = vmul.f32 %v617, 0.35355338
        %vm620 = vcmask 64512
        %621 = vst.msk [vmem:[#allocation4] sm:$0xff] %vm620, %v619
        %623 = vrot.lane.b32.xlu0 %v619, 120
        %v624 = vpop.permute.xlu0 %623
        %s626 = scalar_lea.vmem [#allocation4], 8
        %627 = vst.msk [vmem:[%s626] sm:$0xff] %vm620, %v624
        %628 = vrot.lane.b32.xlu0 %v619, 112
        %v629 = vpop.permute.xlu0 %628
        %s631 = scalar_lea.vmem [#allocation4], 16
        %632 = vst.msk [vmem:[%s631] sm:$0xff] %vm620, %v629
        %633 = vrot.lane.b32.xlu0 %v619, 104
        %v634 = vpop.permute.xlu0 %633
        %s636 = scalar_lea.vmem [#allocation4], 24
        %637 = vst.msk [vmem:[%s636] sm:$0xff] %vm620, %v634
        %v638 = vld [vmem:[#allocation4] sm:$0xff]
        %v639 = vld [vmem:[#allocation4 + $0x8] sm:$0xff]
        %v640 = vld [vmem:[#allocation4 + $0x10] sm:$0xff]
        %v641 = vld [vmem:[#allocation4 + $0x18] sm:$0xff]
        %v642 = vld [vmem:[#allocation2] sm:$0xff]
        %v643 = vld [vmem:[#allocation2 + $0x8] sm:$0xff]
        %v644 = vld [vmem:[#allocation2 + $0x10] sm:$0xff]
        %v645 = vld [vmem:[#allocation2 + $0x18] sm:$0xff]
        %v646 = vld [vmem:[#allocation3] sm:$0xff]
        %v647 = vld [vmem:[#allocation3 + $0x8] sm:$0xff]
        %v648 = vld [vmem:[#allocation3 + $0x10] sm:$0xff]
        %v649 = vld [vmem:[#allocation3 + $0x18] sm:$0xff]
        %v651 = vsel %vm620, %v638, 0
        %v654 = vsel %vm620, %v642, 0
        %656 = vmatpush.xpose.msra.mxu0 0.0
        %657 = vmatpush.xpose.msra.mxu0 0.0
        %658 = vmatpush.xpose.msra.mxu0 0.0
        %659 = vmatpush.xpose.msra.mxu0 0.0
        %660 = vmatpush.xpose.msra.mxu0 0.0
        %661 = vmatpush.xpose.msra.mxu0 0.0
        %662 = vmatpush.xpose.msra.mxu0 0.0
        %663 = vmatpush.xpose.msra.mxu0 0.0
        %664 = vmatpush.xpose.msra.mxu0 0.0
        %665 = vmatpush.xpose.msra.mxu0 0.0
        %666 = vmatpush.xpose.msra.mxu0 0.0
        %667 = vmatpush.xpose.msra.mxu0 0.0
        %668 = vmatpush.xpose.msra.mxu0 0.0
        %669 = vmatpush.xpose.msra.mxu0 0.0
        %670 = vmatpush.xpose.msra.mxu0 0.0
        %671 = vmatpush.xpose.msra.mxu0 %v654
        %672 = vmatmul.f32.gmra.mxu0 %v651
        %v673 = vpop.f32.mrf.mxu0
        %v674 = vadd.f32 0.0, %v673
        %675 = vdwg.mxu0
        %v677 = vsel %vm620, %v639, 0
        %v680 = vsel %vm620, %v643, 0
        %682 = vmatpush.xpose.msra.mxu0 0.0
        %683 = vmatpush.xpose.msra.mxu0 0.0
        %684 = vmatpush.xpose.msra.mxu0 0.0
        %685 = vmatpush.xpose.msra.mxu0 0.0
        %686 = vmatpush.xpose.msra.mxu0 0.0
        %687 = vmatpush.xpose.msra.mxu0 0.0
        %688 = vmatpush.xpose.msra.mxu0 0.0
        %689 = vmatpush.xpose.msra.mxu0 0.0
        %690 = vmatpush.xpose.msra.mxu0 0.0
        %691 = vmatpush.xpose.msra.mxu0 0.0
        %692 = vmatpush.xpose.msra.mxu0 0.0
        %693 = vmatpush.xpose.msra.mxu0 0.0
        %694 = vmatpush.xpose.msra.mxu0 0.0
        %695 = vmatpush.xpose.msra.mxu0 0.0
        %696 = vmatpush.xpose.msra.mxu0 0.0
        %697 = vmatpush.xpose.msra.mxu0 %v680
        %698 = vmatmul.f32.gmra.mxu0 %v677
        %v699 = vpop.f32.mrf.mxu0
        %v700 = vadd.f32 0.0, %v699
        %701 = vdwg.mxu0
        %v703 = vsel %vm620, %v640, 0
        %v706 = vsel %vm620, %v644, 0
        %708 = vmatpush.xpose.msra.mxu0 0.0
        %709 = vmatpush.xpose.msra.mxu0 0.0
        %710 = vmatpush.xpose.msra.mxu0 0.0
        %711 = vmatpush.xpose.msra.mxu0 0.0
        %712 = vmatpush.xpose.msra.mxu0 0.0
        %713 = vmatpush.xpose.msra.mxu0 0.0
        %714 = vmatpush.xpose.msra.mxu0 0.0
        %715 = vmatpush.xpose.msra.mxu0 0.0
        %716 = vmatpush.xpose.msra.mxu0 0.0
        %717 = vmatpush.xpose.msra.mxu0 0.0
        %718 = vmatpush.xpose.msra.mxu0 0.0
        %719 = vmatpush.xpose.msra.mxu0 0.0
        %720 = vmatpush.xpose.msra.mxu0 0.0
        %721 = vmatpush.xpose.msra.mxu0 0.0
        %722 = vmatpush.xpose.msra.mxu0 0.0
        %723 = vmatpush.xpose.msra.mxu0 %v706
        %724 = vmatmul.f32.gmra.mxu0 %v703
        %v725 = vpop.f32.mrf.mxu0
        %v726 = vadd.f32 0.0, %v725
        %727 = vdwg.mxu0
        %v729 = vsel %vm620, %v641, 0
        %v732 = vsel %vm620, %v645, 0
        %734 = vmatpush.xpose.msra.mxu0 0.0
        %735 = vmatpush.xpose.msra.mxu0 0.0
        %736 = vmatpush.xpose.msra.mxu0 0.0
        %737 = vmatpush.xpose.msra.mxu0 0.0
        %738 = vmatpush.xpose.msra.mxu0 0.0
        %739 = vmatpush.xpose.msra.mxu0 0.0
        %740 = vmatpush.xpose.msra.mxu0 0.0
        %741 = vmatpush.xpose.msra.mxu0 0.0
        %742 = vmatpush.xpose.msra.mxu0 0.0
        %743 = vmatpush.xpose.msra.mxu0 0.0
        %744 = vmatpush.xpose.msra.mxu0 0.0
        %745 = vmatpush.xpose.msra.mxu0 0.0
        %746 = vmatpush.xpose.msra.mxu0 0.0
        %747 = vmatpush.xpose.msra.mxu0 0.0
        %748 = vmatpush.xpose.msra.mxu0 0.0
        %749 = vmatpush.xpose.msra.mxu0 %v732
        %750 = vmatmul.f32.gmra.mxu0 %v729
        %v751 = vpop.f32.mrf.mxu0
        %v752 = vadd.f32 0.0, %v751
        %753 = vdwg.mxu0
        %v754 = vsel %vm620, %v674, -inf
        %755 = vmax.xlane.f32.xlu0 %v754
        %v756 = vpop.xlane.xlu0 %755
        %v757 = vsel %vm620, %v700, -inf
        %758 = vmax.xlane.f32.xlu0 %v757
        %v759 = vpop.xlane.xlu0 %758
        %v760 = vsel %vm620, %v726, -inf
        %761 = vmax.xlane.f32.xlu0 %v760
        %v762 = vpop.xlane.xlu0 %761
        %v763 = vsel %vm620, %v752, -inf
        %764 = vmax.xlane.f32.xlu0 %v763
        %v765 = vpop.xlane.xlu0 %764
        %v766 = vsub.f32 %v674, %v756
        %v767 = vsub.f32 %v700, %v759
        %v768 = vsub.f32 %v726, %v762
        %v769 = vsub.f32 %v752, %v765
        %v770 = vmul.f32 %v766, 1.442695
        %v771 = vpow.pop %v770
        %v772 = vmul.f32 %v767, 1.442695
        %v773 = vpow.pop %v772
        %v774 = vmul.f32 %v768, 1.442695
        %v775 = vpow.pop %v774
        %v776 = vmul.f32 %v769, 1.442695
        %v777 = vpow.pop %v776
        %v778 = vsel %vm620, %v771, 0.0
        %779 = vadd.xlane.f32.xlu0 %v778
        %v780 = vpop.xlane.xlu0 %779
        %v781 = vsel %vm620, %v773, 0.0
        %782 = vadd.xlane.f32.xlu0 %v781
        %v783 = vpop.xlane.xlu0 %782
        %v784 = vsel %vm620, %v775, 0.0
        %785 = vadd.xlane.f32.xlu0 %v784
        %v786 = vpop.xlane.xlu0 %785
        %v787 = vsel %vm620, %v777, 0.0
        %788 = vadd.xlane.f32.xlu0 %v787
        %v789 = vpop.xlane.xlu0 %788
        %v791 = vsel %vm620, %v771, 0
        %793 = vmatpush.msra.mxu0 0.0
        %794 = vmatpush.msra.mxu0 0.0
        %795 = vmatpush.msra.mxu0 0.0
        %796 = vmatpush.msra.mxu0 0.0
        %797 = vmatpush.msra.mxu0 0.0
        %798 = vmatpush.msra.mxu0 0.0
        %799 = vmatpush.msra.mxu0 0.0
        %800 = vmatpush.msra.mxu0 0.0
        %801 = vmatpush.msra.mxu0 0.0
        %802 = vmatpush.msra.mxu0 0.0
        %803 = vmatpush.msra.mxu0 0.0
        %804 = vmatpush.msra.mxu0 0.0
        %805 = vmatpush.msra.mxu0 0.0
        %806 = vmatpush.msra.mxu0 0.0
        %807 = vmatpush.msra.mxu0 0.0
        %808 = vmatpush.msra.mxu0 %v646
        %809 = vmatmul.f32.gmra.mxu0 %v791
        %v810 = vpop.f32.mrf.mxu0
        %v811 = vadd.f32 0.0, %v810
        %812 = vdwg.mxu0
        %v814 = vsel %vm620, %v773, 0
        %816 = vmatpush.msra.mxu0 0.0
        %817 = vmatpush.msra.mxu0 0.0
        %818 = vmatpush.msra.mxu0 0.0
        %819 = vmatpush.msra.mxu0 0.0
        %820 = vmatpush.msra.mxu0 0.0
        %821 = vmatpush.msra.mxu0 0.0
        %822 = vmatpush.msra.mxu0 0.0
        %823 = vmatpush.msra.mxu0 0.0
        %824 = vmatpush.msra.mxu0 0.0
        %825 = vmatpush.msra.mxu0 0.0
        %826 = vmatpush.msra.mxu0 0.0
        %827 = vmatpush.msra.mxu0 0.0
        %828 = vmatpush.msra.mxu0 0.0
        %829 = vmatpush.msra.mxu0 0.0
        %830 = vmatpush.msra.mxu0 0.0
        %831 = vmatpush.msra.mxu0 %v647
        %832 = vmatmul.f32.gmra.mxu0 %v814
        %v833 = vpop.f32.mrf.mxu0
        %v834 = vadd.f32 0.0, %v833
        %835 = vdwg.mxu0
        %v837 = vsel %vm620, %v775, 0
        %839 = vmatpush.msra.mxu0 0.0
        %840 = vmatpush.msra.mxu0 0.0
        %841 = vmatpush.msra.mxu0 0.0
        %842 = vmatpush.msra.mxu0 0.0
        %843 = vmatpush.msra.mxu0 0.0
        %844 = vmatpush.msra.mxu0 0.0
        %845 = vmatpush.msra.mxu0 0.0
        %846 = vmatpush.msra.mxu0 0.0
        %847 = vmatpush.msra.mxu0 0.0
        %848 = vmatpush.msra.mxu0 0.0
        %849 = vmatpush.msra.mxu0 0.0
        %850 = vmatpush.msra.mxu0 0.0
        %851 = vmatpush.msra.mxu0 0.0
        %852 = vmatpush.msra.mxu0 0.0
        %853 = vmatpush.msra.mxu0 0.0
        %854 = vmatpush.msra.mxu0 %v648
        %855 = vmatmul.f32.gmra.mxu0 %v837
        %v856 = vpop.f32.mrf.mxu0
        %v857 = vadd.f32 0.0, %v856
        %858 = vdwg.mxu0
        %v860 = vsel %vm620, %v777, 0
        %862 = vmatpush.msra.mxu0 0.0
        %863 = vmatpush.msra.mxu0 0.0
        %864 = vmatpush.msra.mxu0 0.0
        %865 = vmatpush.msra.mxu0 0.0
        %866 = vmatpush.msra.mxu0 0.0
        %867 = vmatpush.msra.mxu0 0.0
        %868 = vmatpush.msra.mxu0 0.0
        %869 = vmatpush.msra.mxu0 0.0
        %870 = vmatpush.msra.mxu0 0.0
        %871 = vmatpush.msra.mxu0 0.0
        %872 = vmatpush.msra.mxu0 0.0
        %873 = vmatpush.msra.mxu0 0.0
        %874 = vmatpush.msra.mxu0 0.0
        %875 = vmatpush.msra.mxu0 0.0
        %876 = vmatpush.msra.mxu0 0.0
        %877 = vmatpush.msra.mxu0 %v649
        %878 = vmatmul.f32.gmra.mxu0 %v860
        %v879 = vpop.f32.mrf.mxu0
        %v880 = vadd.f32 0.0, %v879
        %881 = vdwg.mxu0
        %v882 = vrcp.pop %v780
        %v883 = vmul.f32 %v780, %v882
        %v884 = vsub.f32 1.0, %v883
        %v885 = vmul.f32 %v882, %v884
        %v886 = vadd.f32 %v882, %v885
        %vm887 = vweird.f32 %v780
        %vm888 = vweird.f32 %v882
        %vm889 = vmor %vm887, %vm888
        %v890 = vsel %vm889, %v882, %v886
        %v891 = vand.u32 2147483647, %v780
        %vm892 = vcmp.eq.f32.partialorder %v891, 8.507059e+37
        %v893 = vand.u32 %v780, 2147483648
        %v894 = vor.u32 1.1754944e-38, %v893
        %v895 = vsel %vm892, %v894, %v890
        %v896 = vrcp.pop %v783
        %v897 = vmul.f32 %v783, %v896
        %v898 = vsub.f32 1.0, %v897
        %v899 = vmul.f32 %v896, %v898
        %v900 = vadd.f32 %v896, %v899
        %vm901 = vweird.f32 %v783
        %vm902 = vweird.f32 %v896
        %vm903 = vmor %vm901, %vm902
        %v904 = vsel %vm903, %v896, %v900
        %v905 = vand.u32 2147483647, %v783
        %vm906 = vcmp.eq.f32.partialorder %v905, 8.507059e+37
        %v907 = vand.u32 %v783, 2147483648
        %v908 = vor.u32 1.1754944e-38, %v907
        %v909 = vsel %vm906, %v908, %v904
        %v910 = vrcp.pop %v786
        %v911 = vmul.f32 %v786, %v910
        %v912 = vsub.f32 1.0, %v911
        %v913 = vmul.f32 %v910, %v912
        %v914 = vadd.f32 %v910, %v913
        %vm915 = vweird.f32 %v786
        %vm916 = vweird.f32 %v910
        %vm917 = vmor %vm915, %vm916
        %v918 = vsel %vm917, %v910, %v914
        %v919 = vand.u32 2147483647, %v786
        %vm920 = vcmp.eq.f32.partialorder %v919, 8.507059e+37
        %v921 = vand.u32 %v786, 2147483648
        %v922 = vor.u32 1.1754944e-38, %v921
        %v923 = vsel %vm920, %v922, %v918
        %v924 = vrcp.pop %v789
        %v925 = vmul.f32 %v789, %v924
        %v926 = vsub.f32 1.0, %v925
        %v927 = vmul.f32 %v924, %v926
        %v928 = vadd.f32 %v924, %v927
        %vm929 = vweird.f32 %v789
        %vm930 = vweird.f32 %v924
        %vm931 = vmor %vm929, %vm930
        %v932 = vsel %vm931, %v924, %v928
        %v933 = vand.u32 2147483647, %v789
        %vm934 = vcmp.eq.f32.partialorder %v933, 8.507059e+37
        %v935 = vand.u32 %v789, 2147483648
        %v936 = vor.u32 1.1754944e-38, %v935
        %v937 = vsel %vm934, %v936, %v932
        %v938 = vmul.f32 %v811, %v895
        %v939 = vmul.f32 %v834, %v909
        %v940 = vmul.f32 %v857, %v923
        %v941 = vmul.f32 %v880, %v937
        %v942 = vld [vmem:[#allocation13] sm:$0xff]
        %v943 = vld [vmem:[#allocation13 + $0x8] sm:$0xff]
        %v944 = vld [vmem:[#allocation13 + $0x10] sm:$0xff]
        %v945 = vld [vmem:[#allocation13 + $0x18] sm:$0xff]
        %v947 = vsel %vm620, %v938, 0
        %949 = vmatpush.msra.mxu0 0.0
        %950 = vmatpush.msra.mxu0 0.0
        %951 = vmatpush.msra.mxu0 0.0
        %952 = vmatpush.msra.mxu0 0.0
        %953 = vmatpush.msra.mxu0 0.0
        %954 = vmatpush.msra.mxu0 0.0
        %955 = vmatpush.msra.mxu0 0.0
        %956 = vmatpush.msra.mxu0 0.0
        %957 = vmatpush.msra.mxu0 0.0
        %958 = vmatpush.msra.mxu0 0.0
        %959 = vmatpush.msra.mxu0 0.0
        %960 = vmatpush.msra.mxu0 0.0
        %961 = vmatpush.msra.mxu0 0.0
        %962 = vmatpush.msra.mxu0 0.0
        %963 = vmatpush.msra.mxu0 0.0
        %964 = vmatpush.msra.mxu0 %v942
        %965 = vmatmul.f32.gmra.mxu0 %v947
        %v966 = vpop.f32.mrf.mxu0
        %v967 = vadd.f32 0.0, %v966
        %968 = vdwg.mxu0
        %v970 = vsel %vm620, %v939, 0
        %972 = vmatpush.msra.mxu0 0.0
        %973 = vmatpush.msra.mxu0 0.0
        %974 = vmatpush.msra.mxu0 0.0
        %975 = vmatpush.msra.mxu0 0.0
        %976 = vmatpush.msra.mxu0 0.0
        %977 = vmatpush.msra.mxu0 0.0
        %978 = vmatpush.msra.mxu0 0.0
        %979 = vmatpush.msra.mxu0 0.0
        %980 = vmatpush.msra.mxu0 0.0
        %981 = vmatpush.msra.mxu0 0.0
        %982 = vmatpush.msra.mxu0 0.0
        %983 = vmatpush.msra.mxu0 0.0
        %984 = vmatpush.msra.mxu0 0.0
        %985 = vmatpush.msra.mxu0 0.0
        %986 = vmatpush.msra.mxu0 0.0
        %987 = vmatpush.msra.mxu0 %v943
        %988 = vmatmul.f32.gmra.mxu0 %v970
        %v989 = vpop.f32.mrf.mxu0
        %v990 = vadd.f32 0.0, %v989
        %991 = vdwg.mxu0
        %v993 = vsel %vm620, %v940, 0
        %995 = vmatpush.msra.mxu0 0.0
        %996 = vmatpush.msra.mxu0 0.0
        %997 = vmatpush.msra.mxu0 0.0
        %998 = vmatpush.msra.mxu0 0.0
        %999 = vmatpush.msra.mxu0 0.0
        %1000 = vmatpush.msra.mxu0 0.0
        %1001 = vmatpush.msra.mxu0 0.0
        %1002 = vmatpush.msra.mxu0 0.0
        %1003 = vmatpush.msra.mxu0 0.0
        %1004 = vmatpush.msra.mxu0 0.0
        %1005 = vmatpush.msra.mxu0 0.0
        %1006 = vmatpush.msra.mxu0 0.0
        %1007 = vmatpush.msra.mxu0 0.0
        %1008 = vmatpush.msra.mxu0 0.0
        %1009 = vmatpush.msra.mxu0 0.0
        %1010 = vmatpush.msra.mxu0 %v944
        %1011 = vmatmul.f32.gmra.mxu0 %v993
        %v1012 = vpop.f32.mrf.mxu0
        %v1013 = vadd.f32 0.0, %v1012
        %1014 = vdwg.mxu0
        %v1016 = vsel %vm620, %v941, 0
        %1018 = vmatpush.msra.mxu0 0.0
        %1019 = vmatpush.msra.mxu0 0.0
        %1020 = vmatpush.msra.mxu0 0.0
        %1021 = vmatpush.msra.mxu0 0.0
        %1022 = vmatpush.msra.mxu0 0.0
        %1023 = vmatpush.msra.mxu0 0.0
        %1024 = vmatpush.msra.mxu0 0.0
        %1025 = vmatpush.msra.mxu0 0.0
        %1026 = vmatpush.msra.mxu0 0.0
        %1027 = vmatpush.msra.mxu0 0.0
        %1028 = vmatpush.msra.mxu0 0.0
        %1029 = vmatpush.msra.mxu0 0.0
        %1030 = vmatpush.msra.mxu0 0.0
        %1031 = vmatpush.msra.mxu0 0.0
        %1032 = vmatpush.msra.mxu0 0.0
        %1033 = vmatpush.msra.mxu0 %v945
        %1034 = vmatmul.f32.gmra.mxu0 %v1016
        %v1035 = vpop.f32.mrf.mxu0
        %v1036 = vadd.f32 0.0, %v1035
        %1037 = vdwg.mxu0
        %v1038 = vsel %vm595, %v967, 0.0
        %v1039 = vsel %vm595, %v990, 0.0
        %v1040 = vadd.f32 %v1038, %v1039
        %v1041 = vsel %vm595, %v1013, 0.0
        %v1042 = vadd.f32 %v1040, %v1041
        %v1043 = vsel %vm595, %v1036, 0.0
        %v1044 = vadd.f32 %v1042, %v1043
        %v1045 = vld [vmem:[%s8] sm:$0x1]
        %v1047 = vperm.slane %v1045, 0
        %v1049 = vadd.f32 %v1044, %v1047
        %v1050 = vadd.f32 %v1049, %v586
        %v1051 = vsel %vm595, %v1050, 0.0
        %1052 = vadd.xlane.f32.xlu0 %v1051
        %v1053 = vpop.xlane.xlu0 %1052
        %v1054 = vrcp.pop 32.0
        %v1055 = vmul.f32 32.0, %v1054
        %v1056 = vsub.f32 1.0, %v1055
        %v1057 = vmul.f32 %v1054, %v1056
        %v1058 = vadd.f32 %v1054, %v1057
        %vm1059 = vweird.f32 %v1054
        %v1060 = vsel %vm1059, %v1054, %v1058
        %v1061 = vmul.f32 %v1053, %v1060
        %v1062 = vsub.f32 %v1050, %v1061
        %v1063 = vmul.f32 %v1062, %v1062
        %v1064 = vsel %vm595, %v1063, 0.0
        %1065 = vadd.xlane.f32.xlu0 %v1064
        %v1066 = vpop.xlane.xlu0 %1065
        %v1067 = vmul.f32 %v1066, %v1060
        %v1068 = vadd.f32 %v1067, 1e-12
        %v1069 = vrsqrt.pop %v1068
        %v1070 = vmul.f32 %v1069, %v1068
        %v1071 = vmul.f32 %v1070, %v1069
        %v1072 = vmul.f32 0.5, %v1071
        %v1073 = vsub.f32 1.5, %v1072
        %v1074 = vmul.f32 %v1069, %v1073
        %vm1075 = vweird.f32 %v1068
        %vm1076 = vweird.f32 %v1069
        %vm1077 = vmor %vm1075, %vm1076
        %v1078 = vsel %vm1077, %v1069, %v1074
        %v1079 = vmul.f32 %v1062, %v1078
        %v1080 = vld [vmem:[%s9] sm:$0x1]
        %v1082 = vperm.slane %v1080, 0
        %v1084 = vmul.f32 %v1079, %v1082
        %v1085 = vld [vmem:[%s10] sm:$0x1]
        %v1087 = vperm.slane %v1085, 0
        %v1089 = vadd.f32 %v1084, %v1087
        %1090 = vst.msk [vmem:[%s483] sm:$0xff] %vm595, %v1089
        %s1091 = sand.u32 %s288, 1
        %s1092 = scalar_lea.sflag [#allocation7], %s1091
        %s1093 = sand.u32 %s288, 1
        %s1094 = smul.addr %s1093, 8
        %s1095 = scalar_lea.vmem [#allocation14], %s1094
        // Predicated region
        $region89: #{tpu_custom_call.1} parent=63 // pred_check
          %p1096 = pneg %p298
        $region90: #{tpu_custom_call.1} parent=63 // pred_check_branch
          %1098 = sbr.rel (%p1096) target = $region92
        $region91: #{tpu_custom_call.1} parent=63 // pred_region
          %1100 = vsyncadd %s1092, 0
          %s1101 = sadd.s32 %s35, %s34
          %s1102 = smul.addr %s1101, 8
          %s1103 = scalar_lea.hbm %s11, %s1102
          %s1105 = sshll.u32 %s1095, 4
          %s1106 = int_to_ptr.vmem [resolvable:$true] %s1105
          %s1107 = sshll.u32 %s1103, 4
          %s1108 = int_to_ptr.hbm [resolvable:$true] %s1107
          %1110 = dma.vmem_to_hbm [thread:$0]  %s1106, 128, %s1108, %s1092
        $region92: #{tpu_custom_call.1} parent=63 // pred_fallthru
          _
      $region64: #{tpu_custom_call.1} parent=5 // pred_fallthru
        _
      %p1111 = scmp.le.s32.totalorder 2, %s25
      // Predicated region
      $region93: #{tpu_custom_call.1} parent=5 // pred_check
        %p1112 = pneg %p1111
      $region94: #{tpu_custom_call.1} parent=5 // pred_check_branch
        %1114 = sbr.rel (%p1112) target = $region96
      $region95: #{tpu_custom_call.1} parent=5 // pred_region
        %s1115 = ssub.s32 %s25, 2
        // Predicated region
        $region97: #{tpu_custom_call.1} parent=95 // pred_check
          %p1116 = pneg %p304
        $region98: #{tpu_custom_call.1} parent=95 // pred_check_branch
          %1118 = sbr.rel (%p1116) target = $region100
        $region99: #{tpu_custom_call.1} parent=95 // pred_region
          %s1119 = sand.u32 %s289, 1
          %s1120 = scalar_lea.sflag [#allocation7], %s1119
          %s1121 = sand.u32 %s289, 1
          %s1122 = smul.addr %s1121, 8
          %s1123 = scalar_lea.vmem [#allocation14], %s1122
          %1125 = dma.done %s1120, 128
        $region100: #{tpu_custom_call.1} parent=95 // pred_fallthru
          _
      $region96: #{tpu_custom_call.1} parent=5 // pred_fallthru
        _
    $region6: #{tpu_custom_call.1} parent=1 // loop_footer
      %s29 = sadd.s32 1, %s25
    $region7: #{tpu_custom_call.1} parent=1 // loop_footer_branch
      %24 = sbr.rel target = $region3
    $region8: #{tpu_custom_call.1} parent=1 // loop_exit
      _
    %1126 = vsyncpa [#allocation6], 1
    %s1127 = scalar_lea.sflag [#allocation6], 1
    %1128 = vsyncpa %s1127, 1
    %1129 = vsyncpa [#allocation9], 1
    %1130 = vsyncpa [#allocation12], 1
    %1131 = vsyncpa [#allocation7], 1
    %s1132 = scalar_lea.sflag [#allocation7], 1
    %1133 = vsyncpa %s1132, 1

</llo_original>
